<compile_context>
chip_gen: v7x
topology: tpu7x:2x2x1
jax: 0.10.0
libtpu: 0.0.40
codegen_flags: <defaults>
</compile_context>

<pallas_src>
import math

import jax
import jax.numpy as jnp
from jax import lax
from jax.experimental import pallas as pl
from jax.experimental.pallas import tpu as pltpu


def _make_kernel(S, H, I, num_heads, has_mask):
    head_dim = H // num_heads
    scale = 1.0 / math.sqrt(head_dim)
    inv_sqrt2 = 1.0 / math.sqrt(2.0)
    eps = 1e-12  # module explicitly uses nn.LayerNorm(hidden_size, eps=1e-12)

    def layernorm(x, g, b):
        mean = jnp.mean(x, axis=-1, keepdims=True)
        var = jnp.mean((x - mean) ** 2, axis=-1, keepdims=True)  # biased, like torch
        return (x - mean) * lax.rsqrt(var + eps) * g + b

    def gelu_exact(x):
        return 0.5 * x * (1.0 + lax.erf(x * inv_sqrt2))

    def body(x, mask, wqkv, bqkv, wo, bo, ln1g, ln1b, w1, b1, w2, b2, ln2g, ln2b):
        # ---- QKV projection: bf16 MXU inputs, f32 accumulation ----
        qkv = jnp.dot(x.astype(jnp.bfloat16), wqkv,
                      preferred_element_type=jnp.float32) + bqkv        # (S, 3H) f32

        # Fold the softmax scale into q: an (S,H) VPU mul instead of (nh,S,S).
        q = qkv[:, 0 * H:1 * H] * scale
        k = qkv[:, 1 * H:2 * H]
        v = qkv[:, 2 * H:3 * H]

        # Single relayout per tensor; K is emitted already transposed so the
        # score matmul is a plain (S,hd)x(hd,S) per head (no XLU transpose
        # inside the matmul).
        qh = q.reshape(S, num_heads, head_dim).transpose(1, 0, 2).astype(jnp.bfloat16)   # (nh,S,hd)
        khT = k.reshape(S, num_heads, head_dim).transpose(1, 2, 0).astype(jnp.bfloat16)  # (nh,hd,S)
        vh = v.reshape(S, num_heads, head_dim).transpose(1, 0, 2).astype(jnp.bfloat16)   # (nh,S,hd)

        # ---- Batched attention over all heads ----
        s = jnp.einsum("hqd,hdk->hqk", qh, khT,
                       preferred_element_type=jnp.float32)              # (nh,S,S) f32
        if has_mask:
            s = s + mask[None, :, :]
        m = jnp.max(s, axis=-1, keepdims=True)
        e = jnp.exp(s - m)                                              # (nh,S,S) f32
        denom = jnp.sum(e, axis=-1, keepdims=True)                      # (nh,S,1)

        # Deferred softmax normalization: PV on raw exponentials, then scale
        # the small (nh,S,hd) output instead of the (nh,S,S) probabilities.
        o = jnp.einsum("hqk,hkd->hqd", e.astype(jnp.bfloat16), vh,
                       preferred_element_type=jnp.float32)              # (nh,S,hd) f32
        o = o * pl.reciprocal(denom, approx=True)

        # Merge heads with a single relayout back to (S, H).
        attn = o.transpose(1, 0, 2).reshape(S, H)

        attn = jnp.dot(attn.astype(jnp.bfloat16), wo,
                       preferred_element_type=jnp.float32) + bo
        # attention / hidden dropout are identity in eval mode
        y = layernorm(attn + x, ln1g, ln1b)                             # (S, H) f32

        # ---- MLP ----
        z = jnp.dot(y.astype(jnp.bfloat16), w1,
                    preferred_element_type=jnp.float32) + b1
        z = gelu_exact(z)                                               # (S, I) f32
        z = jnp.dot(z.astype(jnp.bfloat16), w2,
                    preferred_element_type=jnp.float32) + b2
        return layernorm(z + y, ln2g, ln2b)                             # (S, H) f32

    if has_mask:
        def kernel(x_ref, mask_ref,
                   wqkv_ref, bqkv_ref, wo_ref, bo_ref, ln1g_ref, ln1b_ref,
                   w1_ref, b1_ref, w2_ref, b2_ref, ln2g_ref, ln2b_ref, out_ref):
            out = body(x_ref[0], mask_ref[...],
                       wqkv_ref[...], bqkv_ref[...], wo_ref[...], bo_ref[...],
                       ln1g_ref[...], ln1b_ref[...], w1_ref[...], b1_ref[...],
                       w2_ref[...], b2_ref[...], ln2g_ref[...], ln2b_ref[...])
            out_ref[0] = out.astype(out_ref.dtype)
    else:
        def kernel(x_ref,
                   wqkv_ref, bqkv_ref, wo_ref, bo_ref, ln1g_ref, ln1b_ref,
                   w1_ref, b1_ref, w2_ref, b2_ref, ln2g_ref, ln2b_ref, out_ref):
            out = body(x_ref[0], None,
                       wqkv_ref[...], bqkv_ref[...], wo_ref[...], bo_ref[...],
                       ln1g_ref[...], ln1b_ref[...], w1_ref[...], b1_ref[...],
                       w2_ref[...], b2_ref[...], ln2g_ref[...], ln2b_ref[...])
            out_ref[0] = out.astype(out_ref.dtype)

    return kernel


def _vmem_budget_bytes(S, H, I, num_heads, has_mask):
    """Working-set estimate, clamped to 75% of the chip's physical VMEM."""
    bf2, f4 = 2, 4
    hd = H // num_heads
    weights = (H * 3 * H + H * H + H * I + I * H) * bf2          # bf16, single-buffered
    vectors = (3 * H + I + 6 * H) * f4                           # biases + LN params
    io_blocks = 2 * 2 * S * H * f4                               # x / out blocks, 2 bufs
    mask = (S * S * f4) if has_mask else 0
    acts = (S * 3 * H                                            # qkv
            + 2 * 3 * S * H                                      # head-layout q/k/v (slack)
            + 3 * num_heads * S * S                              # scores / exp / temps
            + num_heads * S * hd                                 # PV output
            + S * I + 8 * S * H) * f4                            # mlp act + temps
    total = weights + vectors + io_blocks + mask + acts + (4 << 20)
    try:
        cap = pltpu.get_tpu_info().vmem_capacity_bytes           # 64 MiB v7x, 128 MiB v5e/v6e
    except Exception:
        cap = 64 * 1024 * 1024                                   # conservative fallback
    return int(max(16 * 1024 * 1024, min(total, int(cap * 0.75))))


def transformer_layer(x, attn_mask, params, num_heads):
    """x: (B, S, H) float32; attn_mask: (S, S) additive float mask or None."""
    B, S, H = x.shape
    I = params["w1_t"].shape[1]
    assert H % num_heads == 0, "hidden_size must be divisible by num_heads"
    has_mask = attn_mask is not None
    kernel = _make_kernel(S, H, I, num_heads, has_mask)

    # Pre-cast matmul weights to bf16 (halves HBM traffic & VMEM footprint and
    # feeds the MXU its native dtype). Biases / LN params stay f32; all
    # VPU / EUP work inside the kernel stays f32.
    wqkv = params["wqkv_t"].astype(jnp.bfloat16)
    wo = params["wo_t"].astype(jnp.bfloat16)
    w1 = params["w1_t"].astype(jnp.bfloat16)
    w2 = params["w2_t"].astype(jnp.bfloat16)

    # Grid-invariant operands: constant index_map + single pipeline buffer
    # (no point double-buffering blocks that never change across the grid).
    def const(shape):
        return pl.BlockSpec(shape, lambda b: tuple(0 for _ in shape),
                            pipeline_mode=pl.Buffered(1))

    in_specs = [pl.BlockSpec((1, S, H), lambda b: (b, 0, 0))]    # x (double-buffered)
    operands = [x]
    if has_mask:
        in_specs.append(const((S, S)))
        operands.append(attn_mask.astype(jnp.float32))
    in_specs += [
        const((H, 3 * H)), const((1, 3 * H)),                    # wqkv_t (bf16), bqkv
        const((H, H)), const((1, H)),                            # wo_t (bf16), bo
        const((1, H)), const((1, H)),                            # ln1 gamma, beta
        const((H, I)), const((1, I)),                            # w1_t (bf16), b1
        const((I, H)), const((1, H)),                            # w2_t (bf16), b2
        const((1, H)), const((1, H)),                            # ln2 gamma, beta
    ]
    operands += [wqkv, params["bqkv"], wo, params["bo"],
                 params["ln1_g"], params["ln1_b"],
                 w1, params["b1"], w2, params["b2"],
                 params["ln2_g"], params["ln2_b"]]

    return pl.pallas_call(
        kernel,
        out_shape=jax.ShapeDtypeStruct((B, S, H), x.dtype),
        grid_spec=pltpu.PrefetchScalarGridSpec(
            num_scalar_prefetch=0,
            grid=(B,),
            in_specs=in_specs,
            out_specs=pl.BlockSpec((1, S, H), lambda b: (b, 0, 0)),
        ),
        compiler_params=pltpu.CompilerParams(
            dimension_semantics=("parallel",),
            vmem_limit_bytes=_vmem_budget_bytes(S, H, I, num_heads, has_mask)),
    )(*operands)


# -------------------- pure-JAX f32 reference (for verification) --------------------
def reference(x, attn_mask, params, num_heads):
    B, S, H = x.shape
    hd = H // num_heads
    qkv = jnp.einsum("bsh,hk->bsk", x, params["wqkv_t"]) + params["bqkv"][0]
    q, k, v = qkv[..., :H], qkv[..., H:2 * H], qkv[..., 2 * H:]

    def split(t):  # (B,S,H) -> (B,nh,S,hd)
        return t.reshape(B, S, num_heads, hd).transpose(0, 2, 1, 3)

    q, k, v = split(q), split(k), split(v)
    s = jnp.einsum("bnqd,bnkd->bnqk", q, k) / math.sqrt(hd)
    if attn_mask is not None:
        s = s + attn_mask
    p = jax.nn.softmax(s, axis=-1)
    a = jnp.einsum("bnqk,bnkd->bnqd", p, v).transpose(0, 2, 1, 3).reshape(B, S, H)
    a = jnp.einsum("bsh,hk->bsk", a, params["wo_t"]) + params["bo"][0]

    def ln(t, g, b):
        m = jnp.mean(t, -1, keepdims=True)
        var = jnp.mean((t - m) ** 2, -1, keepdims=True)
        return (t - m) / jnp.sqrt(var + 1e-12) * g[0] + b[0]

    y = ln(a + x, params["ln1_g"], params["ln1_b"])
    z = jnp.einsum("bsh,hi->bsi", y, params["w1_t"]) + params["b1"][0]
    z = jax.nn.gelu(z, approximate=False)
    z = jnp.einsum("bsi,ih->bsh", z, params["w2_t"]) + params["b2"][0]
    return ln(z + y, params["ln2_g"], params["ln2_b"])


def init_params(key, H, I):
    """Deterministic synthetic init mirroring the module's parameter shapes."""
    def trunc(k, shape, std=0.02):
        # trunc_normal_(std=0.02, a=-0.04, b=0.04) == ±2 sigma truncation
        return jax.random.truncated_normal(k, -2.0, 2.0, shape, jnp.float32) * std

    ks = jax.random.split(key, 8)
    wqkv = trunc(ks[0], (3 * H, H))          # in_proj_weight
    wo = trunc(ks[1], (H, H))                # out_proj.weight
    w1 = trunc(ks[2], (I, H))                # fc1.weight
    w2 = trunc(ks[3], (H, I))                # fc2.weight
    bqkv = jnp.zeros((3 * H,), jnp.float32)  # in_proj_bias (torch inits to 0)
    bo = jnp.zeros((H,), jnp.float32)        # out_proj.bias (torch inits to 0)
    b1 = trunc(ks[4], (I,), std=0.02)        # synthetic deterministic bias
    b2 = trunc(ks[5], (H,), std=0.02)
    return {
        "wqkv_t": wqkv.T, "bqkv": bqkv[None, :],
        "wo_t": wo.T, "bo": bo[None, :],
        "ln1_g": jnp.ones((1, H), jnp.float32), "ln1_b": jnp.zeros((1, H), jnp.float32),
        "w1_t": w1.T, "b1": b1[None, :],
        "w2_t": w2.T, "b2": b2[None, :],
        "ln2_g": jnp.ones((1, H), jnp.float32), "ln2_b": jnp.zeros((1, H), jnp.float32),
    }


if __name__ == "__main__":
    # Small but lane-dense shapes: H a multiple of 128 -> unmasked vector stores.
    B, S, H, I, NH = 2, 16, 128, 256, 4
    key = jax.random.PRNGKey(0)
    kx, kp = jax.random.split(key)
    x = jax.random.normal(kx, (B, S, H), jnp.float32)
    params = init_params(kp, H, I)

    # --- unmasked path (the PyTorch forward under test uses attn_mask=None) ---
    out = transformer_layer(x, None, params, NH)
    out = jax.block_until_ready(out)
    ref = reference(x, None, params, NH)
    assert out.shape == (B, S, H)
    max_err = float(jnp.max(jnp.abs(out - ref)))
    # bf16 MXU inputs + approx reciprocal in the kernel vs f32 reference.
    assert jnp.allclose(out, ref, atol=3e-2, rtol=3e-2), max_err

    # --- masked path (causal additive mask; no fully-masked rows) ---
    causal = jnp.where(jnp.tril(jnp.ones((S, S), jnp.bool_)), 0.0, -1e9).astype(jnp.float32)
    out_m = jax.block_until_ready(transformer_layer(x, causal, params, NH))
    ref_m = reference(x, causal, params, NH)
    max_err_m = float(jnp.max(jnp.abs(out_m - ref_m)))
    assert jnp.allclose(out_m, ref_m, atol=3e-2, rtol=3e-2), max_err_m

    print("KERNEL_OK")
</pallas_src>

<mosaic_0001>
module attributes {stable_mosaic.version = 11 : i64} {
  func.func @kernel(%arg0: i32, %arg1: memref<1x16x128xf32, #tpu.memory_space<vmem>>, %arg2: memref<128x384xbf16, #tpu.memory_space<vmem>>, %arg3: memref<1x384xf32, #tpu.memory_space<vmem>>, %arg4: memref<128x128xbf16, #tpu.memory_space<vmem>>, %arg5: memref<1x128xf32, #tpu.memory_space<vmem>>, %arg6: memref<1x128xf32, #tpu.memory_space<vmem>>, %arg7: memref<1x128xf32, #tpu.memory_space<vmem>>, %arg8: memref<128x256xbf16, #tpu.memory_space<vmem>>, %arg9: memref<1x256xf32, #tpu.memory_space<vmem>>, %arg10: memref<256x128xbf16, #tpu.memory_space<vmem>>, %arg11: memref<1x128xf32, #tpu.memory_space<vmem>>, %arg12: memref<1x128xf32, #tpu.memory_space<vmem>>, %arg13: memref<1x128xf32, #tpu.memory_space<vmem>>, %arg14: memref<1x16x128xf32, #tpu.memory_space<vmem>>) attributes {dimension_semantics = [#tpu.dimension_semantics<parallel>], iteration_bounds = array<i64: 2>, scalar_prefetch = 0 : i64, scratch_operands = 0 : i64, tpu.core_type = #tpu.core_type<tc>, window_params = [{transform_indices = @transform_0, window_bounds = array<i64: 1, 16, 128>}, {pipeline_mode = #tpu.pipeline_mode<synchronous>, transform_indices = @transform_1, window_bounds = array<i64: 128, 384>}, {pipeline_mode = #tpu.pipeline_mode<synchronous>, transform_indices = @transform_2, window_bounds = array<i64: 1, 384>}, {pipeline_mode = #tpu.pipeline_mode<synchronous>, transform_indices = @transform_3, window_bounds = array<i64: 128, 128>}, {pipeline_mode = #tpu.pipeline_mode<synchronous>, transform_indices = @transform_4, window_bounds = array<i64: 1, 128>}, {pipeline_mode = #tpu.pipeline_mode<synchronous>, transform_indices = @transform_5, window_bounds = array<i64: 1, 128>}, {pipeline_mode = #tpu.pipeline_mode<synchronous>, transform_indices = @transform_6, window_bounds = array<i64: 1, 128>}, {pipeline_mode = #tpu.pipeline_mode<synchronous>, transform_indices = @transform_7, window_bounds = array<i64: 128, 256>}, {pipeline_mode = #tpu.pipeline_mode<synchronous>, transform_indices = @transform_8, window_bounds = array<i64: 1, 256>}, {pipeline_mode = #tpu.pipeline_mode<synchronous>, transform_indices = @transform_9, window_bounds = array<i64: 256, 128>}, {pipeline_mode = #tpu.pipeline_mode<synchronous>, transform_indices = @transform_10, window_bounds = array<i64: 1, 128>}, {pipeline_mode = #tpu.pipeline_mode<synchronous>, transform_indices = @transform_11, window_bounds = array<i64: 1, 128>}, {pipeline_mode = #tpu.pipeline_mode<synchronous>, transform_indices = @transform_12, window_bounds = array<i64: 1, 128>}, {transform_indices = @transform_13, window_bounds = array<i64: 1, 16, 128>}]} {
    %c0 = arith.constant 0 : index
    %c0_0 = arith.constant 0 : index
    %c0_1 = arith.constant 0 : index
    %0 = vector.load %arg1[%c0, %c0_0, %c0_1] : memref<1x16x128xf32, #tpu.memory_space<vmem>>, vector<1x16x128xf32>
    %1 = vector.shape_cast %0 : vector<1x16x128xf32> to vector<16x128xf32>
    %c0_2 = arith.constant 0 : index
    %c0_3 = arith.constant 0 : index
    %2 = vector.load %arg2[%c0_2, %c0_3] : memref<128x384xbf16, #tpu.memory_space<vmem>>, vector<128x384xbf16>
    %c0_4 = arith.constant 0 : index
    %c0_5 = arith.constant 0 : index
    %3 = vector.load %arg3[%c0_4, %c0_5] : memref<1x384xf32, #tpu.memory_space<vmem>>, vector<1x384xf32>
    %c0_6 = arith.constant 0 : index
    %c0_7 = arith.constant 0 : index
    %4 = vector.load %arg4[%c0_6, %c0_7] : memref<128x128xbf16, #tpu.memory_space<vmem>>, vector<128x128xbf16>
    %c0_8 = arith.constant 0 : index
    %c0_9 = arith.constant 0 : index
    %5 = vector.load %arg5[%c0_8, %c0_9] : memref<1x128xf32, #tpu.memory_space<vmem>>, vector<1x128xf32>
    %c0_10 = arith.constant 0 : index
    %c0_11 = arith.constant 0 : index
    %6 = vector.load %arg6[%c0_10, %c0_11] : memref<1x128xf32, #tpu.memory_space<vmem>>, vector<1x128xf32>
    %c0_12 = arith.constant 0 : index
    %c0_13 = arith.constant 0 : index
    %7 = vector.load %arg7[%c0_12, %c0_13] : memref<1x128xf32, #tpu.memory_space<vmem>>, vector<1x128xf32>
    %c0_14 = arith.constant 0 : index
    %c0_15 = arith.constant 0 : index
    %8 = vector.load %arg8[%c0_14, %c0_15] : memref<128x256xbf16, #tpu.memory_space<vmem>>, vector<128x256xbf16>
    %c0_16 = arith.constant 0 : index
    %c0_17 = arith.constant 0 : index
    %9 = vector.load %arg9[%c0_16, %c0_17] : memref<1x256xf32, #tpu.memory_space<vmem>>, vector<1x256xf32>
    %c0_18 = arith.constant 0 : index
    %c0_19 = arith.constant 0 : index
    %10 = vector.load %arg10[%c0_18, %c0_19] : memref<256x128xbf16, #tpu.memory_space<vmem>>, vector<256x128xbf16>
    %c0_20 = arith.constant 0 : index
    %c0_21 = arith.constant 0 : index
    %11 = vector.load %arg11[%c0_20, %c0_21] : memref<1x128xf32, #tpu.memory_space<vmem>>, vector<1x128xf32>
    %c0_22 = arith.constant 0 : index
    %c0_23 = arith.constant 0 : index
    %12 = vector.load %arg12[%c0_22, %c0_23] : memref<1x128xf32, #tpu.memory_space<vmem>>, vector<1x128xf32>
    %c0_24 = arith.constant 0 : index
    %c0_25 = arith.constant 0 : index
    %13 = vector.load %arg13[%c0_24, %c0_25] : memref<1x128xf32, #tpu.memory_space<vmem>>, vector<1x128xf32>
    %14 = arith.truncf %1 : vector<16x128xf32> to vector<16x128xbf16>
    %cst = arith.constant dense<0.000000e+00> : vector<16x384xf32>
    %15 = tpu.matmul %14, %2, %cst {dimension_numbers = #tpu.dot_dimension_numbers<[1], [0], [0], [1], [0, 0, 1, 1], [], []>} : vector<16x128xbf16>, vector<128x384xbf16>, vector<16x384xf32> -> vector<16x384xf32>
    %16 = vector.broadcast %3 : vector<1x384xf32> to vector<16x384xf32>
    %17 = arith.addf %15, %16 : vector<16x384xf32>
    %18 = vector.extract_strided_slice %17 {offsets = [0, 0], sizes = [16, 128], strides = [1, 1]} : vector<16x384xf32> to vector<16x128xf32>
    %cst_26 = arith.constant 0.176776692 : f32
    %19 = vector.broadcast %cst_26 : f32 to vector<16x128xf32>
    %20 = arith.mulf %18, %19 : vector<16x128xf32>
    %21 = vector.extract_strided_slice %17 {offsets = [0, 128], sizes = [16, 128], strides = [1, 1]} : vector<16x384xf32> to vector<16x128xf32>
    %22 = vector.extract_strided_slice %17 {offsets = [0, 256], sizes = [16, 128], strides = [1, 1]} : vector<16x384xf32> to vector<16x128xf32>
    %23 = vector.shape_cast %20 : vector<16x128xf32> to vector<16x4x32xf32>
    %24 = tpu.transpose %23, [1, 0, 2] : vector<16x4x32xf32> -> vector<4x16x32xf32>
    %25 = arith.truncf %24 : vector<4x16x32xf32> to vector<4x16x32xbf16>
    %26 = vector.shape_cast %21 : vector<16x128xf32> to vector<16x4x32xf32>
    %27 = tpu.transpose %26, [1, 2, 0] : vector<16x4x32xf32> -> vector<4x32x16xf32>
    %28 = arith.truncf %27 : vector<4x32x16xf32> to vector<4x32x16xbf16>
    %29 = vector.shape_cast %22 : vector<16x128xf32> to vector<16x4x32xf32>
    %30 = tpu.transpose %29, [1, 0, 2] : vector<16x4x32xf32> -> vector<4x16x32xf32>
    %31 = arith.truncf %30 : vector<4x16x32xf32> to vector<4x16x32xbf16>
    "tpu.trace_start"() <{level = 10 : i32, message = "hqd,hdk->hqk"}> : () -> ()
    %cst_27 = arith.constant dense<0.000000e+00> : vector<4x16x16xf32>
    %32 = tpu.matmul %25, %28, %cst_27 {dimension_numbers = #tpu.dot_dimension_numbers<[2], [1], [1], [2], [0, 0, 0, 1, 1, 2], [0], [0]>} : vector<4x16x32xbf16>, vector<4x32x16xbf16>, vector<4x16x16xf32> -> vector<4x16x16xf32>
    "tpu.trace_stop"() : () -> ()
    %cst_28 = arith.constant dense<0xFF800000> : vector<4x16xf32>
    %33 = vector.multi_reduction <maximumf>, %32, %cst_28 [2] : vector<4x16x16xf32> to vector<4x16xf32>
    %34 = vector.shape_cast %33 : vector<4x16xf32> to vector<4x16x1xf32>
    %35 = vector.broadcast %34 : vector<4x16x1xf32> to vector<4x16x16xf32>
    %36 = arith.subf %32, %35 : vector<4x16x16xf32>
    %37 = math.exp %36 : vector<4x16x16xf32>
    %cst_29 = arith.constant dense<0.000000e+00> : vector<4x16xf32>
    %38 = vector.multi_reduction <add>, %37, %cst_29 [2] : vector<4x16x16xf32> to vector<4x16xf32>
    %39 = vector.shape_cast %38 : vector<4x16xf32> to vector<4x16x1xf32>
    %40 = arith.truncf %37 : vector<4x16x16xf32> to vector<4x16x16xbf16>
    "tpu.trace_start"() <{level = 10 : i32, message = "hqk,hkd->hqd"}> : () -> ()
    %cst_30 = arith.constant dense<0.000000e+00> : vector<4x16x32xf32>
    %41 = tpu.matmul %40, %31, %cst_30 {dimension_numbers = #tpu.dot_dimension_numbers<[2], [1], [1], [2], [0, 0, 0, 1, 1, 2], [0], [0]>} : vector<4x16x16xbf16>, vector<4x16x32xbf16>, vector<4x16x32xf32> -> vector<4x16x32xf32>
    "tpu.trace_stop"() : () -> ()
    %42 = tpu.reciprocal %39 {approx = true} : vector<4x16x1xf32> -> vector<4x16x1xf32>
    %43 = vector.broadcast %42 : vector<4x16x1xf32> to vector<4x16x32xf32>
    %44 = arith.mulf %41, %43 : vector<4x16x32xf32>
    %45 = tpu.transpose %44, [1, 0, 2] : vector<4x16x32xf32> -> vector<16x4x32xf32>
    %46 = vector.shape_cast %45 : vector<16x4x32xf32> to vector<16x128xf32>
    %47 = arith.truncf %46 : vector<16x128xf32> to vector<16x128xbf16>
    %cst_31 = arith.constant dense<0.000000e+00> : vector<16x128xf32>
    %48 = tpu.matmul %47, %4, %cst_31 {dimension_numbers = #tpu.dot_dimension_numbers<[1], [0], [0], [1], [0, 0, 1, 1], [], []>} : vector<16x128xbf16>, vector<128x128xbf16>, vector<16x128xf32> -> vector<16x128xf32>
    %49 = vector.broadcast %5 : vector<1x128xf32> to vector<16x128xf32>
    %50 = arith.addf %48, %49 : vector<16x128xf32>
    %51 = arith.addf %50, %1 : vector<16x128xf32>
    %cst_32 = arith.constant dense<0.000000e+00> : vector<16xf32>
    %52 = vector.multi_reduction <add>, %51, %cst_32 [1] : vector<16x128xf32> to vector<16xf32>
    %53 = vector.shape_cast %52 : vector<16xf32> to vector<16x1xf32>
    %cst_33 = arith.constant 1.280000e+02 : f32
    %54 = vector.broadcast %cst_33 : f32 to vector<16x1xf32>
    %55 = arith.divf %53, %54 : vector<16x1xf32>
    %56 = vector.broadcast %55 : vector<16x1xf32> to vector<16x128xf32>
    %57 = arith.subf %51, %56 : vector<16x128xf32>
    %58 = arith.mulf %57, %57 : vector<16x128xf32>
    %cst_34 = arith.constant dense<0.000000e+00> : vector<16xf32>
    %59 = vector.multi_reduction <add>, %58, %cst_34 [1] : vector<16x128xf32> to vector<16xf32>
    %60 = vector.shape_cast %59 : vector<16xf32> to vector<16x1xf32>
    %cst_35 = arith.constant 1.280000e+02 : f32
    %61 = vector.broadcast %cst_35 : f32 to vector<16x1xf32>
    %62 = arith.divf %60, %61 : vector<16x1xf32>
    %63 = vector.broadcast %55 : vector<16x1xf32> to vector<16x128xf32>
    %64 = arith.subf %51, %63 : vector<16x128xf32>
    %cst_36 = arith.constant 9.99999996E-13 : f32
    %65 = vector.broadcast %cst_36 : f32 to vector<16x1xf32>
    %66 = arith.addf %62, %65 : vector<16x1xf32>
    %67 = math.rsqrt %66 : vector<16x1xf32>
    %68 = vector.broadcast %67 : vector<16x1xf32> to vector<16x128xf32>
    %69 = arith.mulf %64, %68 : vector<16x128xf32>
    %70 = vector.broadcast %6 : vector<1x128xf32> to vector<16x128xf32>
    %71 = arith.mulf %69, %70 : vector<16x128xf32>
    %72 = vector.broadcast %7 : vector<1x128xf32> to vector<16x128xf32>
    %73 = arith.addf %71, %72 : vector<16x128xf32>
    %74 = arith.truncf %73 : vector<16x128xf32> to vector<16x128xbf16>
    %cst_37 = arith.constant dense<0.000000e+00> : vector<16x256xf32>
    %75 = tpu.matmul %74, %8, %cst_37 {dimension_numbers = #tpu.dot_dimension_numbers<[1], [0], [0], [1], [0, 0, 1, 1], [], []>} : vector<16x128xbf16>, vector<128x256xbf16>, vector<16x256xf32> -> vector<16x256xf32>
    %76 = vector.broadcast %9 : vector<1x256xf32> to vector<16x256xf32>
    %77 = arith.addf %75, %76 : vector<16x256xf32>
    %cst_38 = arith.constant 5.000000e-01 : f32
    %78 = vector.broadcast %cst_38 : f32 to vector<16x256xf32>
    %79 = arith.mulf %78, %77 : vector<16x256xf32>
    %cst_39 = arith.constant 0.707106769 : f32
    %80 = vector.broadcast %cst_39 : f32 to vector<16x256xf32>
    %81 = arith.mulf %77, %80 : vector<16x256xf32>
    %82 = math.erf %81 : vector<16x256xf32>
    %cst_40 = arith.constant 1.000000e+00 : f32
    %83 = vector.broadcast %cst_40 : f32 to vector<16x256xf32>
    %84 = arith.addf %83, %82 : vector<16x256xf32>
    %85 = arith.mulf %79, %84 : vector<16x256xf32>
    %86 = arith.truncf %85 : vector<16x256xf32> to vector<16x256xbf16>
    %cst_41 = arith.constant dense<0.000000e+00> : vector<16x128xf32>
    %87 = tpu.matmul %86, %10, %cst_41 {dimension_numbers = #tpu.dot_dimension_numbers<[1], [0], [0], [1], [0, 0, 1, 1], [], []>} : vector<16x256xbf16>, vector<256x128xbf16>, vector<16x128xf32> -> vector<16x128xf32>
    %88 = vector.broadcast %11 : vector<1x128xf32> to vector<16x128xf32>
    %89 = arith.addf %87, %88 : vector<16x128xf32>
    %90 = arith.addf %89, %73 : vector<16x128xf32>
    %cst_42 = arith.constant dense<0.000000e+00> : vector<16xf32>
    %91 = vector.multi_reduction <add>, %90, %cst_42 [1] : vector<16x128xf32> to vector<16xf32>
    %92 = vector.shape_cast %91 : vector<16xf32> to vector<16x1xf32>
    %cst_43 = arith.constant 1.280000e+02 : f32
    %93 = vector.broadcast %cst_43 : f32 to vector<16x1xf32>
    %94 = arith.divf %92, %93 : vector<16x1xf32>
    %95 = vector.broadcast %94 : vector<16x1xf32> to vector<16x128xf32>
    %96 = arith.subf %90, %95 : vector<16x128xf32>
    %97 = arith.mulf %96, %96 : vector<16x128xf32>
    %cst_44 = arith.constant dense<0.000000e+00> : vector<16xf32>
    %98 = vector.multi_reduction <add>, %97, %cst_44 [1] : vector<16x128xf32> to vector<16xf32>
    %99 = vector.shape_cast %98 : vector<16xf32> to vector<16x1xf32>
    %cst_45 = arith.constant 1.280000e+02 : f32
    %100 = vector.broadcast %cst_45 : f32 to vector<16x1xf32>
    %101 = arith.divf %99, %100 : vector<16x1xf32>
    %102 = vector.broadcast %94 : vector<16x1xf32> to vector<16x128xf32>
    %103 = arith.subf %90, %102 : vector<16x128xf32>
    %cst_46 = arith.constant 9.99999996E-13 : f32
    %104 = vector.broadcast %cst_46 : f32 to vector<16x1xf32>
    %105 = arith.addf %101, %104 : vector<16x1xf32>
    %106 = math.rsqrt %105 : vector<16x1xf32>
    %107 = vector.broadcast %106 : vector<16x1xf32> to vector<16x128xf32>
    %108 = arith.mulf %103, %107 : vector<16x128xf32>
    %109 = vector.broadcast %12 : vector<1x128xf32> to vector<16x128xf32>
    %110 = arith.mulf %108, %109 : vector<16x128xf32>
    %111 = vector.broadcast %13 : vector<1x128xf32> to vector<16x128xf32>
    %112 = arith.addf %110, %111 : vector<16x128xf32>
    %c0_47 = arith.constant 0 : index
    %c0_48 = arith.constant 0 : index
    %c0_49 = arith.constant 0 : index
    %113 = vector.load %arg14[%c0_47, %c0_48, %c0_49] : memref<1x16x128xf32, #tpu.memory_space<vmem>>, vector<1x16x128xf32>
    %114 = vector.shape_cast %113 : vector<1x16x128xf32> to vector<16x128xf32>
    %115 = vector.shape_cast %112 : vector<16x128xf32> to vector<1x16x128xf32>
    tpu.vector_store %arg14[%c0_47, %c0_48, %c0_49], %115 {strides = array<i32>} : memref<1x16x128xf32, #tpu.memory_space<vmem>>, vector<1x16x128xf32>,
    return
  }
  func.func @transform_0(%arg0: i32) -> (i32, i32, i32) {
    %c0_i32 = arith.constant 0 : i32
    %c0_i32_0 = arith.constant 0 : i32
    %c0_i32_1 = arith.constant 0 : i32
    return %arg0, %c0_i32, %c0_i32_0 : i32, i32, i32
  }
  func.func @transform_1(%arg0: i32) -> (i32, i32) {
    %c0_i32 = arith.constant 0 : i32
    %c0_i32_0 = arith.constant 0 : i32
    %c0_i32_1 = arith.constant 0 : i32
    return %c0_i32, %c0_i32_0 : i32, i32
  }
  func.func @transform_2(%arg0: i32) -> (i32, i32) {
    %c0_i32 = arith.constant 0 : i32
    %c0_i32_0 = arith.constant 0 : i32
    %c0_i32_1 = arith.constant 0 : i32
    return %c0_i32, %c0_i32_0 : i32, i32
  }
  func.func @transform_3(%arg0: i32) -> (i32, i32) {
    %c0_i32 = arith.constant 0 : i32
    %c0_i32_0 = arith.constant 0 : i32
    %c0_i32_1 = arith.constant 0 : i32
    return %c0_i32, %c0_i32_0 : i32, i32
  }
  func.func @transform_4(%arg0: i32) -> (i32, i32) {
    %c0_i32 = arith.constant 0 : i32
    %c0_i32_0 = arith.constant 0 : i32
    %c0_i32_1 = arith.constant 0 : i32
    return %c0_i32, %c0_i32_0 : i32, i32
  }
  func.func @transform_5(%arg0: i32) -> (i32, i32) {
    %c0_i32 = arith.constant 0 : i32
    %c0_i32_0 = arith.constant 0 : i32
    %c0_i32_1 = arith.constant 0 : i32
    return %c0_i32, %c0_i32_0 : i32, i32
  }
  func.func @transform_6(%arg0: i32) -> (i32, i32) {
    %c0_i32 = arith.constant 0 : i32
    %c0_i32_0 = arith.constant 0 : i32
    %c0_i32_1 = arith.constant 0 : i32
    return %c0_i32, %c0_i32_0 : i32, i32
  }
  func.func @transform_7(%arg0: i32) -> (i32, i32) {
    %c0_i32 = arith.constant 0 : i32
    %c0_i32_0 = arith.constant 0 : i32
    %c0_i32_1 = arith.constant 0 : i32
    return %c0_i32, %c0_i32_0 : i32, i32
  }
  func.func @transform_8(%arg0: i32) -> (i32, i32) {
    %c0_i32 = arith.constant 0 : i32
    %c0_i32_0 = arith.constant 0 : i32
    %c0_i32_1 = arith.constant 0 : i32
    return %c0_i32, %c0_i32_0 : i32, i32
  }
  func.func @transform_9(%arg0: i32) -> (i32, i32) {
    %c0_i32 = arith.constant 0 : i32
    %c0_i32_0 = arith.constant 0 : i32
    %c0_i32_1 = arith.constant 0 : i32
    return %c0_i32, %c0_i32_0 : i32, i32
  }
  func.func @transform_10(%arg0: i32) -> (i32, i32) {
    %c0_i32 = arith.constant 0 : i32
    %c0_i32_0 = arith.constant 0 : i32
    %c0_i32_1 = arith.constant 0 : i32
    return %c0_i32, %c0_i32_0 : i32, i32
  }
  func.func @transform_11(%arg0: i32) -> (i32, i32) {
    %c0_i32 = arith.constant 0 : i32
    %c0_i32_0 = arith.constant 0 : i32
    %c0_i32_1 = arith.constant 0 : i32
    return %c0_i32, %c0_i32_0 : i32, i32
  }
  func.func @transform_12(%arg0: i32) -> (i32, i32) {
    %c0_i32 = arith.constant 0 : i32
    %c0_i32_0 = arith.constant 0 : i32
    %c0_i32_1 = arith.constant 0 : i32
    return %c0_i32, %c0_i32_0 : i32, i32
  }
  func.func @transform_13(%arg0: i32) -> (i32, i32, i32) {
    %c0_i32 = arith.constant 0 : i32
    %c0_i32_0 = arith.constant 0 : i32
    %c0_i32_1 = arith.constant 0 : i32
    return %arg0, %c0_i32, %c0_i32_0 : i32, i32, i32
  }
}

</mosaic_0001>

<llo_original>
// kernel: tpu_custom_call.1
$region0: #{tpu_custom_call.1}
  #allocation0 [shape = 'u32[]', space=smem, size = 0x4, offset = 0x4, fixed_abs, tag = 'smem constant byte address 0x4 - core index']
  #allocation1 [shape = 'u32[144,128]{1,0:T(1,128)}', space=vmem, size = 0x12000, scoped, tag = 'internal scratch']
  %s0 = inlined_call_operand.hbm [shape: f32[2,16,128], index: 0, kind: input, shape index: {}]
  %s1 = inlined_call_operand.hbm [shape: bf16[128,384], index: 1, kind: input, shape index: {}]
  %s2 = inlined_call_operand.vmem [shape: f32[1,384], index: 2, kind: input, shape index: {}]
  %s3 = inlined_call_operand.hbm [shape: bf16[128,128], index: 3, kind: input, shape index: {}]
  %s4 = inlined_call_operand.vmem [shape: f32[1,128], index: 4, kind: input, shape index: {}]
  %s5 = inlined_call_operand.vmem [shape: f32[1,128], index: 5, kind: input, shape index: {}]
  %s6 = inlined_call_operand.vmem [shape: f32[1,128], index: 6, kind: input, shape index: {}]
  %s7 = inlined_call_operand.hbm [shape: bf16[128,256], index: 7, kind: input, shape index: {}]
  %s8 = inlined_call_operand.vmem [shape: f32[1,256], index: 8, kind: input, shape index: {}]
  %s9 = inlined_call_operand.hbm [shape: bf16[256,128], index: 9, kind: input, shape index: {}]
  %s10 = inlined_call_operand.vmem [shape: f32[1,128], index: 10, kind: input, shape index: {}]
  %s11 = inlined_call_operand.vmem [shape: f32[1,128], index: 11, kind: input, shape index: {}]
  %s12 = inlined_call_operand.vmem [shape: f32[1,128], index: 12, kind: input, shape index: {}]
  %s13 = inlined_call_operand.hbm [shape: f32[2,16,128], index: 13, kind: output, shape index: {}]
  %s14 = sld [smem:[#allocation0]]
  $region105: #{tpu_custom_call.1} parent=0
    _
  %s16 = ssub.s32 1, %s14
  %s17 = scalar_select 0, %s16, %s14
  $region1: #{tpu_custom_call.1} parent=0
    #allocation2 [shape = 'u8[16384]{0}', space=vmem, size = 0x4000, scoped, tag = 'input window, operand 0']
    #allocation3 [shape = 's32[2]{0}', space=sflag, size = 0x8, scoped, tag = 'scoped memory for tpu_custom_call.1']
    #allocation4 [shape = 's32[2]{0}', space=sflag, size = 0x8, scoped, tag = 'scoped memory for tpu_custom_call.1']
    #allocation5 [shape = 'u8[98304]{0}', space=vmem, size = 0x18000, scoped, tag = 'input window, operand 1, single buffered']
    #allocation6 [shape = 's32[1]{0}', space=sflag, size = 0x4, scoped, tag = 'scoped memory for tpu_custom_call.1']
    #allocation7 [shape = 'u8[32768]{0}', space=vmem, size = 0x8000, scoped, tag = 'input window, operand 3, single buffered']
    #allocation8 [shape = 'u8[65536]{0}', space=vmem, size = 0x10000, scoped, tag = 'input window, operand 7, single buffered']
    #allocation9 [shape = 's32[1]{0}', space=sflag, size = 0x4, scoped, tag = 'scoped memory for tpu_custom_call.1']
    #allocation10 [shape = 'u8[65536]{0}', space=vmem, size = 0x10000, scoped, tag = 'input window, operand 9, single buffered']
    #allocation11 [shape = 'u8[16384]{0}', space=vmem, size = 0x4000, scoped, tag = 'output window, operand 0']
    %18 = vsyncpa [#allocation3], 0
    %s19 = scalar_lea.sflag [#allocation3], 1
    %20 = vsyncpa %s19, 0
    %21 = vsyncpa [#allocation6], 0
    %22 = vsyncpa [#allocation9], 0
    %23 = vsyncpa [#allocation4], 0
    %s24 = scalar_lea.sflag [#allocation4], 1
    %25 = vsyncpa %s24, 0
    loop: start=0, step=1, limit=4
    $region2: #{tpu_custom_call.1} parent=1 // loop_pre_header
      _
    $region3: #{tpu_custom_call.1} parent=1 // loop_header
      %s27 = sphi 0, %s31
      %p28 = scmp.ge.s32.totalorder %s27, 4
      %s37 = sphi 0, %s39
      %s40 = sphi 0, %s37
      %s41 = sphi 0, %s40
      %s57 = sphi 0, %s41
      %s61 = sphi 0, %s61
      %s63 = sphi 0, %s61
      %s64 = sphi 0, %s63
      %s78 = sphi 0, %s64
      %s82 = sphi 0, %s82
      %s84 = sphi 0, %s82
      %s85 = sphi 0, %s84
      %s99 = sphi 0, %s85
      %s103 = sphi 0, %s103
      %s105 = sphi 0, %s103
      %s106 = sphi 0, %s105
      %s120 = sphi 0, %s106
      %s124 = sphi 0, %s124
      %s126 = sphi 0, %s124
      %s127 = sphi 0, %s126
      %s141 = sphi 0, %s127
      %s145 = sphi 0, %s145
      %s147 = sphi 0, %s145
      %s148 = sphi 0, %s147
      %s162 = sphi 0, %s148
      %s166 = sphi 0, %s166
      %s168 = sphi 0, %s166
      %s169 = sphi 0, %s168
      %s183 = sphi 0, %s169
      %s187 = sphi 0, %s187
      %s189 = sphi 0, %s187
      %s190 = sphi 0, %s189
      %s204 = sphi 0, %s190
      %s208 = sphi 0, %s208
      %s210 = sphi 0, %s208
      %s211 = sphi 0, %s210
      %s225 = sphi 0, %s211
      %s229 = sphi 0, %s229
      %s231 = sphi 0, %s229
      %s232 = sphi 0, %s231
      %s246 = sphi 0, %s232
      %s250 = sphi 0, %s250
      %s252 = sphi 0, %s250
      %s253 = sphi 0, %s252
      %s267 = sphi 0, %s253
      %s271 = sphi 0, %s271
      %s273 = sphi 0, %s271
      %s274 = sphi 0, %s273
      %s288 = sphi 0, %s274
      %s292 = sphi 0, %s292
      %s294 = sphi 0, %s292
      %s295 = sphi 0, %s294
      %s309 = sphi 0, %s295
      %s315 = sphi 0, %s317
      %s318 = sphi 0, %s315
      %s319 = sphi 0, %s318
      %s335 = sphi 0, %s319
    $region4: #{tpu_custom_call.1} parent=1 // loop_header_branch
      %30 = sbr.rel (%p28) target = $region8
    $region5: #{tpu_custom_call.1} parent=1 // loop_body
      %s32 = ssub.s32 %s27, 1
      %s33 = ssub.s32 %s27, 2
      %s34 = sadd.s32 %s27, 1
      %s35 = ssub.s32 %s27, %s34
      %p36 = scmp.eq.s32.totalorder %s35, 0
      %s38 = sadd.s32 %s37, 1
      %s39 = scalar_select %p36, %s37, %s38
      %p42 = pneg %p36
      %p43 = scmp.eq.s32.totalorder %s27, 1
      %p44 = por %p42, %p43
      %p45 = scmp.ne.s32.totalorder %s37, %s40
      %p46 = scmp.eq.s32.totalorder %s27, 0
      %p47 = por %p45, %p46
      %p48 = scmp.ne.s32.totalorder %s37, %s40
      %p49 = scmp.eq.s32.totalorder %s32, 1
      %p50 = por %p48, %p49
      %p51 = scmp.ne.s32.totalorder %s40, %s41
      %p52 = scmp.eq.s32.totalorder %s32, 0
      %p53 = por %p51, %p52
      %p54 = scmp.ne.s32.totalorder %s40, %s41
      %p55 = scmp.eq.s32.totalorder %s33, 1
      %p56 = por %p54, %p55
      %p58 = scmp.ne.s32.totalorder %s41, %s57
      %p59 = scmp.eq.s32.totalorder %s33, 0
      %p60 = por %p58, %p59
      %s62 = sadd.s32 %s61, 1
      %p65 = scmp.eq.s32.totalorder %s27, 1
      %p66 = scmp.ne.s32.totalorder %s61, %s63
      %p67 = scmp.eq.s32.totalorder %s27, 0
      %p68 = por %p66, %p67
      %p69 = scmp.ne.s32.totalorder %s61, %s63
      %p70 = scmp.eq.s32.totalorder %s32, 1
      %p71 = por %p69, %p70
      %p72 = scmp.ne.s32.totalorder %s63, %s64
      %p73 = scmp.eq.s32.totalorder %s32, 0
      %p74 = por %p72, %p73
      %p75 = scmp.ne.s32.totalorder %s63, %s64
      %p76 = scmp.eq.s32.totalorder %s33, 1
      %p77 = por %p75, %p76
      %p79 = scmp.ne.s32.totalorder %s64, %s78
      %p80 = scmp.eq.s32.totalorder %s33, 0
      %p81 = por %p79, %p80
      %s83 = sadd.s32 %s82, 1
      %p86 = scmp.eq.s32.totalorder %s27, 1
      %p87 = scmp.ne.s32.totalorder %s82, %s84
      %p88 = scmp.eq.s32.totalorder %s27, 0
      %p89 = por %p87, %p88
      %p90 = scmp.ne.s32.totalorder %s82, %s84
      %p91 = scmp.eq.s32.totalorder %s32, 1
      %p92 = por %p90, %p91
      %p93 = scmp.ne.s32.totalorder %s84, %s85
      %p94 = scmp.eq.s32.totalorder %s32, 0
      %p95 = por %p93, %p94
      %p96 = scmp.ne.s32.totalorder %s84, %s85
      %p97 = scmp.eq.s32.totalorder %s33, 1
      %p98 = por %p96, %p97
      %p100 = scmp.ne.s32.totalorder %s85, %s99
      %p101 = scmp.eq.s32.totalorder %s33, 0
      %p102 = por %p100, %p101
      %s104 = sadd.s32 %s103, 1
      %p107 = scmp.eq.s32.totalorder %s27, 1
      %p108 = scmp.ne.s32.totalorder %s103, %s105
      %p109 = scmp.eq.s32.totalorder %s27, 0
      %p110 = por %p108, %p109
      %p111 = scmp.ne.s32.totalorder %s103, %s105
      %p112 = scmp.eq.s32.totalorder %s32, 1
      %p113 = por %p111, %p112
      %p114 = scmp.ne.s32.totalorder %s105, %s106
      %p115 = scmp.eq.s32.totalorder %s32, 0
      %p116 = por %p114, %p115
      %p117 = scmp.ne.s32.totalorder %s105, %s106
      %p118 = scmp.eq.s32.totalorder %s33, 1
      %p119 = por %p117, %p118
      %p121 = scmp.ne.s32.totalorder %s106, %s120
      %p122 = scmp.eq.s32.totalorder %s33, 0
      %p123 = por %p121, %p122
      %s125 = sadd.s32 %s124, 1
      %p128 = scmp.eq.s32.totalorder %s27, 1
      %p129 = scmp.ne.s32.totalorder %s124, %s126
      %p130 = scmp.eq.s32.totalorder %s27, 0
      %p131 = por %p129, %p130
      %p132 = scmp.ne.s32.totalorder %s124, %s126
      %p133 = scmp.eq.s32.totalorder %s32, 1
      %p134 = por %p132, %p133
      %p135 = scmp.ne.s32.totalorder %s126, %s127
      %p136 = scmp.eq.s32.totalorder %s32, 0
      %p137 = por %p135, %p136
      %p138 = scmp.ne.s32.totalorder %s126, %s127
      %p139 = scmp.eq.s32.totalorder %s33, 1
      %p140 = por %p138, %p139
      %p142 = scmp.ne.s32.totalorder %s127, %s141
      %p143 = scmp.eq.s32.totalorder %s33, 0
      %p144 = por %p142, %p143
      %s146 = sadd.s32 %s145, 1
      %p149 = scmp.eq.s32.totalorder %s27, 1
      %p150 = scmp.ne.s32.totalorder %s145, %s147
      %p151 = scmp.eq.s32.totalorder %s27, 0
      %p152 = por %p150, %p151
      %p153 = scmp.ne.s32.totalorder %s145, %s147
      %p154 = scmp.eq.s32.totalorder %s32, 1
      %p155 = por %p153, %p154
      %p156 = scmp.ne.s32.totalorder %s147, %s148
      %p157 = scmp.eq.s32.totalorder %s32, 0
      %p158 = por %p156, %p157
      %p159 = scmp.ne.s32.totalorder %s147, %s148
      %p160 = scmp.eq.s32.totalorder %s33, 1
      %p161 = por %p159, %p160
      %p163 = scmp.ne.s32.totalorder %s148, %s162
      %p164 = scmp.eq.s32.totalorder %s33, 0
      %p165 = por %p163, %p164
      %s167 = sadd.s32 %s166, 1
      %p170 = scmp.eq.s32.totalorder %s27, 1
      %p171 = scmp.ne.s32.totalorder %s166, %s168
      %p172 = scmp.eq.s32.totalorder %s27, 0
      %p173 = por %p171, %p172
      %p174 = scmp.ne.s32.totalorder %s166, %s168
      %p175 = scmp.eq.s32.totalorder %s32, 1
      %p176 = por %p174, %p175
      %p177 = scmp.ne.s32.totalorder %s168, %s169
      %p178 = scmp.eq.s32.totalorder %s32, 0
      %p179 = por %p177, %p178
      %p180 = scmp.ne.s32.totalorder %s168, %s169
      %p181 = scmp.eq.s32.totalorder %s33, 1
      %p182 = por %p180, %p181
      %p184 = scmp.ne.s32.totalorder %s169, %s183
      %p185 = scmp.eq.s32.totalorder %s33, 0
      %p186 = por %p184, %p185
      %s188 = sadd.s32 %s187, 1
      %p191 = scmp.eq.s32.totalorder %s27, 1
      %p192 = scmp.ne.s32.totalorder %s187, %s189
      %p193 = scmp.eq.s32.totalorder %s27, 0
      %p194 = por %p192, %p193
      %p195 = scmp.ne.s32.totalorder %s187, %s189
      %p196 = scmp.eq.s32.totalorder %s32, 1
      %p197 = por %p195, %p196
      %p198 = scmp.ne.s32.totalorder %s189, %s190
      %p199 = scmp.eq.s32.totalorder %s32, 0
      %p200 = por %p198, %p199
      %p201 = scmp.ne.s32.totalorder %s189, %s190
      %p202 = scmp.eq.s32.totalorder %s33, 1
      %p203 = por %p201, %p202
      %p205 = scmp.ne.s32.totalorder %s190, %s204
      %p206 = scmp.eq.s32.totalorder %s33, 0
      %p207 = por %p205, %p206
      %s209 = sadd.s32 %s208, 1
      %p212 = scmp.eq.s32.totalorder %s27, 1
      %p213 = scmp.ne.s32.totalorder %s208, %s210
      %p214 = scmp.eq.s32.totalorder %s27, 0
      %p215 = por %p213, %p214
      %p216 = scmp.ne.s32.totalorder %s208, %s210
      %p217 = scmp.eq.s32.totalorder %s32, 1
      %p218 = por %p216, %p217
      %p219 = scmp.ne.s32.totalorder %s210, %s211
      %p220 = scmp.eq.s32.totalorder %s32, 0
      %p221 = por %p219, %p220
      %p222 = scmp.ne.s32.totalorder %s210, %s211
      %p223 = scmp.eq.s32.totalorder %s33, 1
      %p224 = por %p222, %p223
      %p226 = scmp.ne.s32.totalorder %s211, %s225
      %p227 = scmp.eq.s32.totalorder %s33, 0
      %p228 = por %p226, %p227
      %s230 = sadd.s32 %s229, 1
      %p233 = scmp.eq.s32.totalorder %s27, 1
      %p234 = scmp.ne.s32.totalorder %s229, %s231
      %p235 = scmp.eq.s32.totalorder %s27, 0
      %p236 = por %p234, %p235
      %p237 = scmp.ne.s32.totalorder %s229, %s231
      %p238 = scmp.eq.s32.totalorder %s32, 1
      %p239 = por %p237, %p238
      %p240 = scmp.ne.s32.totalorder %s231, %s232
      %p241 = scmp.eq.s32.totalorder %s32, 0
      %p242 = por %p240, %p241
      %p243 = scmp.ne.s32.totalorder %s231, %s232
      %p244 = scmp.eq.s32.totalorder %s33, 1
      %p245 = por %p243, %p244
      %p247 = scmp.ne.s32.totalorder %s232, %s246
      %p248 = scmp.eq.s32.totalorder %s33, 0
      %p249 = por %p247, %p248
      %s251 = sadd.s32 %s250, 1
      %p254 = scmp.eq.s32.totalorder %s27, 1
      %p255 = scmp.ne.s32.totalorder %s250, %s252
      %p256 = scmp.eq.s32.totalorder %s27, 0
      %p257 = por %p255, %p256
      %p258 = scmp.ne.s32.totalorder %s250, %s252
      %p259 = scmp.eq.s32.totalorder %s32, 1
      %p260 = por %p258, %p259
      %p261 = scmp.ne.s32.totalorder %s252, %s253
      %p262 = scmp.eq.s32.totalorder %s32, 0
      %p263 = por %p261, %p262
      %p264 = scmp.ne.s32.totalorder %s252, %s253
      %p265 = scmp.eq.s32.totalorder %s33, 1
      %p266 = por %p264, %p265
      %p268 = scmp.ne.s32.totalorder %s253, %s267
      %p269 = scmp.eq.s32.totalorder %s33, 0
      %p270 = por %p268, %p269
      %s272 = sadd.s32 %s271, 1
      %p275 = scmp.eq.s32.totalorder %s27, 1
      %p276 = scmp.ne.s32.totalorder %s271, %s273
      %p277 = scmp.eq.s32.totalorder %s27, 0
      %p278 = por %p276, %p277
      %p279 = scmp.ne.s32.totalorder %s271, %s273
      %p280 = scmp.eq.s32.totalorder %s32, 1
      %p281 = por %p279, %p280
      %p282 = scmp.ne.s32.totalorder %s273, %s274
      %p283 = scmp.eq.s32.totalorder %s32, 0
      %p284 = por %p282, %p283
      %p285 = scmp.ne.s32.totalorder %s273, %s274
      %p286 = scmp.eq.s32.totalorder %s33, 1
      %p287 = por %p285, %p286
      %p289 = scmp.ne.s32.totalorder %s274, %s288
      %p290 = scmp.eq.s32.totalorder %s33, 0
      %p291 = por %p289, %p290
      %s293 = sadd.s32 %s292, 1
      %p296 = scmp.eq.s32.totalorder %s27, 1
      %p297 = scmp.ne.s32.totalorder %s292, %s294
      %p298 = scmp.eq.s32.totalorder %s27, 0
      %p299 = por %p297, %p298
      %p300 = scmp.ne.s32.totalorder %s292, %s294
      %p301 = scmp.eq.s32.totalorder %s32, 1
      %p302 = por %p300, %p301
      %p303 = scmp.ne.s32.totalorder %s294, %s295
      %p304 = scmp.eq.s32.totalorder %s32, 0
      %p305 = por %p303, %p304
      %p306 = scmp.ne.s32.totalorder %s294, %s295
      %p307 = scmp.eq.s32.totalorder %s33, 1
      %p308 = por %p306, %p307
      %p310 = scmp.ne.s32.totalorder %s295, %s309
      %p311 = scmp.eq.s32.totalorder %s33, 0
      %p312 = por %p310, %p311
      %s313 = ssub.s32 %s27, %s34
      %p314 = scmp.eq.s32.totalorder %s313, 0
      %s316 = sadd.s32 %s315, 1
      %s317 = scalar_select %p314, %s315, %s316
      %p320 = pneg %p314
      %p321 = scmp.eq.s32.totalorder %s27, 1
      %p322 = por %p320, %p321
      %p323 = scmp.ne.s32.totalorder %s315, %s318
      %p324 = scmp.eq.s32.totalorder %s27, 0
      %p325 = por %p323, %p324
      %p326 = scmp.ne.s32.totalorder %s315, %s318
      %p327 = scmp.eq.s32.totalorder %s32, 1
      %p328 = por %p326, %p327
      %p329 = scmp.ne.s32.totalorder %s318, %s319
      %p330 = scmp.eq.s32.totalorder %s32, 0
      %p331 = por %p329, %p330
      %p332 = scmp.ne.s32.totalorder %s318, %s319
      %p333 = scmp.eq.s32.totalorder %s33, 1
      %p334 = por %p332, %p333
      %p336 = scmp.ne.s32.totalorder %s319, %s335
      %p337 = scmp.eq.s32.totalorder %s33, 0
      %p338 = por %p336, %p337
      %p339 = scmp.le.s32.totalorder 1, %s27
      %p340 = scmp.lt.s32.totalorder %s27, 3
      %p341 = pnand %p339, %p340
      %p342 = pneg %p341
      // Predicated region
      $region9: #{tpu_custom_call.1} parent=5 // pred_check
        _
      $region10: #{tpu_custom_call.1} parent=5 // pred_check_branch
        %344 = sbr.rel (%p341) target = $region12
      $region11: #{tpu_custom_call.1} parent=5 // pred_region
        %s345 = ssub.s32 %s27, 1
        // Predicated region
        $region13: #{tpu_custom_call.1} parent=11 // pred_check
          %p346 = pneg %p74
        $region14: #{tpu_custom_call.1} parent=11 // pred_check_branch
          %348 = sbr.rel (%p346) target = $region16
        $region15: #{tpu_custom_call.1} parent=11 // pred_region
          %s350 = ssub.s32 3072, 3072
          %351 = vsyncadd [#allocation6], %s350
          %s352 = sshll.u32 [#allocation5], 4
          %s353 = int_to_ptr.vmem [resolvable:$true] %s352
          %358 = dma.hbm_to_vmem [thread:$0]  %s1, 3072, %s353, [#allocation6], 192, 192, 12
        $region16: #{tpu_custom_call.1} parent=11 // pred_fallthru
          _
        // Predicated region
        $region17: #{tpu_custom_call.1} parent=11 // pred_check
          %p359 = pneg %p95
        $region18: #{tpu_custom_call.1} parent=11 // pred_check_branch
          %361 = sbr.rel (%p359) target = $region20
        $region19: #{tpu_custom_call.1} parent=11 // pred_region
          _
        $region20: #{tpu_custom_call.1} parent=11 // pred_fallthru
          _
        // Predicated region
        $region21: #{tpu_custom_call.1} parent=11 // pred_check
          %p362 = pneg %p116
        $region22: #{tpu_custom_call.1} parent=11 // pred_check_branch
          %364 = sbr.rel (%p362) target = $region24
        $region23: #{tpu_custom_call.1} parent=11 // pred_region
          %s366 = ssub.s32 1024, 1024
          %367 = vsyncadd [#allocation6], %s366
          %s368 = sshll.u32 [#allocation7], 4
          %s369 = int_to_ptr.vmem [resolvable:$true] %s368
          %374 = dma.hbm_to_vmem [thread:$0]  %s3, 1024, %s369, [#allocation6], 64, 64, 4
        $region24: #{tpu_custom_call.1} parent=11 // pred_fallthru
          _
        // Predicated region
        $region25: #{tpu_custom_call.1} parent=11 // pred_check
          %p375 = pneg %p137
        $region26: #{tpu_custom_call.1} parent=11 // pred_check_branch
          %377 = sbr.rel (%p375) target = $region28
        $region27: #{tpu_custom_call.1} parent=11 // pred_region
          _
        $region28: #{tpu_custom_call.1} parent=11 // pred_fallthru
          _
        // Predicated region
        $region29: #{tpu_custom_call.1} parent=11 // pred_check
          %p378 = pneg %p158
        $region30: #{tpu_custom_call.1} parent=11 // pred_check_branch
          %380 = sbr.rel (%p378) target = $region32
        $region31: #{tpu_custom_call.1} parent=11 // pred_region
          _
        $region32: #{tpu_custom_call.1} parent=11 // pred_fallthru
          _
        // Predicated region
        $region33: #{tpu_custom_call.1} parent=11 // pred_check
          %p381 = pneg %p179
        $region34: #{tpu_custom_call.1} parent=11 // pred_check_branch
          %383 = sbr.rel (%p381) target = $region36
        $region35: #{tpu_custom_call.1} parent=11 // pred_region
          _
        $region36: #{tpu_custom_call.1} parent=11 // pred_fallthru
          _
        // Predicated region
        $region37: #{tpu_custom_call.1} parent=11 // pred_check
          %p384 = pneg %p200
        $region38: #{tpu_custom_call.1} parent=11 // pred_check_branch
          %386 = sbr.rel (%p384) target = $region40
        $region39: #{tpu_custom_call.1} parent=11 // pred_region
          %s388 = ssub.s32 2048, 2048
          %389 = vsyncadd [#allocation9], %s388
          %s390 = sshll.u32 [#allocation8], 4
          %s391 = int_to_ptr.vmem [resolvable:$true] %s390
          %396 = dma.hbm_to_vmem [thread:$0]  %s7, 2048, %s391, [#allocation9], 128, 128, 8
        $region40: #{tpu_custom_call.1} parent=11 // pred_fallthru
          _
        // Predicated region
        $region41: #{tpu_custom_call.1} parent=11 // pred_check
          %p397 = pneg %p221
        $region42: #{tpu_custom_call.1} parent=11 // pred_check_branch
          %399 = sbr.rel (%p397) target = $region44
        $region43: #{tpu_custom_call.1} parent=11 // pred_region
          _
        $region44: #{tpu_custom_call.1} parent=11 // pred_fallthru
          _
        // Predicated region
        $region45: #{tpu_custom_call.1} parent=11 // pred_check
          %p400 = pneg %p242
        $region46: #{tpu_custom_call.1} parent=11 // pred_check_branch
          %402 = sbr.rel (%p400) target = $region48
        $region47: #{tpu_custom_call.1} parent=11 // pred_region
          %s404 = ssub.s32 2048, 2048
          %405 = vsyncadd [#allocation9], %s404
          %s406 = sshll.u32 [#allocation10], 4
          %s407 = int_to_ptr.vmem [resolvable:$true] %s406
          %412 = dma.hbm_to_vmem [thread:$0]  %s9, 2048, %s407, [#allocation9], 64, 64, 4
        $region48: #{tpu_custom_call.1} parent=11 // pred_fallthru
          _
        // Predicated region
        $region49: #{tpu_custom_call.1} parent=11 // pred_check
          %p413 = pneg %p263
        $region50: #{tpu_custom_call.1} parent=11 // pred_check_branch
          %415 = sbr.rel (%p413) target = $region52
        $region51: #{tpu_custom_call.1} parent=11 // pred_region
          _
        $region52: #{tpu_custom_call.1} parent=11 // pred_fallthru
          _
        // Predicated region
        $region53: #{tpu_custom_call.1} parent=11 // pred_check
          %p416 = pneg %p284
        $region54: #{tpu_custom_call.1} parent=11 // pred_check_branch
          %418 = sbr.rel (%p416) target = $region56
        $region55: #{tpu_custom_call.1} parent=11 // pred_region
          _
        $region56: #{tpu_custom_call.1} parent=11 // pred_fallthru
          _
        // Predicated region
        $region57: #{tpu_custom_call.1} parent=11 // pred_check
          %p419 = pneg %p305
        $region58: #{tpu_custom_call.1} parent=11 // pred_check_branch
          %421 = sbr.rel (%p419) target = $region60
        $region59: #{tpu_custom_call.1} parent=11 // pred_region
          _
        $region60: #{tpu_custom_call.1} parent=11 // pred_fallthru
          _
      $region12: #{tpu_custom_call.1} parent=5 // pred_fallthru
        _
      %p422 = scmp.lt.s32.totalorder %s27, 2
      // Predicated region
      $region61: #{tpu_custom_call.1} parent=5 // pred_check
        %p423 = pneg %p422
      $region62: #{tpu_custom_call.1} parent=5 // pred_check_branch
        %425 = sbr.rel (%p423) target = $region64
      $region63: #{tpu_custom_call.1} parent=5 // pred_region
        // Predicated region
        $region65: #{tpu_custom_call.1} parent=63 // pred_check
          %p426 = pneg %p47
        $region66: #{tpu_custom_call.1} parent=63 // pred_check_branch
          %428 = sbr.rel (%p426) target = $region68
        $region67: #{tpu_custom_call.1} parent=63 // pred_region
          %s429 = sand.u32 %s37, 1
          %s430 = scalar_lea.sflag [#allocation3], %s429
          %s431 = sand.u32 %s37, 1
          %s432 = smul.addr %s431, 16
          %s433 = scalar_lea.vmem [#allocation2], %s432
          %s435 = ssub.s32 256, 256
          %436 = vsyncadd %s430, %s435
          %s437 = smul.addr %s27, 2
          %s438 = smul.addr %s437, 128
          %s439 = scalar_lea.hbm %s0, %s438
          %s440 = sshll.u32 %s433, 4
          %s441 = int_to_ptr.vmem [resolvable:$true] %s440
          %446 = dma.hbm_to_vmem [thread:$0]  %s439, 256, %s441, %s430, 128, 128, 8
        $region68: #{tpu_custom_call.1} parent=63 // pred_fallthru
          _
      $region64: #{tpu_custom_call.1} parent=5 // pred_fallthru
        _
      %p447 = scmp.le.s32.totalorder 1, %s27
      %p448 = scmp.lt.s32.totalorder %s27, 3
      %p449 = pnand %p447, %p448
      %p450 = pneg %p449
      // Predicated region
      $region69: #{tpu_custom_call.1} parent=5 // pred_check
        _
      $region70: #{tpu_custom_call.1} parent=5 // pred_check_branch
        %452 = sbr.rel (%p449) target = $region72
      $region71: #{tpu_custom_call.1} parent=5 // pred_region
        %s453 = ssub.s32 %s27, 1
        %s454 = sand.u32 %s40, 1
        %s455 = scalar_lea.sflag [#allocation3], %s454
        %s456 = sand.u32 %s40, 1
        %s457 = smul.addr %s456, 16
        %s458 = scalar_lea.vmem [#allocation2], %s457
        // Predicated region
        $region73: #{tpu_custom_call.1} parent=71 // pred_check
          %p459 = pneg %p53
        $region74: #{tpu_custom_call.1} parent=71 // pred_check_branch
          %461 = sbr.rel (%p459) target = $region76
        $region75: #{tpu_custom_call.1} parent=71 // pred_region
          %462 = dma.done %s455, 256
        $region76: #{tpu_custom_call.1} parent=71 // pred_fallthru
          _
        // Predicated region
        $region77: #{tpu_custom_call.1} parent=71 // pred_check
          %p463 = pneg %p74
        $region78: #{tpu_custom_call.1} parent=71 // pred_check_branch
          %465 = sbr.rel (%p463) target = $region80
        $region79: #{tpu_custom_call.1} parent=71 // pred_region
          %466 = dma.done [#allocation6], 3072
        $region80: #{tpu_custom_call.1} parent=71 // pred_fallthru
          _
        // Predicated region
        $region81: #{tpu_custom_call.1} parent=71 // pred_check
          %p467 = pneg %p116
        $region82: #{tpu_custom_call.1} parent=71 // pred_check_branch
          %469 = sbr.rel (%p467) target = $region84
        $region83: #{tpu_custom_call.1} parent=71 // pred_region
          %470 = dma.done [#allocation6], 1024
        $region84: #{tpu_custom_call.1} parent=71 // pred_fallthru
          _
        // Predicated region
        $region85: #{tpu_custom_call.1} parent=71 // pred_check
          %p471 = pneg %p200
        $region86: #{tpu_custom_call.1} parent=71 // pred_check_branch
          %473 = sbr.rel (%p471) target = $region88
        $region87: #{tpu_custom_call.1} parent=71 // pred_region
          %474 = dma.done [#allocation9], 2048
        $region88: #{tpu_custom_call.1} parent=71 // pred_fallthru
          _
        // Predicated region
        $region89: #{tpu_custom_call.1} parent=71 // pred_check
          %p475 = pneg %p242
        $region90: #{tpu_custom_call.1} parent=71 // pred_check_branch
          %477 = sbr.rel (%p475) target = $region92
        $region91: #{tpu_custom_call.1} parent=71 // pred_region
          %478 = dma.done [#allocation9], 2048
        $region92: #{tpu_custom_call.1} parent=71 // pred_fallthru
          _
        %s479 = sand.u32 %s40, 1
        %s480 = scalar_lea.sflag [#allocation3], %s479
        %s481 = sand.u32 %s40, 1
        %s482 = smul.addr %s481, 16
        %s483 = scalar_lea.vmem [#allocation2], %s482
        %p484 = pneg %p53
        %p485 = pneg %p50
        %p486 = pneg %p74
        %p487 = pneg %p71
        %p488 = pneg %p95
        %p489 = pneg %p92
        %p490 = pneg %p116
        %p491 = pneg %p113
        %p492 = pneg %p137
        %p493 = pneg %p134
        %p494 = pneg %p158
        %p495 = pneg %p155
        %p496 = pneg %p179
        %p497 = pneg %p176
        %p498 = pneg %p200
        %p499 = pneg %p197
        %p500 = pneg %p221
        %p501 = pneg %p218
        %p502 = pneg %p242
        %p503 = pneg %p239
        %p504 = pneg %p263
        %p505 = pneg %p260
        %p506 = pneg %p284
        %p507 = pneg %p281
        %p508 = pneg %p305
        %p509 = pneg %p302
        %p510 = pneg %p331
        %p511 = pneg %p328
        %s512 = sand.u32 %s318, 1
        %s513 = scalar_lea.sflag [#allocation4], %s512
        %s514 = sand.u32 %s318, 1
        %s515 = smul.addr %s514, 16
        %s516 = scalar_lea.vmem [#allocation11], %s515
        %v518 = vld [vmem:[%s458] sm:$0xff]
        %v519 = vld [vmem:[%s458 + $0x8] sm:$0xff]
        %v520 = vld [vmem:[#allocation5] sm:$0xff]
        %v521 = vld [vmem:[#allocation5 + $0x8] sm:$0xf]
        %v522 = vld [vmem:[#allocation5 + $0xc] sm:$0xff]
        %v523 = vld [vmem:[#allocation5 + $0x14] sm:$0xf]
        %v524 = vld [vmem:[#allocation5 + $0x18] sm:$0xff]
        %v525 = vld [vmem:[#allocation5 + $0x20] sm:$0xf]
        %v526 = vld [vmem:[#allocation5 + $0x24] sm:$0xff]
        %v527 = vld [vmem:[#allocation5 + $0x2c] sm:$0xf]
        %v528 = vld [vmem:[#allocation5 + $0x30] sm:$0xff]
        %v529 = vld [vmem:[#allocation5 + $0x38] sm:$0xf]
        %v530 = vld [vmem:[#allocation5 + $0x3c] sm:$0xff]
        %v531 = vld [vmem:[#allocation5 + $0x44] sm:$0xf]
        %v532 = vld [vmem:[#allocation5 + $0x48] sm:$0xff]
        %v533 = vld [vmem:[#allocation5 + $0x50] sm:$0xf]
        %v534 = vld [vmem:[#allocation5 + $0x54] sm:$0xff]
        %v535 = vld [vmem:[#allocation5 + $0x5c] sm:$0xf]
        %v536 = vld [vmem:[#allocation5 + $0x60] sm:$0xff]
        %v537 = vld [vmem:[#allocation5 + $0x68] sm:$0xf]
        %v538 = vld [vmem:[#allocation5 + $0x6c] sm:$0xff]
        %v539 = vld [vmem:[#allocation5 + $0x74] sm:$0xf]
        %v540 = vld [vmem:[#allocation5 + $0x78] sm:$0xff]
        %v541 = vld [vmem:[#allocation5 + $0x80] sm:$0xf]
        %v542 = vld [vmem:[#allocation5 + $0x84] sm:$0xff]
        %v543 = vld [vmem:[#allocation5 + $0x8c] sm:$0xf]
        %v544 = vld [vmem:[#allocation5 + $0x90] sm:$0xff]
        %v545 = vld [vmem:[#allocation5 + $0x98] sm:$0xf]
        %v546 = vld [vmem:[#allocation5 + $0x9c] sm:$0xff]
        %v547 = vld [vmem:[#allocation5 + $0xa4] sm:$0xf]
        %v548 = vld [vmem:[#allocation5 + $0xa8] sm:$0xff]
        %v549 = vld [vmem:[#allocation5 + $0xb0] sm:$0xf]
        %v550 = vld [vmem:[#allocation5 + $0xb4] sm:$0xff]
        %v551 = vld [vmem:[#allocation5 + $0xbc] sm:$0xf]
        %v552 = vld [vmem:[%s2] sm:$0x7]
        %v553 = vld [vmem:[#allocation7] sm:$0xf]
        %v554 = vld [vmem:[#allocation7 + $0x4] sm:$0xf]
        %v555 = vld [vmem:[#allocation7 + $0x8] sm:$0xf]
        %v556 = vld [vmem:[#allocation7 + $0xc] sm:$0xf]
        %v557 = vld [vmem:[#allocation7 + $0x10] sm:$0xf]
        %v558 = vld [vmem:[#allocation7 + $0x14] sm:$0xf]
        %v559 = vld [vmem:[#allocation7 + $0x18] sm:$0xf]
        %v560 = vld [vmem:[#allocation7 + $0x1c] sm:$0xf]
        %v561 = vld [vmem:[#allocation7 + $0x20] sm:$0xf]
        %v562 = vld [vmem:[#allocation7 + $0x24] sm:$0xf]
        %v563 = vld [vmem:[#allocation7 + $0x28] sm:$0xf]
        %v564 = vld [vmem:[#allocation7 + $0x2c] sm:$0xf]
        %v565 = vld [vmem:[#allocation7 + $0x30] sm:$0xf]
        %v566 = vld [vmem:[#allocation7 + $0x34] sm:$0xf]
        %v567 = vld [vmem:[#allocation7 + $0x38] sm:$0xf]
        %v568 = vld [vmem:[#allocation7 + $0x3c] sm:$0xf]
        %v569 = vld [vmem:[%s4] sm:$0x1]
        %v570 = vld [vmem:[%s5] sm:$0x1]
        %v571 = vld [vmem:[%s6] sm:$0x1]
        %v572 = vld [vmem:[#allocation8] sm:$0xff]
        %v573 = vld [vmem:[#allocation8 + $0x8] sm:$0xff]
        %v574 = vld [vmem:[#allocation8 + $0x10] sm:$0xff]
        %v575 = vld [vmem:[#allocation8 + $0x18] sm:$0xff]
        %v576 = vld [vmem:[#allocation8 + $0x20] sm:$0xff]
        %v577 = vld [vmem:[#allocation8 + $0x28] sm:$0xff]
        %v578 = vld [vmem:[#allocation8 + $0x30] sm:$0xff]
        %v579 = vld [vmem:[#allocation8 + $0x38] sm:$0xff]
        %v580 = vld [vmem:[#allocation8 + $0x40] sm:$0xff]
        %v581 = vld [vmem:[#allocation8 + $0x48] sm:$0xff]
        %v582 = vld [vmem:[#allocation8 + $0x50] sm:$0xff]
        %v583 = vld [vmem:[#allocation8 + $0x58] sm:$0xff]
        %v584 = vld [vmem:[#allocation8 + $0x60] sm:$0xff]
        %v585 = vld [vmem:[#allocation8 + $0x68] sm:$0xff]
        %v586 = vld [vmem:[#allocation8 + $0x70] sm:$0xff]
        %v587 = vld [vmem:[#allocation8 + $0x78] sm:$0xff]
        %v588 = vld [vmem:[%s8] sm:$0x3]
        %v589 = vld [vmem:[#allocation10] sm:$0xf]
        %v590 = vld [vmem:[#allocation10 + $0x4] sm:$0xf]
        %v591 = vld [vmem:[#allocation10 + $0x8] sm:$0xf]
        %v592 = vld [vmem:[#allocation10 + $0xc] sm:$0xf]
        %v593 = vld [vmem:[#allocation10 + $0x10] sm:$0xf]
        %v594 = vld [vmem:[#allocation10 + $0x14] sm:$0xf]
        %v595 = vld [vmem:[#allocation10 + $0x18] sm:$0xf]
        %v596 = vld [vmem:[#allocation10 + $0x1c] sm:$0xf]
        %v597 = vld [vmem:[#allocation10 + $0x20] sm:$0xf]
        %v598 = vld [vmem:[#allocation10 + $0x24] sm:$0xf]
        %v599 = vld [vmem:[#allocation10 + $0x28] sm:$0xf]
        %v600 = vld [vmem:[#allocation10 + $0x2c] sm:$0xf]
        %v601 = vld [vmem:[#allocation10 + $0x30] sm:$0xf]
        %v602 = vld [vmem:[#allocation10 + $0x34] sm:$0xf]
        %v603 = vld [vmem:[#allocation10 + $0x38] sm:$0xf]
        %v604 = vld [vmem:[#allocation10 + $0x3c] sm:$0xf]
        %v605 = vld [vmem:[#allocation10 + $0x40] sm:$0xf]
        %v606 = vld [vmem:[#allocation10 + $0x44] sm:$0xf]
        %v607 = vld [vmem:[#allocation10 + $0x48] sm:$0xf]
        %v608 = vld [vmem:[#allocation10 + $0x4c] sm:$0xf]
        %v609 = vld [vmem:[#allocation10 + $0x50] sm:$0xf]
        %v610 = vld [vmem:[#allocation10 + $0x54] sm:$0xf]
        %v611 = vld [vmem:[#allocation10 + $0x58] sm:$0xf]
        %v612 = vld [vmem:[#allocation10 + $0x5c] sm:$0xf]
        %v613 = vld [vmem:[#allocation10 + $0x60] sm:$0xf]
        %v614 = vld [vmem:[#allocation10 + $0x64] sm:$0xf]
        %v615 = vld [vmem:[#allocation10 + $0x68] sm:$0xf]
        %v616 = vld [vmem:[#allocation10 + $0x6c] sm:$0xf]
        %v617 = vld [vmem:[#allocation10 + $0x70] sm:$0xf]
        %v618 = vld [vmem:[#allocation10 + $0x74] sm:$0xf]
        %v619 = vld [vmem:[#allocation10 + $0x78] sm:$0xf]
        %v620 = vld [vmem:[#allocation10 + $0x7c] sm:$0xf]
        %v621 = vld [vmem:[%s10] sm:$0x1]
        %v622 = vld [vmem:[%s11] sm:$0x1]
        %v623 = vld [vmem:[%s12] sm:$0x1]
        %v624 = vpack.c.bf16 %v519, %v518
        %v626 = vlaneseq
        %v627 = vshrl.u32 %v626, 7
        %v628 = vsub.s32 0, %v627
        %v629 = vrot.slane %v552, %v628
        %v630 = vlaneseq
        %v631 = vshrl.u32 %v630, 7
        %v632 = vsub.s32 1, %v631
        %v633 = vrot.slane %v552, %v632
        %v634 = vlaneseq
        %v635 = vshrl.u32 %v634, 7
        %v636 = vsub.s32 2, %v635
        %v637 = vrot.slane %v552, %v636
        %v673 = vunpack.c.l.b16 %v520
        %v674 = vunpack.c.h.b16 %v520
        %v675 = vunpack.c.l.b16 %v521
        %v676 = vunpack.c.l.b16 %v522
        %v677 = vunpack.c.h.b16 %v522
        %v678 = vunpack.c.l.b16 %v523
        %v679 = vunpack.c.l.b16 %v524
        %v680 = vunpack.c.h.b16 %v524
        %v681 = vunpack.c.l.b16 %v525
        %v682 = vunpack.c.l.b16 %v526
        %v683 = vunpack.c.h.b16 %v526
        %v684 = vunpack.c.l.b16 %v527
        %v685 = vunpack.c.l.b16 %v528
        %v686 = vunpack.c.h.b16 %v528
        %v687 = vunpack.c.l.b16 %v529
        %v688 = vunpack.c.l.b16 %v530
        %v689 = vunpack.c.h.b16 %v530
        %v690 = vunpack.c.l.b16 %v531
        %v691 = vunpack.c.l.b16 %v532
        %v692 = vunpack.c.h.b16 %v532
        %v693 = vunpack.c.l.b16 %v533
        %v694 = vunpack.c.l.b16 %v534
        %v695 = vunpack.c.h.b16 %v534
        %v696 = vunpack.c.l.b16 %v535
        %v697 = vunpack.c.l.b16 %v536
        %v698 = vunpack.c.h.b16 %v536
        %v699 = vunpack.c.l.b16 %v537
        %v700 = vunpack.c.l.b16 %v538
        %v701 = vunpack.c.h.b16 %v538
        %v702 = vunpack.c.l.b16 %v539
        %v703 = vunpack.c.l.b16 %v540
        %v704 = vunpack.c.h.b16 %v540
        %v705 = vunpack.c.l.b16 %v541
        %v706 = vunpack.c.l.b16 %v542
        %v707 = vunpack.c.h.b16 %v542
        %v708 = vunpack.c.l.b16 %v543
        %v709 = vunpack.c.l.b16 %v544
        %v710 = vunpack.c.h.b16 %v544
        %v711 = vunpack.c.l.b16 %v545
        %v712 = vunpack.c.l.b16 %v546
        %v713 = vunpack.c.h.b16 %v546
        %v714 = vunpack.c.l.b16 %v547
        %v715 = vunpack.c.l.b16 %v548
        %v716 = vunpack.c.h.b16 %v548
        %v717 = vunpack.c.l.b16 %v549
        %v718 = vunpack.c.l.b16 %v550
        %v719 = vunpack.c.h.b16 %v550
        %v720 = vunpack.c.l.b16 %v551
        %v721 = vpack.c.b16 %v676, %v673
        %v722 = vpack.c.b16 %v677, %v674
        %v723 = vpack.c.b16 %v678, %v675
        %v724 = vpack.c.b16 %v682, %v679
        %v725 = vpack.c.b16 %v683, %v680
        %v726 = vpack.c.b16 %v684, %v681
        %v727 = vpack.c.b16 %v688, %v685
        %v728 = vpack.c.b16 %v689, %v686
        %v729 = vpack.c.b16 %v690, %v687
        %v730 = vpack.c.b16 %v694, %v691
        %v731 = vpack.c.b16 %v695, %v692
        %v732 = vpack.c.b16 %v696, %v693
        %v733 = vpack.c.b16 %v700, %v697
        %v734 = vpack.c.b16 %v701, %v698
        %v735 = vpack.c.b16 %v702, %v699
        %v736 = vpack.c.b16 %v706, %v703
        %v737 = vpack.c.b16 %v707, %v704
        %v738 = vpack.c.b16 %v708, %v705
        %v739 = vpack.c.b16 %v712, %v709
        %v740 = vpack.c.b16 %v713, %v710
        %v741 = vpack.c.b16 %v714, %v711
        %v742 = vpack.c.b16 %v718, %v715
        %v743 = vpack.c.b16 %v719, %v716
        %v744 = vpack.c.b16 %v720, %v717
        %769 = vmatprep.subr.bf16.mxu0 %v722
        %770 = vmatpush1.bf16.msra.mxu0 %v721
        %771 = vmatprep.subr.bf16.mxu0 %v725
        %772 = vmatpush1.bf16.msra.mxu0 %v724
        %773 = vmatprep.subr.bf16.mxu0 %v728
        %774 = vmatpush1.bf16.msra.mxu0 %v727
        %775 = vmatprep.subr.bf16.mxu0 %v731
        %776 = vmatpush1.bf16.msra.mxu0 %v730
        %777 = vmatprep.subr.bf16.mxu0 %v734
        %778 = vmatpush1.bf16.msra.mxu0 %v733
        %779 = vmatprep.subr.bf16.mxu0 %v737
        %780 = vmatpush1.bf16.msra.mxu0 %v736
        %781 = vmatprep.subr.bf16.mxu0 %v740
        %782 = vmatpush1.bf16.msra.mxu0 %v739
        %783 = vmatprep.subr.bf16.mxu0 %v743
        %784 = vmatpush1.bf16.msra.mxu0 %v742
        %785 = vmatprep.subr.bf16.mxu0 0
        %786 = vmatpush1.bf16.msra.mxu0 0
        %787 = vmatprep.subr.bf16.mxu0 0
        %788 = vmatpush1.bf16.msra.mxu0 0
        %789 = vmatprep.subr.bf16.mxu0 0
        %790 = vmatpush1.bf16.msra.mxu0 0
        %791 = vmatprep.subr.bf16.mxu0 0
        %792 = vmatpush1.bf16.msra.mxu0 0
        %793 = vmatprep.subr.bf16.mxu0 0
        %794 = vmatpush1.bf16.msra.mxu0 0
        %795 = vmatprep.subr.bf16.mxu0 0
        %796 = vmatpush1.bf16.msra.mxu0 0
        %797 = vmatprep.subr.bf16.mxu0 0
        %798 = vmatpush1.bf16.msra.mxu0 0
        %799 = vmatprep.subr.bf16.mxu0 0
        %800 = vmatpush1.bf16.msra.mxu0 0
        %801 = vmatprep.mubr.bf16.mxu0 0
        %802 = vmatmul.mubr.bf16.gmra.mrb[0].mxu0 %v624
        %v803 = vpop.f32.mrb[0].mxu0
        %v804 = vadd.f32 %v629, %v803
        %v805 = vpop.f32.mrb[0].mxu0
        %v806 = vadd.f32 %v633, %v805
        %v807 = vpop.f32.mrb[0].mxu0
        %v808 = vadd.f32 %v629, %v807
        %v809 = vpop.f32.mrb[0].mxu0
        %v810 = vadd.f32 %v633, %v809
        %811 = vdwg.mxu0
        %812 = vmatprep.subr.bf16.mxu0 0
        %813 = vmatpush1.bf16.msra.mxu0 %v723
        %814 = vmatprep.subr.bf16.mxu0 0
        %815 = vmatpush1.bf16.msra.mxu0 %v726
        %816 = vmatprep.subr.bf16.mxu0 0
        %817 = vmatpush1.bf16.msra.mxu0 %v729
        %818 = vmatprep.subr.bf16.mxu0 0
        %819 = vmatpush1.bf16.msra.mxu0 %v732
        %820 = vmatprep.subr.bf16.mxu0 0
        %821 = vmatpush1.bf16.msra.mxu0 %v735
        %822 = vmatprep.subr.bf16.mxu0 0
        %823 = vmatpush1.bf16.msra.mxu0 %v738
        %824 = vmatprep.subr.bf16.mxu0 0
        %825 = vmatpush1.bf16.msra.mxu0 %v741
        %826 = vmatprep.subr.bf16.mxu0 0
        %827 = vmatpush1.bf16.msra.mxu0 %v744
        %828 = vmatprep.subr.bf16.mxu0 0
        %829 = vmatpush1.bf16.msra.mxu0 0
        %830 = vmatprep.subr.bf16.mxu0 0
        %831 = vmatpush1.bf16.msra.mxu0 0
        %832 = vmatprep.subr.bf16.mxu0 0
        %833 = vmatpush1.bf16.msra.mxu0 0
        %834 = vmatprep.subr.bf16.mxu0 0
        %835 = vmatpush1.bf16.msra.mxu0 0
        %836 = vmatprep.subr.bf16.mxu0 0
        %837 = vmatpush1.bf16.msra.mxu0 0
        %838 = vmatprep.subr.bf16.mxu0 0
        %839 = vmatpush1.bf16.msra.mxu0 0
        %840 = vmatprep.subr.bf16.mxu0 0
        %841 = vmatpush1.bf16.msra.mxu0 0
        %842 = vmatprep.subr.bf16.mxu0 0
        %843 = vmatpush1.bf16.msra.mxu0 0
        %844 = vmatprep.mubr.bf16.mxu0 0
        %845 = vmatmul.mubr.bf16.gmra.mrb[0].mxu0 %v624
        %v846 = vpop.f32.mrb[0].mxu0
        %v847 = vadd.f32 %v637, %v846
        %v848 = vpop.f32.mrb[0].mxu0
        %v849 = vpop.f32.mrb[0].mxu0
        %v850 = vadd.f32 %v637, %v849
        %v851 = vpop.f32.mrb[0].mxu0
        %852 = vdwg.mxu0
        %v853 = vmul.f32 %v804, 0.17677669
        %v854 = vmul.f32 %v808, 0.17677669
        %857 = vrot.lane.b32.xlu0 %v853, 96
        %v858 = vpop.permute.xlu0 %857
        %859 = vrot.lane.b32.xlu0 %v854, 96
        %v860 = vpop.permute.xlu0 %859
        %863 = vrot.lane.b32.xlu0 %v853, 64
        %v864 = vpop.permute.xlu0 %863
        %865 = vrot.lane.b32.xlu0 %v854, 64
        %v866 = vpop.permute.xlu0 %865
        %869 = vrot.lane.b32.xlu0 %v853, 32
        %v870 = vpop.permute.xlu0 %869
        %871 = vrot.lane.b32.xlu0 %v854, 32
        %v872 = vpop.permute.xlu0 %871
        %v875 = vcombine.low %v853, %v864
        %v876 = vcombine.high %v853, %v864
        %v878 = vunpack.c.l.s4 1983009808
        %v879 = vunpack.c.0.s8 %v878
        %v880 = vlaneseq
        %v881 = vshrl.u32 %v880, 7
        %v882 = vsub.s32 %v879, %v881
        %v883 = vrot.slane %v875, %v882
        %v885 = vunpack.c.l.s4 1983009808
        %v886 = vunpack.c.0.s8 %v885
        %v887 = vlaneseq
        %v888 = vshrl.u32 %v887, 7
        %v889 = vsub.s32 %v886, %v888
        %v890 = vrot.slane %v876, %v889
        %v891 = vcombine.low %v858, %v870
        %v892 = vcombine.high %v858, %v870
        %v894 = vunpack.c.l.s4 1983009808
        %v895 = vunpack.c.0.s8 %v894
        %v896 = vlaneseq
        %v897 = vshrl.u32 %v896, 7
        %v898 = vsub.s32 %v895, %v897
        %v899 = vrot.slane %v891, %v898
        %v901 = vunpack.c.l.s4 1983009808
        %v902 = vunpack.c.0.s8 %v901
        %v903 = vlaneseq
        %v904 = vshrl.u32 %v903, 7
        %v905 = vsub.s32 %v902, %v904
        %v906 = vrot.slane %v892, %v905
        %v907 = vcombine.low %v883, %v899
        %v908 = vcombine.high %v883, %v899
        %v910 = vunpack.c.l.s4 1934713408
        %v911 = vunpack.c.0.s8 %v910
        %v912 = vlaneseq
        %v913 = vshrl.u32 %v912, 7
        %v914 = vsub.s32 %v911, %v913
        %v915 = vrot.slane %v907, %v914
        %v917 = vunpack.c.l.s4 1934713408
        %v918 = vunpack.c.0.s8 %v917
        %v919 = vlaneseq
        %v920 = vshrl.u32 %v919, 7
        %v921 = vsub.s32 %v918, %v920
        %v922 = vrot.slane %v908, %v921
        %v923 = vcombine.low %v890, %v906
        %v924 = vcombine.high %v890, %v906
        %v926 = vunpack.c.l.s4 1934713408
        %v927 = vunpack.c.0.s8 %v926
        %v928 = vlaneseq
        %v929 = vshrl.u32 %v928, 7
        %v930 = vsub.s32 %v927, %v929
        %v931 = vrot.slane %v923, %v930
        %v933 = vunpack.c.l.s4 1934713408
        %v934 = vunpack.c.0.s8 %v933
        %v935 = vlaneseq
        %v936 = vshrl.u32 %v935, 7
        %v937 = vsub.s32 %v934, %v936
        %v938 = vrot.slane %v924, %v937
        %v939 = vcombine.high %v915, 0.0
        %v940 = vcombine.high %v922, 0.0
        %v941 = vcombine.high %v931, 0.0
        %v942 = vcombine.high %v938, 0.0
        %v943 = vcombine.low %v854, %v866
        %v944 = vcombine.high %v854, %v866
        %v946 = vunpack.c.l.s4 1983009808
        %v947 = vunpack.c.0.s8 %v946
        %v948 = vlaneseq
        %v949 = vshrl.u32 %v948, 7
        %v950 = vsub.s32 %v947, %v949
        %v951 = vrot.slane %v943, %v950
        %v953 = vunpack.c.l.s4 1983009808
        %v954 = vunpack.c.0.s8 %v953
        %v955 = vlaneseq
        %v956 = vshrl.u32 %v955, 7
        %v957 = vsub.s32 %v954, %v956
        %v958 = vrot.slane %v944, %v957
        %v959 = vcombine.low %v860, %v872
        %v960 = vcombine.high %v860, %v872
        %v962 = vunpack.c.l.s4 1983009808
        %v963 = vunpack.c.0.s8 %v962
        %v964 = vlaneseq
        %v965 = vshrl.u32 %v964, 7
        %v966 = vsub.s32 %v963, %v965
        %v967 = vrot.slane %v959, %v966
        %v969 = vunpack.c.l.s4 1983009808
        %v970 = vunpack.c.0.s8 %v969
        %v971 = vlaneseq
        %v972 = vshrl.u32 %v971, 7
        %v973 = vsub.s32 %v970, %v972
        %v974 = vrot.slane %v960, %v973
        %v975 = vcombine.low %v951, %v967
        %v976 = vcombine.high %v951, %v967
        %v978 = vunpack.c.l.s4 1934713408
        %v979 = vunpack.c.0.s8 %v978
        %v980 = vlaneseq
        %v981 = vshrl.u32 %v980, 7
        %v982 = vsub.s32 %v979, %v981
        %v983 = vrot.slane %v975, %v982
        %v985 = vunpack.c.l.s4 1934713408
        %v986 = vunpack.c.0.s8 %v985
        %v987 = vlaneseq
        %v988 = vshrl.u32 %v987, 7
        %v989 = vsub.s32 %v986, %v988
        %v990 = vrot.slane %v976, %v989
        %v991 = vcombine.low %v958, %v974
        %v992 = vcombine.high %v958, %v974
        %v994 = vunpack.c.l.s4 1934713408
        %v995 = vunpack.c.0.s8 %v994
        %v996 = vlaneseq
        %v997 = vshrl.u32 %v996, 7
        %v998 = vsub.s32 %v995, %v997
        %v999 = vrot.slane %v991, %v998
        %v1001 = vunpack.c.l.s4 1934713408
        %v1002 = vunpack.c.0.s8 %v1001
        %v1003 = vlaneseq
        %v1004 = vshrl.u32 %v1003, 7
        %v1005 = vsub.s32 %v1002, %v1004
        %v1006 = vrot.slane %v992, %v1005
        %v1007 = vcombine.high %v983, 0.0
        %v1008 = vcombine.high %v990, 0.0
        %v1009 = vcombine.high %v999, 0.0
        %v1010 = vcombine.high %v1006, 0.0
        %v1011 = vcombine.low %v915, %v922
        %v1013 = vunpack.c.l.s4 1983009808
        %v1014 = vunpack.c.0.s8 %v1013
        %v1015 = vlaneseq
        %v1016 = vshrl.u32 %v1015, 7
        %v1017 = vsub.s32 %v1014, %v1016
        %v1018 = vrot.slane %v1011, %v1017
        %v1019 = vcombine.low %v939, %v940
        %v1021 = vunpack.c.l.s4 1983009808
        %v1022 = vunpack.c.0.s8 %v1021
        %v1023 = vlaneseq
        %v1024 = vshrl.u32 %v1023, 7
        %v1025 = vsub.s32 %v1022, %v1024
        %v1026 = vrot.slane %v1019, %v1025
        %v1027 = vcombine.low %v931, %v938
        %v1029 = vunpack.c.l.s4 1983009808
        %v1030 = vunpack.c.0.s8 %v1029
        %v1031 = vlaneseq
        %v1032 = vshrl.u32 %v1031, 7
        %v1033 = vsub.s32 %v1030, %v1032
        %v1034 = vrot.slane %v1027, %v1033
        %v1035 = vcombine.low %v941, %v942
        %v1037 = vunpack.c.l.s4 1983009808
        %v1038 = vunpack.c.0.s8 %v1037
        %v1039 = vlaneseq
        %v1040 = vshrl.u32 %v1039, 7
        %v1041 = vsub.s32 %v1038, %v1040
        %v1042 = vrot.slane %v1035, %v1041
        %v1043 = vcombine.low %v1018, %v1026
        %v1044 = vcombine.high %v1018, %v1026
        %v1046 = vunpack.c.l.s4 1934713408
        %v1047 = vunpack.c.0.s8 %v1046
        %v1048 = vlaneseq
        %v1049 = vshrl.u32 %v1048, 7
        %v1050 = vsub.s32 %v1047, %v1049
        %v1051 = vrot.slane %v1043, %v1050
        %v1053 = vunpack.c.l.s4 1934713408
        %v1054 = vunpack.c.0.s8 %v1053
        %v1055 = vlaneseq
        %v1056 = vshrl.u32 %v1055, 7
        %v1057 = vsub.s32 %v1054, %v1056
        %v1058 = vrot.slane %v1044, %v1057
        %v1059 = vcombine.low %v1034, %v1042
        %v1060 = vcombine.high %v1034, %v1042
        %v1062 = vunpack.c.l.s4 1934713408
        %v1063 = vunpack.c.0.s8 %v1062
        %v1064 = vlaneseq
        %v1065 = vshrl.u32 %v1064, 7
        %v1066 = vsub.s32 %v1063, %v1065
        %v1067 = vrot.slane %v1059, %v1066
        %v1069 = vunpack.c.l.s4 1934713408
        %v1070 = vunpack.c.0.s8 %v1069
        %v1071 = vlaneseq
        %v1072 = vshrl.u32 %v1071, 7
        %v1073 = vsub.s32 %v1070, %v1072
        %v1074 = vrot.slane %v1060, %v1073
        %v1075 = vcombine.low %v1051, %v1067
        %v1076 = vcombine.high %v1051, %v1067
        %v1077 = vcombine.low %v1058, %v1074
        %v1078 = vcombine.high %v1058, %v1074
        %v1079 = vcombine.low %v983, %v990
        %v1081 = vunpack.c.l.s4 1983009808
        %v1082 = vunpack.c.0.s8 %v1081
        %v1083 = vlaneseq
        %v1084 = vshrl.u32 %v1083, 7
        %v1085 = vsub.s32 %v1082, %v1084
        %v1086 = vrot.slane %v1079, %v1085
        %v1087 = vcombine.low %v1007, %v1008
        %v1089 = vunpack.c.l.s4 1983009808
        %v1090 = vunpack.c.0.s8 %v1089
        %v1091 = vlaneseq
        %v1092 = vshrl.u32 %v1091, 7
        %v1093 = vsub.s32 %v1090, %v1092
        %v1094 = vrot.slane %v1087, %v1093
        %v1095 = vcombine.low %v999, %v1006
        %v1097 = vunpack.c.l.s4 1983009808
        %v1098 = vunpack.c.0.s8 %v1097
        %v1099 = vlaneseq
        %v1100 = vshrl.u32 %v1099, 7
        %v1101 = vsub.s32 %v1098, %v1100
        %v1102 = vrot.slane %v1095, %v1101
        %v1103 = vcombine.low %v1009, %v1010
        %v1105 = vunpack.c.l.s4 1983009808
        %v1106 = vunpack.c.0.s8 %v1105
        %v1107 = vlaneseq
        %v1108 = vshrl.u32 %v1107, 7
        %v1109 = vsub.s32 %v1106, %v1108
        %v1110 = vrot.slane %v1103, %v1109
        %v1111 = vcombine.low %v1086, %v1094
        %v1112 = vcombine.high %v1086, %v1094
        %v1114 = vunpack.c.l.s4 1934713408
        %v1115 = vunpack.c.0.s8 %v1114
        %v1116 = vlaneseq
        %v1117 = vshrl.u32 %v1116, 7
        %v1118 = vsub.s32 %v1115, %v1117
        %v1119 = vrot.slane %v1111, %v1118
        %v1121 = vunpack.c.l.s4 1934713408
        %v1122 = vunpack.c.0.s8 %v1121
        %v1123 = vlaneseq
        %v1124 = vshrl.u32 %v1123, 7
        %v1125 = vsub.s32 %v1122, %v1124
        %v1126 = vrot.slane %v1112, %v1125
        %v1127 = vcombine.low %v1102, %v1110
        %v1128 = vcombine.high %v1102, %v1110
        %v1130 = vunpack.c.l.s4 1934713408
        %v1131 = vunpack.c.0.s8 %v1130
        %v1132 = vlaneseq
        %v1133 = vshrl.u32 %v1132, 7
        %v1134 = vsub.s32 %v1131, %v1133
        %v1135 = vrot.slane %v1127, %v1134
        %v1137 = vunpack.c.l.s4 1934713408
        %v1138 = vunpack.c.0.s8 %v1137
        %v1139 = vlaneseq
        %v1140 = vshrl.u32 %v1139, 7
        %v1141 = vsub.s32 %v1138, %v1140
        %v1142 = vrot.slane %v1128, %v1141
        %v1143 = vcombine.low %v1119, %v1135
        %v1144 = vcombine.high %v1119, %v1135
        %v1145 = vcombine.low %v1126, %v1142
        %v1146 = vcombine.high %v1126, %v1142
        %v1147 = vpack.c.bf16 %v1143, %v1075
        %v1148 = vpack.c.bf16 %v1144, %v1076
        %v1149 = vpack.c.bf16 %v1145, %v1077
        %v1150 = vpack.c.bf16 %v1146, %v1078
        %1153 = vrot.lane.b32.xlu0 %v806, 96
        %v1154 = vpop.permute.xlu0 %1153
        %1155 = vrot.lane.b32.xlu0 %v810, 96
        %v1156 = vpop.permute.xlu0 %1155
        %1159 = vrot.lane.b32.xlu0 %v806, 64
        %v1160 = vpop.permute.xlu0 %1159
        %1161 = vrot.lane.b32.xlu0 %v810, 64
        %v1162 = vpop.permute.xlu0 %1161
        %1165 = vrot.lane.b32.xlu0 %v806, 32
        %v1166 = vpop.permute.xlu0 %1165
        %1167 = vrot.lane.b32.xlu0 %v810, 32
        %v1168 = vpop.permute.xlu0 %1167
        %v1171 = vcombine.low %v806, %v1160
        %v1172 = vcombine.high %v806, %v1160
        %v1174 = vunpack.c.l.s4 1983009808
        %v1175 = vunpack.c.0.s8 %v1174
        %v1176 = vlaneseq
        %v1177 = vshrl.u32 %v1176, 7
        %v1178 = vsub.s32 %v1175, %v1177
        %v1179 = vrot.slane %v1171, %v1178
        %v1181 = vunpack.c.l.s4 1983009808
        %v1182 = vunpack.c.0.s8 %v1181
        %v1183 = vlaneseq
        %v1184 = vshrl.u32 %v1183, 7
        %v1185 = vsub.s32 %v1182, %v1184
        %v1186 = vrot.slane %v1172, %v1185
        %v1187 = vcombine.low %v1154, %v1166
        %v1188 = vcombine.high %v1154, %v1166
        %v1190 = vunpack.c.l.s4 1983009808
        %v1191 = vunpack.c.0.s8 %v1190
        %v1192 = vlaneseq
        %v1193 = vshrl.u32 %v1192, 7
        %v1194 = vsub.s32 %v1191, %v1193
        %v1195 = vrot.slane %v1187, %v1194
        %v1197 = vunpack.c.l.s4 1983009808
        %v1198 = vunpack.c.0.s8 %v1197
        %v1199 = vlaneseq
        %v1200 = vshrl.u32 %v1199, 7
        %v1201 = vsub.s32 %v1198, %v1200
        %v1202 = vrot.slane %v1188, %v1201
        %v1203 = vcombine.low %v1179, %v1195
        %v1204 = vcombine.high %v1179, %v1195
        %v1206 = vunpack.c.l.s4 1934713408
        %v1207 = vunpack.c.0.s8 %v1206
        %v1208 = vlaneseq
        %v1209 = vshrl.u32 %v1208, 7
        %v1210 = vsub.s32 %v1207, %v1209
        %v1211 = vrot.slane %v1203, %v1210
        %v1213 = vunpack.c.l.s4 1934713408
        %v1214 = vunpack.c.0.s8 %v1213
        %v1215 = vlaneseq
        %v1216 = vshrl.u32 %v1215, 7
        %v1217 = vsub.s32 %v1214, %v1216
        %v1218 = vrot.slane %v1204, %v1217
        %v1219 = vcombine.low %v1186, %v1202
        %v1220 = vcombine.high %v1186, %v1202
        %v1222 = vunpack.c.l.s4 1934713408
        %v1223 = vunpack.c.0.s8 %v1222
        %v1224 = vlaneseq
        %v1225 = vshrl.u32 %v1224, 7
        %v1226 = vsub.s32 %v1223, %v1225
        %v1227 = vrot.slane %v1219, %v1226
        %v1229 = vunpack.c.l.s4 1934713408
        %v1230 = vunpack.c.0.s8 %v1229
        %v1231 = vlaneseq
        %v1232 = vshrl.u32 %v1231, 7
        %v1233 = vsub.s32 %v1230, %v1232
        %v1234 = vrot.slane %v1220, %v1233
        %v1235 = vcombine.high %v1211, 0.0
        %v1236 = vcombine.high %v1218, 0.0
        %v1237 = vcombine.high %v1227, 0.0
        %v1238 = vcombine.high %v1234, 0.0
        %v1239 = vcombine.low %v810, %v1162
        %v1240 = vcombine.high %v810, %v1162
        %v1242 = vunpack.c.l.s4 1983009808
        %v1243 = vunpack.c.0.s8 %v1242
        %v1244 = vlaneseq
        %v1245 = vshrl.u32 %v1244, 7
        %v1246 = vsub.s32 %v1243, %v1245
        %v1247 = vrot.slane %v1239, %v1246
        %v1249 = vunpack.c.l.s4 1983009808
        %v1250 = vunpack.c.0.s8 %v1249
        %v1251 = vlaneseq
        %v1252 = vshrl.u32 %v1251, 7
        %v1253 = vsub.s32 %v1250, %v1252
        %v1254 = vrot.slane %v1240, %v1253
        %v1255 = vcombine.low %v1156, %v1168
        %v1256 = vcombine.high %v1156, %v1168
        %v1258 = vunpack.c.l.s4 1983009808
        %v1259 = vunpack.c.0.s8 %v1258
        %v1260 = vlaneseq
        %v1261 = vshrl.u32 %v1260, 7
        %v1262 = vsub.s32 %v1259, %v1261
        %v1263 = vrot.slane %v1255, %v1262
        %v1265 = vunpack.c.l.s4 1983009808
        %v1266 = vunpack.c.0.s8 %v1265
        %v1267 = vlaneseq
        %v1268 = vshrl.u32 %v1267, 7
        %v1269 = vsub.s32 %v1266, %v1268
        %v1270 = vrot.slane %v1256, %v1269
        %v1271 = vcombine.low %v1247, %v1263
        %v1272 = vcombine.high %v1247, %v1263
        %v1274 = vunpack.c.l.s4 1934713408
        %v1275 = vunpack.c.0.s8 %v1274
        %v1276 = vlaneseq
        %v1277 = vshrl.u32 %v1276, 7
        %v1278 = vsub.s32 %v1275, %v1277
        %v1279 = vrot.slane %v1271, %v1278
        %v1281 = vunpack.c.l.s4 1934713408
        %v1282 = vunpack.c.0.s8 %v1281
        %v1283 = vlaneseq
        %v1284 = vshrl.u32 %v1283, 7
        %v1285 = vsub.s32 %v1282, %v1284
        %v1286 = vrot.slane %v1272, %v1285
        %v1287 = vcombine.low %v1254, %v1270
        %v1288 = vcombine.high %v1254, %v1270
        %v1290 = vunpack.c.l.s4 1934713408
        %v1291 = vunpack.c.0.s8 %v1290
        %v1292 = vlaneseq
        %v1293 = vshrl.u32 %v1292, 7
        %v1294 = vsub.s32 %v1291, %v1293
        %v1295 = vrot.slane %v1287, %v1294
        %v1297 = vunpack.c.l.s4 1934713408
        %v1298 = vunpack.c.0.s8 %v1297
        %v1299 = vlaneseq
        %v1300 = vshrl.u32 %v1299, 7
        %v1301 = vsub.s32 %v1298, %v1300
        %v1302 = vrot.slane %v1288, %v1301
        %v1303 = vcombine.high %v1279, 0.0
        %v1304 = vcombine.high %v1286, 0.0
        %v1305 = vcombine.high %v1295, 0.0
        %v1306 = vcombine.high %v1302, 0.0
        %1307 = vxpose.xlu0.b32.start [1/16] %v1211, 128
        %1308 = vxpose.xlu0.b32.cont [2/16] 0.0, 128
        %1309 = vxpose.xlu0.b32.cont [3/16] 0.0, 128
        %1310 = vxpose.xlu0.b32.cont [4/16] 0.0, 128
        %1311 = vxpose.xlu0.b32.cont [5/16] 0.0, 128
        %1312 = vxpose.xlu0.b32.cont [6/16] 0.0, 128
        %1313 = vxpose.xlu0.b32.cont [7/16] 0.0, 128
        %1314 = vxpose.xlu0.b32.cont [8/16] 0.0, 128
        %1315 = vxpose.xlu0.b32.cont [9/16] 0.0, 128
        %1316 = vxpose.xlu0.b32.cont [10/16] 0.0, 128
        %1317 = vxpose.xlu0.b32.cont [11/16] 0.0, 128
        %1318 = vxpose.xlu0.b32.cont [12/16] 0.0, 128
        %1319 = vxpose.xlu0.b32.cont [13/16] 0.0, 128
        %1320 = vxpose.xlu0.b32.cont [14/16] 0.0, 128
        %1321 = vxpose.xlu0.b32.cont [15/16] 0.0, 128
        %1322 = vxpose.xlu0.b32.end [16/16] 0.0, 128
        %v1323 = vpop.trf.xlu0
        %v1324 = vpop.trf.xlu0
        %v1325 = vpop.trf.xlu0
        %v1326 = vpop.trf.xlu0
        %v1327 = vpop.trf.xlu0
        %v1328 = vpop.trf.xlu0
        %v1329 = vpop.trf.xlu0
        %v1330 = vpop.trf.xlu0
        %v1331 = vpop.trf.xlu0
        %v1332 = vpop.trf.xlu0
        %v1333 = vpop.trf.xlu0
        %v1334 = vpop.trf.xlu0
        %v1335 = vpop.trf.xlu0
        %v1336 = vpop.trf.xlu0
        %v1337 = vpop.trf.xlu0
        %v1338 = vpop.trf.xlu0
        %1339 = vxpose.xlu0.b32.start [1/16] %v1235, 128
        %1340 = vxpose.xlu0.b32.cont [2/16] 0.0, 128
        %1341 = vxpose.xlu0.b32.cont [3/16] 0.0, 128
        %1342 = vxpose.xlu0.b32.cont [4/16] 0.0, 128
        %1343 = vxpose.xlu0.b32.cont [5/16] 0.0, 128
        %1344 = vxpose.xlu0.b32.cont [6/16] 0.0, 128
        %1345 = vxpose.xlu0.b32.cont [7/16] 0.0, 128
        %1346 = vxpose.xlu0.b32.cont [8/16] 0.0, 128
        %1347 = vxpose.xlu0.b32.cont [9/16] 0.0, 128
        %1348 = vxpose.xlu0.b32.cont [10/16] 0.0, 128
        %1349 = vxpose.xlu0.b32.cont [11/16] 0.0, 128
        %1350 = vxpose.xlu0.b32.cont [12/16] 0.0, 128
        %1351 = vxpose.xlu0.b32.cont [13/16] 0.0, 128
        %1352 = vxpose.xlu0.b32.cont [14/16] 0.0, 128
        %1353 = vxpose.xlu0.b32.cont [15/16] 0.0, 128
        %1354 = vxpose.xlu0.b32.end [16/16] 0.0, 128
        %v1355 = vpop.trf.xlu0
        %v1356 = vpop.trf.xlu0
        %v1357 = vpop.trf.xlu0
        %v1358 = vpop.trf.xlu0
        %v1359 = vpop.trf.xlu0
        %v1360 = vpop.trf.xlu0
        %v1361 = vpop.trf.xlu0
        %v1362 = vpop.trf.xlu0
        %v1363 = vpop.trf.xlu0
        %v1364 = vpop.trf.xlu0
        %v1365 = vpop.trf.xlu0
        %v1366 = vpop.trf.xlu0
        %v1367 = vpop.trf.xlu0
        %v1368 = vpop.trf.xlu0
        %v1369 = vpop.trf.xlu0
        %v1370 = vpop.trf.xlu0
        %1371 = vxpose.xlu0.b32.start [1/16] %v1218, 128
        %1372 = vxpose.xlu0.b32.cont [2/16] 0.0, 128
        %1373 = vxpose.xlu0.b32.cont [3/16] 0.0, 128
        %1374 = vxpose.xlu0.b32.cont [4/16] 0.0, 128
        %1375 = vxpose.xlu0.b32.cont [5/16] 0.0, 128
        %1376 = vxpose.xlu0.b32.cont [6/16] 0.0, 128
        %1377 = vxpose.xlu0.b32.cont [7/16] 0.0, 128
        %1378 = vxpose.xlu0.b32.cont [8/16] 0.0, 128
        %1379 = vxpose.xlu0.b32.cont [9/16] 0.0, 128
        %1380 = vxpose.xlu0.b32.cont [10/16] 0.0, 128
        %1381 = vxpose.xlu0.b32.cont [11/16] 0.0, 128
        %1382 = vxpose.xlu0.b32.cont [12/16] 0.0, 128
        %1383 = vxpose.xlu0.b32.cont [13/16] 0.0, 128
        %1384 = vxpose.xlu0.b32.cont [14/16] 0.0, 128
        %1385 = vxpose.xlu0.b32.cont [15/16] 0.0, 128
        %1386 = vxpose.xlu0.b32.end [16/16] 0.0, 128
        %v1387 = vpop.trf.xlu0
        %v1388 = vpop.trf.xlu0
        %v1389 = vpop.trf.xlu0
        %v1390 = vpop.trf.xlu0
        %v1391 = vpop.trf.xlu0
        %v1392 = vpop.trf.xlu0
        %v1393 = vpop.trf.xlu0
        %v1394 = vpop.trf.xlu0
        %v1395 = vpop.trf.xlu0
        %v1396 = vpop.trf.xlu0
        %v1397 = vpop.trf.xlu0
        %v1398 = vpop.trf.xlu0
        %v1399 = vpop.trf.xlu0
        %v1400 = vpop.trf.xlu0
        %v1401 = vpop.trf.xlu0
        %v1402 = vpop.trf.xlu0
        %1403 = vxpose.xlu0.b32.start [1/16] %v1236, 128
        %1404 = vxpose.xlu0.b32.cont [2/16] 0.0, 128
        %1405 = vxpose.xlu0.b32.cont [3/16] 0.0, 128
        %1406 = vxpose.xlu0.b32.cont [4/16] 0.0, 128
        %1407 = vxpose.xlu0.b32.cont [5/16] 0.0, 128
        %1408 = vxpose.xlu0.b32.cont [6/16] 0.0, 128
        %1409 = vxpose.xlu0.b32.cont [7/16] 0.0, 128
        %1410 = vxpose.xlu0.b32.cont [8/16] 0.0, 128
        %1411 = vxpose.xlu0.b32.cont [9/16] 0.0, 128
        %1412 = vxpose.xlu0.b32.cont [10/16] 0.0, 128
        %1413 = vxpose.xlu0.b32.cont [11/16] 0.0, 128
        %1414 = vxpose.xlu0.b32.cont [12/16] 0.0, 128
        %1415 = vxpose.xlu0.b32.cont [13/16] 0.0, 128
        %1416 = vxpose.xlu0.b32.cont [14/16] 0.0, 128
        %1417 = vxpose.xlu0.b32.cont [15/16] 0.0, 128
        %1418 = vxpose.xlu0.b32.end [16/16] 0.0, 128
        %v1419 = vpop.trf.xlu0
        %v1420 = vpop.trf.xlu0
        %v1421 = vpop.trf.xlu0
        %v1422 = vpop.trf.xlu0
        %v1423 = vpop.trf.xlu0
        %v1424 = vpop.trf.xlu0
        %v1425 = vpop.trf.xlu0
        %v1426 = vpop.trf.xlu0
        %v1427 = vpop.trf.xlu0
        %v1428 = vpop.trf.xlu0
        %v1429 = vpop.trf.xlu0
        %v1430 = vpop.trf.xlu0
        %v1431 = vpop.trf.xlu0
        %v1432 = vpop.trf.xlu0
        %v1433 = vpop.trf.xlu0
        %v1434 = vpop.trf.xlu0
        %1435 = vxpose.xlu0.b32.start [1/16] %v1227, 128
        %1436 = vxpose.xlu0.b32.cont [2/16] 0.0, 128
        %1437 = vxpose.xlu0.b32.cont [3/16] 0.0, 128
        %1438 = vxpose.xlu0.b32.cont [4/16] 0.0, 128
        %1439 = vxpose.xlu0.b32.cont [5/16] 0.0, 128
        %1440 = vxpose.xlu0.b32.cont [6/16] 0.0, 128
        %1441 = vxpose.xlu0.b32.cont [7/16] 0.0, 128
        %1442 = vxpose.xlu0.b32.cont [8/16] 0.0, 128
        %1443 = vxpose.xlu0.b32.cont [9/16] 0.0, 128
        %1444 = vxpose.xlu0.b32.cont [10/16] 0.0, 128
        %1445 = vxpose.xlu0.b32.cont [11/16] 0.0, 128
        %1446 = vxpose.xlu0.b32.cont [12/16] 0.0, 128
        %1447 = vxpose.xlu0.b32.cont [13/16] 0.0, 128
        %1448 = vxpose.xlu0.b32.cont [14/16] 0.0, 128
        %1449 = vxpose.xlu0.b32.cont [15/16] 0.0, 128
        %1450 = vxpose.xlu0.b32.end [16/16] 0.0, 128
        %v1451 = vpop.trf.xlu0
        %v1452 = vpop.trf.xlu0
        %v1453 = vpop.trf.xlu0
        %v1454 = vpop.trf.xlu0
        %v1455 = vpop.trf.xlu0
        %v1456 = vpop.trf.xlu0
        %v1457 = vpop.trf.xlu0
        %v1458 = vpop.trf.xlu0
        %v1459 = vpop.trf.xlu0
        %v1460 = vpop.trf.xlu0
        %v1461 = vpop.trf.xlu0
        %v1462 = vpop.trf.xlu0
        %v1463 = vpop.trf.xlu0
        %v1464 = vpop.trf.xlu0
        %v1465 = vpop.trf.xlu0
        %v1466 = vpop.trf.xlu0
        %1467 = vxpose.xlu0.b32.start [1/16] %v1237, 128
        %1468 = vxpose.xlu0.b32.cont [2/16] 0.0, 128
        %1469 = vxpose.xlu0.b32.cont [3/16] 0.0, 128
        %1470 = vxpose.xlu0.b32.cont [4/16] 0.0, 128
        %1471 = vxpose.xlu0.b32.cont [5/16] 0.0, 128
        %1472 = vxpose.xlu0.b32.cont [6/16] 0.0, 128
        %1473 = vxpose.xlu0.b32.cont [7/16] 0.0, 128
        %1474 = vxpose.xlu0.b32.cont [8/16] 0.0, 128
        %1475 = vxpose.xlu0.b32.cont [9/16] 0.0, 128
        %1476 = vxpose.xlu0.b32.cont [10/16] 0.0, 128
        %1477 = vxpose.xlu0.b32.cont [11/16] 0.0, 128
        %1478 = vxpose.xlu0.b32.cont [12/16] 0.0, 128
        %1479 = vxpose.xlu0.b32.cont [13/16] 0.0, 128
        %1480 = vxpose.xlu0.b32.cont [14/16] 0.0, 128
        %1481 = vxpose.xlu0.b32.cont [15/16] 0.0, 128
        %1482 = vxpose.xlu0.b32.end [16/16] 0.0, 128
        %v1483 = vpop.trf.xlu0
        %v1484 = vpop.trf.xlu0
        %v1485 = vpop.trf.xlu0
        %v1486 = vpop.trf.xlu0
        %v1487 = vpop.trf.xlu0
        %v1488 = vpop.trf.xlu0
        %v1489 = vpop.trf.xlu0
        %v1490 = vpop.trf.xlu0
        %v1491 = vpop.trf.xlu0
        %v1492 = vpop.trf.xlu0
        %v1493 = vpop.trf.xlu0
        %v1494 = vpop.trf.xlu0
        %v1495 = vpop.trf.xlu0
        %v1496 = vpop.trf.xlu0
        %v1497 = vpop.trf.xlu0
        %v1498 = vpop.trf.xlu0
        %1499 = vxpose.xlu0.b32.start [1/16] %v1234, 128
        %1500 = vxpose.xlu0.b32.cont [2/16] 0.0, 128
        %1501 = vxpose.xlu0.b32.cont [3/16] 0.0, 128
        %1502 = vxpose.xlu0.b32.cont [4/16] 0.0, 128
        %1503 = vxpose.xlu0.b32.cont [5/16] 0.0, 128
        %1504 = vxpose.xlu0.b32.cont [6/16] 0.0, 128
        %1505 = vxpose.xlu0.b32.cont [7/16] 0.0, 128
        %1506 = vxpose.xlu0.b32.cont [8/16] 0.0, 128
        %1507 = vxpose.xlu0.b32.cont [9/16] 0.0, 128
        %1508 = vxpose.xlu0.b32.cont [10/16] 0.0, 128
        %1509 = vxpose.xlu0.b32.cont [11/16] 0.0, 128
        %1510 = vxpose.xlu0.b32.cont [12/16] 0.0, 128
        %1511 = vxpose.xlu0.b32.cont [13/16] 0.0, 128
        %1512 = vxpose.xlu0.b32.cont [14/16] 0.0, 128
        %1513 = vxpose.xlu0.b32.cont [15/16] 0.0, 128
        %1514 = vxpose.xlu0.b32.end [16/16] 0.0, 128
        %v1515 = vpop.trf.xlu0
        %v1516 = vpop.trf.xlu0
        %v1517 = vpop.trf.xlu0
        %v1518 = vpop.trf.xlu0
        %v1519 = vpop.trf.xlu0
        %v1520 = vpop.trf.xlu0
        %v1521 = vpop.trf.xlu0
        %v1522 = vpop.trf.xlu0
        %v1523 = vpop.trf.xlu0
        %v1524 = vpop.trf.xlu0
        %v1525 = vpop.trf.xlu0
        %v1526 = vpop.trf.xlu0
        %v1527 = vpop.trf.xlu0
        %v1528 = vpop.trf.xlu0
        %v1529 = vpop.trf.xlu0
        %v1530 = vpop.trf.xlu0
        %1531 = vxpose.xlu0.b32.start [1/16] %v1238, 128
        %1532 = vxpose.xlu0.b32.cont [2/16] 0.0, 128
        %1533 = vxpose.xlu0.b32.cont [3/16] 0.0, 128
        %1534 = vxpose.xlu0.b32.cont [4/16] 0.0, 128
        %1535 = vxpose.xlu0.b32.cont [5/16] 0.0, 128
        %1536 = vxpose.xlu0.b32.cont [6/16] 0.0, 128
        %1537 = vxpose.xlu0.b32.cont [7/16] 0.0, 128
        %1538 = vxpose.xlu0.b32.cont [8/16] 0.0, 128
        %1539 = vxpose.xlu0.b32.cont [9/16] 0.0, 128
        %1540 = vxpose.xlu0.b32.cont [10/16] 0.0, 128
        %1541 = vxpose.xlu0.b32.cont [11/16] 0.0, 128
        %1542 = vxpose.xlu0.b32.cont [12/16] 0.0, 128
        %1543 = vxpose.xlu0.b32.cont [13/16] 0.0, 128
        %1544 = vxpose.xlu0.b32.cont [14/16] 0.0, 128
        %1545 = vxpose.xlu0.b32.cont [15/16] 0.0, 128
        %1546 = vxpose.xlu0.b32.end [16/16] 0.0, 128
        %v1547 = vpop.trf.xlu0
        %v1548 = vpop.trf.xlu0
        %v1549 = vpop.trf.xlu0
        %v1550 = vpop.trf.xlu0
        %v1551 = vpop.trf.xlu0
        %v1552 = vpop.trf.xlu0
        %v1553 = vpop.trf.xlu0
        %v1554 = vpop.trf.xlu0
        %v1555 = vpop.trf.xlu0
        %v1556 = vpop.trf.xlu0
        %v1557 = vpop.trf.xlu0
        %v1558 = vpop.trf.xlu0
        %v1559 = vpop.trf.xlu0
        %v1560 = vpop.trf.xlu0
        %v1561 = vpop.trf.xlu0
        %v1562 = vpop.trf.xlu0
        %1563 = vxpose.xlu0.b32.start [1/16] %v1279, 128
        %1564 = vxpose.xlu0.b32.cont [2/16] 0.0, 128
        %1565 = vxpose.xlu0.b32.cont [3/16] 0.0, 128
        %1566 = vxpose.xlu0.b32.cont [4/16] 0.0, 128
        %1567 = vxpose.xlu0.b32.cont [5/16] 0.0, 128
        %1568 = vxpose.xlu0.b32.cont [6/16] 0.0, 128
        %1569 = vxpose.xlu0.b32.cont [7/16] 0.0, 128
        %1570 = vxpose.xlu0.b32.cont [8/16] 0.0, 128
        %1571 = vxpose.xlu0.b32.cont [9/16] 0.0, 128
        %1572 = vxpose.xlu0.b32.cont [10/16] 0.0, 128
        %1573 = vxpose.xlu0.b32.cont [11/16] 0.0, 128
        %1574 = vxpose.xlu0.b32.cont [12/16] 0.0, 128
        %1575 = vxpose.xlu0.b32.cont [13/16] 0.0, 128
        %1576 = vxpose.xlu0.b32.cont [14/16] 0.0, 128
        %1577 = vxpose.xlu0.b32.cont [15/16] 0.0, 128
        %1578 = vxpose.xlu0.b32.end [16/16] 0.0, 128
        %v1579 = vpop.trf.xlu0
        %v1580 = vpop.trf.xlu0
        %v1581 = vpop.trf.xlu0
        %v1582 = vpop.trf.xlu0
        %v1583 = vpop.trf.xlu0
        %v1584 = vpop.trf.xlu0
        %v1585 = vpop.trf.xlu0
        %v1586 = vpop.trf.xlu0
        %v1587 = vpop.trf.xlu0
        %v1588 = vpop.trf.xlu0
        %v1589 = vpop.trf.xlu0
        %v1590 = vpop.trf.xlu0
        %v1591 = vpop.trf.xlu0
        %v1592 = vpop.trf.xlu0
        %v1593 = vpop.trf.xlu0
        %v1594 = vpop.trf.xlu0
        %1595 = vxpose.xlu0.b32.start [1/16] %v1303, 128
        %1596 = vxpose.xlu0.b32.cont [2/16] 0.0, 128
        %1597 = vxpose.xlu0.b32.cont [3/16] 0.0, 128
        %1598 = vxpose.xlu0.b32.cont [4/16] 0.0, 128
        %1599 = vxpose.xlu0.b32.cont [5/16] 0.0, 128
        %1600 = vxpose.xlu0.b32.cont [6/16] 0.0, 128
        %1601 = vxpose.xlu0.b32.cont [7/16] 0.0, 128
        %1602 = vxpose.xlu0.b32.cont [8/16] 0.0, 128
        %1603 = vxpose.xlu0.b32.cont [9/16] 0.0, 128
        %1604 = vxpose.xlu0.b32.cont [10/16] 0.0, 128
        %1605 = vxpose.xlu0.b32.cont [11/16] 0.0, 128
        %1606 = vxpose.xlu0.b32.cont [12/16] 0.0, 128
        %1607 = vxpose.xlu0.b32.cont [13/16] 0.0, 128
        %1608 = vxpose.xlu0.b32.cont [14/16] 0.0, 128
        %1609 = vxpose.xlu0.b32.cont [15/16] 0.0, 128
        %1610 = vxpose.xlu0.b32.end [16/16] 0.0, 128
        %v1611 = vpop.trf.xlu0
        %v1612 = vpop.trf.xlu0
        %v1613 = vpop.trf.xlu0
        %v1614 = vpop.trf.xlu0
        %v1615 = vpop.trf.xlu0
        %v1616 = vpop.trf.xlu0
        %v1617 = vpop.trf.xlu0
        %v1618 = vpop.trf.xlu0
        %v1619 = vpop.trf.xlu0
        %v1620 = vpop.trf.xlu0
        %v1621 = vpop.trf.xlu0
        %v1622 = vpop.trf.xlu0
        %v1623 = vpop.trf.xlu0
        %v1624 = vpop.trf.xlu0
        %v1625 = vpop.trf.xlu0
        %v1626 = vpop.trf.xlu0
        %1627 = vxpose.xlu0.b32.start [1/16] %v1286, 128
        %1628 = vxpose.xlu0.b32.cont [2/16] 0.0, 128
        %1629 = vxpose.xlu0.b32.cont [3/16] 0.0, 128
        %1630 = vxpose.xlu0.b32.cont [4/16] 0.0, 128
        %1631 = vxpose.xlu0.b32.cont [5/16] 0.0, 128
        %1632 = vxpose.xlu0.b32.cont [6/16] 0.0, 128
        %1633 = vxpose.xlu0.b32.cont [7/16] 0.0, 128
        %1634 = vxpose.xlu0.b32.cont [8/16] 0.0, 128
        %1635 = vxpose.xlu0.b32.cont [9/16] 0.0, 128
        %1636 = vxpose.xlu0.b32.cont [10/16] 0.0, 128
        %1637 = vxpose.xlu0.b32.cont [11/16] 0.0, 128
        %1638 = vxpose.xlu0.b32.cont [12/16] 0.0, 128
        %1639 = vxpose.xlu0.b32.cont [13/16] 0.0, 128
        %1640 = vxpose.xlu0.b32.cont [14/16] 0.0, 128
        %1641 = vxpose.xlu0.b32.cont [15/16] 0.0, 128
        %1642 = vxpose.xlu0.b32.end [16/16] 0.0, 128
        %v1643 = vpop.trf.xlu0
        %v1644 = vpop.trf.xlu0
        %v1645 = vpop.trf.xlu0
        %v1646 = vpop.trf.xlu0
        %v1647 = vpop.trf.xlu0
        %v1648 = vpop.trf.xlu0
        %v1649 = vpop.trf.xlu0
        %v1650 = vpop.trf.xlu0
        %v1651 = vpop.trf.xlu0
        %v1652 = vpop.trf.xlu0
        %v1653 = vpop.trf.xlu0
        %v1654 = vpop.trf.xlu0
        %v1655 = vpop.trf.xlu0
        %v1656 = vpop.trf.xlu0
        %v1657 = vpop.trf.xlu0
        %v1658 = vpop.trf.xlu0
        %1659 = vxpose.xlu0.b32.start [1/16] %v1304, 128
        %1660 = vxpose.xlu0.b32.cont [2/16] 0.0, 128
        %1661 = vxpose.xlu0.b32.cont [3/16] 0.0, 128
        %1662 = vxpose.xlu0.b32.cont [4/16] 0.0, 128
        %1663 = vxpose.xlu0.b32.cont [5/16] 0.0, 128
        %1664 = vxpose.xlu0.b32.cont [6/16] 0.0, 128
        %1665 = vxpose.xlu0.b32.cont [7/16] 0.0, 128
        %1666 = vxpose.xlu0.b32.cont [8/16] 0.0, 128
        %1667 = vxpose.xlu0.b32.cont [9/16] 0.0, 128
        %1668 = vxpose.xlu0.b32.cont [10/16] 0.0, 128
        %1669 = vxpose.xlu0.b32.cont [11/16] 0.0, 128
        %1670 = vxpose.xlu0.b32.cont [12/16] 0.0, 128
        %1671 = vxpose.xlu0.b32.cont [13/16] 0.0, 128
        %1672 = vxpose.xlu0.b32.cont [14/16] 0.0, 128
        %1673 = vxpose.xlu0.b32.cont [15/16] 0.0, 128
        %1674 = vxpose.xlu0.b32.end [16/16] 0.0, 128
        %v1675 = vpop.trf.xlu0
        %v1676 = vpop.trf.xlu0
        %v1677 = vpop.trf.xlu0
        %v1678 = vpop.trf.xlu0
        %v1679 = vpop.trf.xlu0
        %v1680 = vpop.trf.xlu0
        %v1681 = vpop.trf.xlu0
        %v1682 = vpop.trf.xlu0
        %v1683 = vpop.trf.xlu0
        %v1684 = vpop.trf.xlu0
        %v1685 = vpop.trf.xlu0
        %v1686 = vpop.trf.xlu0
        %v1687 = vpop.trf.xlu0
        %v1688 = vpop.trf.xlu0
        %v1689 = vpop.trf.xlu0
        %v1690 = vpop.trf.xlu0
        %1691 = vxpose.xlu0.b32.start [1/16] %v1295, 128
        %1692 = vxpose.xlu0.b32.cont [2/16] 0.0, 128
        %1693 = vxpose.xlu0.b32.cont [3/16] 0.0, 128
        %1694 = vxpose.xlu0.b32.cont [4/16] 0.0, 128
        %1695 = vxpose.xlu0.b32.cont [5/16] 0.0, 128
        %1696 = vxpose.xlu0.b32.cont [6/16] 0.0, 128
        %1697 = vxpose.xlu0.b32.cont [7/16] 0.0, 128
        %1698 = vxpose.xlu0.b32.cont [8/16] 0.0, 128
        %1699 = vxpose.xlu0.b32.cont [9/16] 0.0, 128
        %1700 = vxpose.xlu0.b32.cont [10/16] 0.0, 128
        %1701 = vxpose.xlu0.b32.cont [11/16] 0.0, 128
        %1702 = vxpose.xlu0.b32.cont [12/16] 0.0, 128
        %1703 = vxpose.xlu0.b32.cont [13/16] 0.0, 128
        %1704 = vxpose.xlu0.b32.cont [14/16] 0.0, 128
        %1705 = vxpose.xlu0.b32.cont [15/16] 0.0, 128
        %1706 = vxpose.xlu0.b32.end [16/16] 0.0, 128
        %v1707 = vpop.trf.xlu0
        %v1708 = vpop.trf.xlu0
        %v1709 = vpop.trf.xlu0
        %v1710 = vpop.trf.xlu0
        %v1711 = vpop.trf.xlu0
        %v1712 = vpop.trf.xlu0
        %v1713 = vpop.trf.xlu0
        %v1714 = vpop.trf.xlu0
        %v1715 = vpop.trf.xlu0
        %v1716 = vpop.trf.xlu0
        %v1717 = vpop.trf.xlu0
        %v1718 = vpop.trf.xlu0
        %v1719 = vpop.trf.xlu0
        %v1720 = vpop.trf.xlu0
        %v1721 = vpop.trf.xlu0
        %v1722 = vpop.trf.xlu0
        %1723 = vxpose.xlu0.b32.start [1/16] %v1305, 128
        %1724 = vxpose.xlu0.b32.cont [2/16] 0.0, 128
        %1725 = vxpose.xlu0.b32.cont [3/16] 0.0, 128
        %1726 = vxpose.xlu0.b32.cont [4/16] 0.0, 128
        %1727 = vxpose.xlu0.b32.cont [5/16] 0.0, 128
        %1728 = vxpose.xlu0.b32.cont [6/16] 0.0, 128
        %1729 = vxpose.xlu0.b32.cont [7/16] 0.0, 128
        %1730 = vxpose.xlu0.b32.cont [8/16] 0.0, 128
        %1731 = vxpose.xlu0.b32.cont [9/16] 0.0, 128
        %1732 = vxpose.xlu0.b32.cont [10/16] 0.0, 128
        %1733 = vxpose.xlu0.b32.cont [11/16] 0.0, 128
        %1734 = vxpose.xlu0.b32.cont [12/16] 0.0, 128
        %1735 = vxpose.xlu0.b32.cont [13/16] 0.0, 128
        %1736 = vxpose.xlu0.b32.cont [14/16] 0.0, 128
        %1737 = vxpose.xlu0.b32.cont [15/16] 0.0, 128
        %1738 = vxpose.xlu0.b32.end [16/16] 0.0, 128
        %v1739 = vpop.trf.xlu0
        %v1740 = vpop.trf.xlu0
        %v1741 = vpop.trf.xlu0
        %v1742 = vpop.trf.xlu0
        %v1743 = vpop.trf.xlu0
        %v1744 = vpop.trf.xlu0
        %v1745 = vpop.trf.xlu0
        %v1746 = vpop.trf.xlu0
        %v1747 = vpop.trf.xlu0
        %v1748 = vpop.trf.xlu0
        %v1749 = vpop.trf.xlu0
        %v1750 = vpop.trf.xlu0
        %v1751 = vpop.trf.xlu0
        %v1752 = vpop.trf.xlu0
        %v1753 = vpop.trf.xlu0
        %v1754 = vpop.trf.xlu0
        %1755 = vxpose.xlu0.b32.start [1/16] %v1302, 128
        %1756 = vxpose.xlu0.b32.cont [2/16] 0.0, 128
        %1757 = vxpose.xlu0.b32.cont [3/16] 0.0, 128
        %1758 = vxpose.xlu0.b32.cont [4/16] 0.0, 128
        %1759 = vxpose.xlu0.b32.cont [5/16] 0.0, 128
        %1760 = vxpose.xlu0.b32.cont [6/16] 0.0, 128
        %1761 = vxpose.xlu0.b32.cont [7/16] 0.0, 128
        %1762 = vxpose.xlu0.b32.cont [8/16] 0.0, 128
        %1763 = vxpose.xlu0.b32.cont [9/16] 0.0, 128
        %1764 = vxpose.xlu0.b32.cont [10/16] 0.0, 128
        %1765 = vxpose.xlu0.b32.cont [11/16] 0.0, 128
        %1766 = vxpose.xlu0.b32.cont [12/16] 0.0, 128
        %1767 = vxpose.xlu0.b32.cont [13/16] 0.0, 128
        %1768 = vxpose.xlu0.b32.cont [14/16] 0.0, 128
        %1769 = vxpose.xlu0.b32.cont [15/16] 0.0, 128
        %1770 = vxpose.xlu0.b32.end [16/16] 0.0, 128
        %v1771 = vpop.trf.xlu0
        %v1772 = vpop.trf.xlu0
        %v1773 = vpop.trf.xlu0
        %v1774 = vpop.trf.xlu0
        %v1775 = vpop.trf.xlu0
        %v1776 = vpop.trf.xlu0
        %v1777 = vpop.trf.xlu0
        %v1778 = vpop.trf.xlu0
        %v1779 = vpop.trf.xlu0
        %v1780 = vpop.trf.xlu0
        %v1781 = vpop.trf.xlu0
        %v1782 = vpop.trf.xlu0
        %v1783 = vpop.trf.xlu0
        %v1784 = vpop.trf.xlu0
        %v1785 = vpop.trf.xlu0
        %v1786 = vpop.trf.xlu0
        %1787 = vxpose.xlu0.b32.start [1/16] %v1306, 128
        %1788 = vxpose.xlu0.b32.cont [2/16] 0.0, 128
        %1789 = vxpose.xlu0.b32.cont [3/16] 0.0, 128
        %1790 = vxpose.xlu0.b32.cont [4/16] 0.0, 128
        %1791 = vxpose.xlu0.b32.cont [5/16] 0.0, 128
        %1792 = vxpose.xlu0.b32.cont [6/16] 0.0, 128
        %1793 = vxpose.xlu0.b32.cont [7/16] 0.0, 128
        %1794 = vxpose.xlu0.b32.cont [8/16] 0.0, 128
        %1795 = vxpose.xlu0.b32.cont [9/16] 0.0, 128
        %1796 = vxpose.xlu0.b32.cont [10/16] 0.0, 128
        %1797 = vxpose.xlu0.b32.cont [11/16] 0.0, 128
        %1798 = vxpose.xlu0.b32.cont [12/16] 0.0, 128
        %1799 = vxpose.xlu0.b32.cont [13/16] 0.0, 128
        %1800 = vxpose.xlu0.b32.cont [14/16] 0.0, 128
        %1801 = vxpose.xlu0.b32.cont [15/16] 0.0, 128
        %1802 = vxpose.xlu0.b32.end [16/16] 0.0, 128
        %v1803 = vpop.trf.xlu0
        %v1804 = vpop.trf.xlu0
        %v1805 = vpop.trf.xlu0
        %v1806 = vpop.trf.xlu0
        %v1807 = vpop.trf.xlu0
        %v1808 = vpop.trf.xlu0
        %v1809 = vpop.trf.xlu0
        %v1810 = vpop.trf.xlu0
        %v1811 = vpop.trf.xlu0
        %v1812 = vpop.trf.xlu0
        %v1813 = vpop.trf.xlu0
        %v1814 = vpop.trf.xlu0
        %v1815 = vpop.trf.xlu0
        %v1816 = vpop.trf.xlu0
        %v1817 = vpop.trf.xlu0
        %v1818 = vpop.trf.xlu0
        %v1819 = vcombine.low %v1323, %v1387
        %v1820 = vcombine.high %v1323, %v1387
        %v1822 = vunpack.c.l.s4 1983009808
        %v1823 = vunpack.c.0.s8 %v1822
        %v1824 = vlaneseq
        %v1825 = vshrl.u32 %v1824, 7
        %v1826 = vsub.s32 %v1823, %v1825
        %v1827 = vrot.slane %v1819, %v1826
        %v1829 = vunpack.c.l.s4 1983009808
        %v1830 = vunpack.c.0.s8 %v1829
        %v1831 = vlaneseq
        %v1832 = vshrl.u32 %v1831, 7
        %v1833 = vsub.s32 %v1830, %v1832
        %v1834 = vrot.slane %v1820, %v1833
        %v1835 = vcombine.low %v1355, %v1419
        %v1836 = vcombine.high %v1355, %v1419
        %v1838 = vunpack.c.l.s4 1983009808
        %v1839 = vunpack.c.0.s8 %v1838
        %v1840 = vlaneseq
        %v1841 = vshrl.u32 %v1840, 7
        %v1842 = vsub.s32 %v1839, %v1841
        %v1843 = vrot.slane %v1835, %v1842
        %v1845 = vunpack.c.l.s4 1983009808
        %v1846 = vunpack.c.0.s8 %v1845
        %v1847 = vlaneseq
        %v1848 = vshrl.u32 %v1847, 7
        %v1849 = vsub.s32 %v1846, %v1848
        %v1850 = vrot.slane %v1836, %v1849
        %v1851 = vcombine.low %v1451, %v1515
        %v1852 = vcombine.high %v1451, %v1515
        %v1854 = vunpack.c.l.s4 1983009808
        %v1855 = vunpack.c.0.s8 %v1854
        %v1856 = vlaneseq
        %v1857 = vshrl.u32 %v1856, 7
        %v1858 = vsub.s32 %v1855, %v1857
        %v1859 = vrot.slane %v1851, %v1858
        %v1861 = vunpack.c.l.s4 1983009808
        %v1862 = vunpack.c.0.s8 %v1861
        %v1863 = vlaneseq
        %v1864 = vshrl.u32 %v1863, 7
        %v1865 = vsub.s32 %v1862, %v1864
        %v1866 = vrot.slane %v1852, %v1865
        %v1867 = vcombine.low %v1483, %v1547
        %v1868 = vcombine.high %v1483, %v1547
        %v1870 = vunpack.c.l.s4 1983009808
        %v1871 = vunpack.c.0.s8 %v1870
        %v1872 = vlaneseq
        %v1873 = vshrl.u32 %v1872, 7
        %v1874 = vsub.s32 %v1871, %v1873
        %v1875 = vrot.slane %v1867, %v1874
        %v1877 = vunpack.c.l.s4 1983009808
        %v1878 = vunpack.c.0.s8 %v1877
        %v1879 = vlaneseq
        %v1880 = vshrl.u32 %v1879, 7
        %v1881 = vsub.s32 %v1878, %v1880
        %v1882 = vrot.slane %v1868, %v1881
        %v1883 = vcombine.low %v1827, %v1843
        %v1884 = vcombine.high %v1827, %v1843
        %v1886 = vunpack.c.l.s4 1934713408
        %v1887 = vunpack.c.0.s8 %v1886
        %v1888 = vlaneseq
        %v1889 = vshrl.u32 %v1888, 7
        %v1890 = vsub.s32 %v1887, %v1889
        %v1891 = vrot.slane %v1883, %v1890
        %v1893 = vunpack.c.l.s4 1934713408
        %v1894 = vunpack.c.0.s8 %v1893
        %v1895 = vlaneseq
        %v1896 = vshrl.u32 %v1895, 7
        %v1897 = vsub.s32 %v1894, %v1896
        %v1898 = vrot.slane %v1884, %v1897
        %v1899 = vcombine.low %v1834, %v1850
        %v1900 = vcombine.high %v1834, %v1850
        %v1902 = vunpack.c.l.s4 1934713408
        %v1903 = vunpack.c.0.s8 %v1902
        %v1904 = vlaneseq
        %v1905 = vshrl.u32 %v1904, 7
        %v1906 = vsub.s32 %v1903, %v1905
        %v1907 = vrot.slane %v1899, %v1906
        %v1909 = vunpack.c.l.s4 1934713408
        %v1910 = vunpack.c.0.s8 %v1909
        %v1911 = vlaneseq
        %v1912 = vshrl.u32 %v1911, 7
        %v1913 = vsub.s32 %v1910, %v1912
        %v1914 = vrot.slane %v1900, %v1913
        %v1915 = vcombine.low %v1859, %v1875
        %v1916 = vcombine.high %v1859, %v1875
        %v1918 = vunpack.c.l.s4 1934713408
        %v1919 = vunpack.c.0.s8 %v1918
        %v1920 = vlaneseq
        %v1921 = vshrl.u32 %v1920, 7
        %v1922 = vsub.s32 %v1919, %v1921
        %v1923 = vrot.slane %v1915, %v1922
        %v1925 = vunpack.c.l.s4 1934713408
        %v1926 = vunpack.c.0.s8 %v1925
        %v1927 = vlaneseq
        %v1928 = vshrl.u32 %v1927, 7
        %v1929 = vsub.s32 %v1926, %v1928
        %v1930 = vrot.slane %v1916, %v1929
        %v1931 = vcombine.low %v1866, %v1882
        %v1932 = vcombine.high %v1866, %v1882
        %v1934 = vunpack.c.l.s4 1934713408
        %v1935 = vunpack.c.0.s8 %v1934
        %v1936 = vlaneseq
        %v1937 = vshrl.u32 %v1936, 7
        %v1938 = vsub.s32 %v1935, %v1937
        %v1939 = vrot.slane %v1931, %v1938
        %v1941 = vunpack.c.l.s4 1934713408
        %v1942 = vunpack.c.0.s8 %v1941
        %v1943 = vlaneseq
        %v1944 = vshrl.u32 %v1943, 7
        %v1945 = vsub.s32 %v1942, %v1944
        %v1946 = vrot.slane %v1932, %v1945
        %v1947 = vcombine.low %v1891, %v1923
        %v1948 = vcombine.high %v1891, %v1923
        %v1949 = vcombine.low %v1898, %v1930
        %v1950 = vcombine.high %v1898, %v1930
        %v1951 = vcombine.low %v1907, %v1939
        %v1952 = vcombine.high %v1907, %v1939
        %v1953 = vcombine.low %v1914, %v1946
        %v1954 = vcombine.high %v1914, %v1946
        %v1955 = vcombine.low %v1579, %v1643
        %v1956 = vcombine.high %v1579, %v1643
        %v1958 = vunpack.c.l.s4 1983009808
        %v1959 = vunpack.c.0.s8 %v1958
        %v1960 = vlaneseq
        %v1961 = vshrl.u32 %v1960, 7
        %v1962 = vsub.s32 %v1959, %v1961
        %v1963 = vrot.slane %v1955, %v1962
        %v1965 = vunpack.c.l.s4 1983009808
        %v1966 = vunpack.c.0.s8 %v1965
        %v1967 = vlaneseq
        %v1968 = vshrl.u32 %v1967, 7
        %v1969 = vsub.s32 %v1966, %v1968
        %v1970 = vrot.slane %v1956, %v1969
        %v1971 = vcombine.low %v1611, %v1675
        %v1972 = vcombine.high %v1611, %v1675
        %v1974 = vunpack.c.l.s4 1983009808
        %v1975 = vunpack.c.0.s8 %v1974
        %v1976 = vlaneseq
        %v1977 = vshrl.u32 %v1976, 7
        %v1978 = vsub.s32 %v1975, %v1977
        %v1979 = vrot.slane %v1971, %v1978
        %v1981 = vunpack.c.l.s4 1983009808
        %v1982 = vunpack.c.0.s8 %v1981
        %v1983 = vlaneseq
        %v1984 = vshrl.u32 %v1983, 7
        %v1985 = vsub.s32 %v1982, %v1984
        %v1986 = vrot.slane %v1972, %v1985
        %v1987 = vcombine.low %v1707, %v1771
        %v1988 = vcombine.high %v1707, %v1771
        %v1990 = vunpack.c.l.s4 1983009808
        %v1991 = vunpack.c.0.s8 %v1990
        %v1992 = vlaneseq
        %v1993 = vshrl.u32 %v1992, 7
        %v1994 = vsub.s32 %v1991, %v1993
        %v1995 = vrot.slane %v1987, %v1994
        %v1997 = vunpack.c.l.s4 1983009808
        %v1998 = vunpack.c.0.s8 %v1997
        %v1999 = vlaneseq
        %v2000 = vshrl.u32 %v1999, 7
        %v2001 = vsub.s32 %v1998, %v2000
        %v2002 = vrot.slane %v1988, %v2001
        %v2003 = vcombine.low %v1739, %v1803
        %v2004 = vcombine.high %v1739, %v1803
        %v2006 = vunpack.c.l.s4 1983009808
        %v2007 = vunpack.c.0.s8 %v2006
        %v2008 = vlaneseq
        %v2009 = vshrl.u32 %v2008, 7
        %v2010 = vsub.s32 %v2007, %v2009
        %v2011 = vrot.slane %v2003, %v2010
        %v2013 = vunpack.c.l.s4 1983009808
        %v2014 = vunpack.c.0.s8 %v2013
        %v2015 = vlaneseq
        %v2016 = vshrl.u32 %v2015, 7
        %v2017 = vsub.s32 %v2014, %v2016
        %v2018 = vrot.slane %v2004, %v2017
        %v2019 = vcombine.low %v1963, %v1979
        %v2020 = vcombine.high %v1963, %v1979
        %v2022 = vunpack.c.l.s4 1934713408
        %v2023 = vunpack.c.0.s8 %v2022
        %v2024 = vlaneseq
        %v2025 = vshrl.u32 %v2024, 7
        %v2026 = vsub.s32 %v2023, %v2025
        %v2027 = vrot.slane %v2019, %v2026
        %v2029 = vunpack.c.l.s4 1934713408
        %v2030 = vunpack.c.0.s8 %v2029
        %v2031 = vlaneseq
        %v2032 = vshrl.u32 %v2031, 7
        %v2033 = vsub.s32 %v2030, %v2032
        %v2034 = vrot.slane %v2020, %v2033
        %v2035 = vcombine.low %v1970, %v1986
        %v2036 = vcombine.high %v1970, %v1986
        %v2038 = vunpack.c.l.s4 1934713408
        %v2039 = vunpack.c.0.s8 %v2038
        %v2040 = vlaneseq
        %v2041 = vshrl.u32 %v2040, 7
        %v2042 = vsub.s32 %v2039, %v2041
        %v2043 = vrot.slane %v2035, %v2042
        %v2045 = vunpack.c.l.s4 1934713408
        %v2046 = vunpack.c.0.s8 %v2045
        %v2047 = vlaneseq
        %v2048 = vshrl.u32 %v2047, 7
        %v2049 = vsub.s32 %v2046, %v2048
        %v2050 = vrot.slane %v2036, %v2049
        %v2051 = vcombine.low %v1995, %v2011
        %v2052 = vcombine.high %v1995, %v2011
        %v2054 = vunpack.c.l.s4 1934713408
        %v2055 = vunpack.c.0.s8 %v2054
        %v2056 = vlaneseq
        %v2057 = vshrl.u32 %v2056, 7
        %v2058 = vsub.s32 %v2055, %v2057
        %v2059 = vrot.slane %v2051, %v2058
        %v2061 = vunpack.c.l.s4 1934713408
        %v2062 = vunpack.c.0.s8 %v2061
        %v2063 = vlaneseq
        %v2064 = vshrl.u32 %v2063, 7
        %v2065 = vsub.s32 %v2062, %v2064
        %v2066 = vrot.slane %v2052, %v2065
        %v2067 = vcombine.low %v2002, %v2018
        %v2068 = vcombine.high %v2002, %v2018
        %v2070 = vunpack.c.l.s4 1934713408
        %v2071 = vunpack.c.0.s8 %v2070
        %v2072 = vlaneseq
        %v2073 = vshrl.u32 %v2072, 7
        %v2074 = vsub.s32 %v2071, %v2073
        %v2075 = vrot.slane %v2067, %v2074
        %v2077 = vunpack.c.l.s4 1934713408
        %v2078 = vunpack.c.0.s8 %v2077
        %v2079 = vlaneseq
        %v2080 = vshrl.u32 %v2079, 7
        %v2081 = vsub.s32 %v2078, %v2080
        %v2082 = vrot.slane %v2068, %v2081
        %v2083 = vcombine.low %v2027, %v2059
        %v2084 = vcombine.high %v2027, %v2059
        %v2085 = vcombine.low %v2034, %v2066
        %v2086 = vcombine.high %v2034, %v2066
        %v2087 = vcombine.low %v2043, %v2075
        %v2088 = vcombine.high %v2043, %v2075
        %v2089 = vcombine.low %v2050, %v2082
        %v2090 = vcombine.high %v2050, %v2082
        %v2091 = vcombine.low %v1324, %v1388
        %v2092 = vcombine.high %v1324, %v1388
        %v2094 = vunpack.c.l.s4 1983009808
        %v2095 = vunpack.c.0.s8 %v2094
        %v2096 = vlaneseq
        %v2097 = vshrl.u32 %v2096, 7
        %v2098 = vsub.s32 %v2095, %v2097
        %v2099 = vrot.slane %v2091, %v2098
        %v2101 = vunpack.c.l.s4 1983009808
        %v2102 = vunpack.c.0.s8 %v2101
        %v2103 = vlaneseq
        %v2104 = vshrl.u32 %v2103, 7
        %v2105 = vsub.s32 %v2102, %v2104
        %v2106 = vrot.slane %v2092, %v2105
        %v2107 = vcombine.low %v1356, %v1420
        %v2108 = vcombine.high %v1356, %v1420
        %v2110 = vunpack.c.l.s4 1983009808
        %v2111 = vunpack.c.0.s8 %v2110
        %v2112 = vlaneseq
        %v2113 = vshrl.u32 %v2112, 7
        %v2114 = vsub.s32 %v2111, %v2113
        %v2115 = vrot.slane %v2107, %v2114
        %v2117 = vunpack.c.l.s4 1983009808
        %v2118 = vunpack.c.0.s8 %v2117
        %v2119 = vlaneseq
        %v2120 = vshrl.u32 %v2119, 7
        %v2121 = vsub.s32 %v2118, %v2120
        %v2122 = vrot.slane %v2108, %v2121
        %v2123 = vcombine.low %v1452, %v1516
        %v2124 = vcombine.high %v1452, %v1516
        %v2126 = vunpack.c.l.s4 1983009808
        %v2127 = vunpack.c.0.s8 %v2126
        %v2128 = vlaneseq
        %v2129 = vshrl.u32 %v2128, 7
        %v2130 = vsub.s32 %v2127, %v2129
        %v2131 = vrot.slane %v2123, %v2130
        %v2133 = vunpack.c.l.s4 1983009808
        %v2134 = vunpack.c.0.s8 %v2133
        %v2135 = vlaneseq
        %v2136 = vshrl.u32 %v2135, 7
        %v2137 = vsub.s32 %v2134, %v2136
        %v2138 = vrot.slane %v2124, %v2137
        %v2139 = vcombine.low %v1484, %v1548
        %v2140 = vcombine.high %v1484, %v1548
        %v2142 = vunpack.c.l.s4 1983009808
        %v2143 = vunpack.c.0.s8 %v2142
        %v2144 = vlaneseq
        %v2145 = vshrl.u32 %v2144, 7
        %v2146 = vsub.s32 %v2143, %v2145
        %v2147 = vrot.slane %v2139, %v2146
        %v2149 = vunpack.c.l.s4 1983009808
        %v2150 = vunpack.c.0.s8 %v2149
        %v2151 = vlaneseq
        %v2152 = vshrl.u32 %v2151, 7
        %v2153 = vsub.s32 %v2150, %v2152
        %v2154 = vrot.slane %v2140, %v2153
        %v2155 = vcombine.low %v2099, %v2115
        %v2156 = vcombine.high %v2099, %v2115
        %v2158 = vunpack.c.l.s4 1934713408
        %v2159 = vunpack.c.0.s8 %v2158
        %v2160 = vlaneseq
        %v2161 = vshrl.u32 %v2160, 7
        %v2162 = vsub.s32 %v2159, %v2161
        %v2163 = vrot.slane %v2155, %v2162
        %v2165 = vunpack.c.l.s4 1934713408
        %v2166 = vunpack.c.0.s8 %v2165
        %v2167 = vlaneseq
        %v2168 = vshrl.u32 %v2167, 7
        %v2169 = vsub.s32 %v2166, %v2168
        %v2170 = vrot.slane %v2156, %v2169
        %v2171 = vcombine.low %v2106, %v2122
        %v2172 = vcombine.high %v2106, %v2122
        %v2174 = vunpack.c.l.s4 1934713408
        %v2175 = vunpack.c.0.s8 %v2174
        %v2176 = vlaneseq
        %v2177 = vshrl.u32 %v2176, 7
        %v2178 = vsub.s32 %v2175, %v2177
        %v2179 = vrot.slane %v2171, %v2178
        %v2181 = vunpack.c.l.s4 1934713408
        %v2182 = vunpack.c.0.s8 %v2181
        %v2183 = vlaneseq
        %v2184 = vshrl.u32 %v2183, 7
        %v2185 = vsub.s32 %v2182, %v2184
        %v2186 = vrot.slane %v2172, %v2185
        %v2187 = vcombine.low %v2131, %v2147
        %v2188 = vcombine.high %v2131, %v2147
        %v2190 = vunpack.c.l.s4 1934713408
        %v2191 = vunpack.c.0.s8 %v2190
        %v2192 = vlaneseq
        %v2193 = vshrl.u32 %v2192, 7
        %v2194 = vsub.s32 %v2191, %v2193
        %v2195 = vrot.slane %v2187, %v2194
        %v2197 = vunpack.c.l.s4 1934713408
        %v2198 = vunpack.c.0.s8 %v2197
        %v2199 = vlaneseq
        %v2200 = vshrl.u32 %v2199, 7
        %v2201 = vsub.s32 %v2198, %v2200
        %v2202 = vrot.slane %v2188, %v2201
        %v2203 = vcombine.low %v2138, %v2154
        %v2204 = vcombine.high %v2138, %v2154
        %v2206 = vunpack.c.l.s4 1934713408
        %v2207 = vunpack.c.0.s8 %v2206
        %v2208 = vlaneseq
        %v2209 = vshrl.u32 %v2208, 7
        %v2210 = vsub.s32 %v2207, %v2209
        %v2211 = vrot.slane %v2203, %v2210
        %v2213 = vunpack.c.l.s4 1934713408
        %v2214 = vunpack.c.0.s8 %v2213
        %v2215 = vlaneseq
        %v2216 = vshrl.u32 %v2215, 7
        %v2217 = vsub.s32 %v2214, %v2216
        %v2218 = vrot.slane %v2204, %v2217
        %v2219 = vcombine.low %v2163, %v2195
        %v2220 = vcombine.high %v2163, %v2195
        %v2221 = vcombine.low %v2170, %v2202
        %v2222 = vcombine.high %v2170, %v2202
        %v2223 = vcombine.low %v2179, %v2211
        %v2224 = vcombine.high %v2179, %v2211
        %v2225 = vcombine.low %v2186, %v2218
        %v2226 = vcombine.high %v2186, %v2218
        %v2227 = vcombine.low %v1580, %v1644
        %v2228 = vcombine.high %v1580, %v1644
        %v2230 = vunpack.c.l.s4 1983009808
        %v2231 = vunpack.c.0.s8 %v2230
        %v2232 = vlaneseq
        %v2233 = vshrl.u32 %v2232, 7
        %v2234 = vsub.s32 %v2231, %v2233
        %v2235 = vrot.slane %v2227, %v2234
        %v2237 = vunpack.c.l.s4 1983009808
        %v2238 = vunpack.c.0.s8 %v2237
        %v2239 = vlaneseq
        %v2240 = vshrl.u32 %v2239, 7
        %v2241 = vsub.s32 %v2238, %v2240
        %v2242 = vrot.slane %v2228, %v2241
        %v2243 = vcombine.low %v1612, %v1676
        %v2244 = vcombine.high %v1612, %v1676
        %v2246 = vunpack.c.l.s4 1983009808
        %v2247 = vunpack.c.0.s8 %v2246
        %v2248 = vlaneseq
        %v2249 = vshrl.u32 %v2248, 7
        %v2250 = vsub.s32 %v2247, %v2249
        %v2251 = vrot.slane %v2243, %v2250
        %v2253 = vunpack.c.l.s4 1983009808
        %v2254 = vunpack.c.0.s8 %v2253
        %v2255 = vlaneseq
        %v2256 = vshrl.u32 %v2255, 7
        %v2257 = vsub.s32 %v2254, %v2256
        %v2258 = vrot.slane %v2244, %v2257
        %v2259 = vcombine.low %v1708, %v1772
        %v2260 = vcombine.high %v1708, %v1772
        %v2262 = vunpack.c.l.s4 1983009808
        %v2263 = vunpack.c.0.s8 %v2262
        %v2264 = vlaneseq
        %v2265 = vshrl.u32 %v2264, 7
        %v2266 = vsub.s32 %v2263, %v2265
        %v2267 = vrot.slane %v2259, %v2266
        %v2269 = vunpack.c.l.s4 1983009808
        %v2270 = vunpack.c.0.s8 %v2269
        %v2271 = vlaneseq
        %v2272 = vshrl.u32 %v2271, 7
        %v2273 = vsub.s32 %v2270, %v2272
        %v2274 = vrot.slane %v2260, %v2273
        %v2275 = vcombine.low %v1740, %v1804
        %v2276 = vcombine.high %v1740, %v1804
        %v2278 = vunpack.c.l.s4 1983009808
        %v2279 = vunpack.c.0.s8 %v2278
        %v2280 = vlaneseq
        %v2281 = vshrl.u32 %v2280, 7
        %v2282 = vsub.s32 %v2279, %v2281
        %v2283 = vrot.slane %v2275, %v2282
        %v2285 = vunpack.c.l.s4 1983009808
        %v2286 = vunpack.c.0.s8 %v2285
        %v2287 = vlaneseq
        %v2288 = vshrl.u32 %v2287, 7
        %v2289 = vsub.s32 %v2286, %v2288
        %v2290 = vrot.slane %v2276, %v2289
        %v2291 = vcombine.low %v2235, %v2251
        %v2292 = vcombine.high %v2235, %v2251
        %v2294 = vunpack.c.l.s4 1934713408
        %v2295 = vunpack.c.0.s8 %v2294
        %v2296 = vlaneseq
        %v2297 = vshrl.u32 %v2296, 7
        %v2298 = vsub.s32 %v2295, %v2297
        %v2299 = vrot.slane %v2291, %v2298
        %v2301 = vunpack.c.l.s4 1934713408
        %v2302 = vunpack.c.0.s8 %v2301
        %v2303 = vlaneseq
        %v2304 = vshrl.u32 %v2303, 7
        %v2305 = vsub.s32 %v2302, %v2304
        %v2306 = vrot.slane %v2292, %v2305
        %v2307 = vcombine.low %v2242, %v2258
        %v2308 = vcombine.high %v2242, %v2258
        %v2310 = vunpack.c.l.s4 1934713408
        %v2311 = vunpack.c.0.s8 %v2310
        %v2312 = vlaneseq
        %v2313 = vshrl.u32 %v2312, 7
        %v2314 = vsub.s32 %v2311, %v2313
        %v2315 = vrot.slane %v2307, %v2314
        %v2317 = vunpack.c.l.s4 1934713408
        %v2318 = vunpack.c.0.s8 %v2317
        %v2319 = vlaneseq
        %v2320 = vshrl.u32 %v2319, 7
        %v2321 = vsub.s32 %v2318, %v2320
        %v2322 = vrot.slane %v2308, %v2321
        %v2323 = vcombine.low %v2267, %v2283
        %v2324 = vcombine.high %v2267, %v2283
        %v2326 = vunpack.c.l.s4 1934713408
        %v2327 = vunpack.c.0.s8 %v2326
        %v2328 = vlaneseq
        %v2329 = vshrl.u32 %v2328, 7
        %v2330 = vsub.s32 %v2327, %v2329
        %v2331 = vrot.slane %v2323, %v2330
        %v2333 = vunpack.c.l.s4 1934713408
        %v2334 = vunpack.c.0.s8 %v2333
        %v2335 = vlaneseq
        %v2336 = vshrl.u32 %v2335, 7
        %v2337 = vsub.s32 %v2334, %v2336
        %v2338 = vrot.slane %v2324, %v2337
        %v2339 = vcombine.low %v2274, %v2290
        %v2340 = vcombine.high %v2274, %v2290
        %v2342 = vunpack.c.l.s4 1934713408
        %v2343 = vunpack.c.0.s8 %v2342
        %v2344 = vlaneseq
        %v2345 = vshrl.u32 %v2344, 7
        %v2346 = vsub.s32 %v2343, %v2345
        %v2347 = vrot.slane %v2339, %v2346
        %v2349 = vunpack.c.l.s4 1934713408
        %v2350 = vunpack.c.0.s8 %v2349
        %v2351 = vlaneseq
        %v2352 = vshrl.u32 %v2351, 7
        %v2353 = vsub.s32 %v2350, %v2352
        %v2354 = vrot.slane %v2340, %v2353
        %v2355 = vcombine.low %v2299, %v2331
        %v2356 = vcombine.high %v2299, %v2331
        %v2357 = vcombine.low %v2306, %v2338
        %v2358 = vcombine.high %v2306, %v2338
        %v2359 = vcombine.low %v2315, %v2347
        %v2360 = vcombine.high %v2315, %v2347
        %v2361 = vcombine.low %v2322, %v2354
        %v2362 = vcombine.high %v2322, %v2354
        %v2363 = vcombine.low %v1325, %v1389
        %v2364 = vcombine.high %v1325, %v1389
        %v2366 = vunpack.c.l.s4 1983009808
        %v2367 = vunpack.c.0.s8 %v2366
        %v2368 = vlaneseq
        %v2369 = vshrl.u32 %v2368, 7
        %v2370 = vsub.s32 %v2367, %v2369
        %v2371 = vrot.slane %v2363, %v2370
        %v2373 = vunpack.c.l.s4 1983009808
        %v2374 = vunpack.c.0.s8 %v2373
        %v2375 = vlaneseq
        %v2376 = vshrl.u32 %v2375, 7
        %v2377 = vsub.s32 %v2374, %v2376
        %v2378 = vrot.slane %v2364, %v2377
        %v2379 = vcombine.low %v1357, %v1421
        %v2380 = vcombine.high %v1357, %v1421
        %v2382 = vunpack.c.l.s4 1983009808
        %v2383 = vunpack.c.0.s8 %v2382
        %v2384 = vlaneseq
        %v2385 = vshrl.u32 %v2384, 7
        %v2386 = vsub.s32 %v2383, %v2385
        %v2387 = vrot.slane %v2379, %v2386
        %v2389 = vunpack.c.l.s4 1983009808
        %v2390 = vunpack.c.0.s8 %v2389
        %v2391 = vlaneseq
        %v2392 = vshrl.u32 %v2391, 7
        %v2393 = vsub.s32 %v2390, %v2392
        %v2394 = vrot.slane %v2380, %v2393
        %v2395 = vcombine.low %v1453, %v1517
        %v2396 = vcombine.high %v1453, %v1517
        %v2398 = vunpack.c.l.s4 1983009808
        %v2399 = vunpack.c.0.s8 %v2398
        %v2400 = vlaneseq
        %v2401 = vshrl.u32 %v2400, 7
        %v2402 = vsub.s32 %v2399, %v2401
        %v2403 = vrot.slane %v2395, %v2402
        %v2405 = vunpack.c.l.s4 1983009808
        %v2406 = vunpack.c.0.s8 %v2405
        %v2407 = vlaneseq
        %v2408 = vshrl.u32 %v2407, 7
        %v2409 = vsub.s32 %v2406, %v2408
        %v2410 = vrot.slane %v2396, %v2409
        %v2411 = vcombine.low %v1485, %v1549
        %v2412 = vcombine.high %v1485, %v1549
        %v2414 = vunpack.c.l.s4 1983009808
        %v2415 = vunpack.c.0.s8 %v2414
        %v2416 = vlaneseq
        %v2417 = vshrl.u32 %v2416, 7
        %v2418 = vsub.s32 %v2415, %v2417
        %v2419 = vrot.slane %v2411, %v2418
        %v2421 = vunpack.c.l.s4 1983009808
        %v2422 = vunpack.c.0.s8 %v2421
        %v2423 = vlaneseq
        %v2424 = vshrl.u32 %v2423, 7
        %v2425 = vsub.s32 %v2422, %v2424
        %v2426 = vrot.slane %v2412, %v2425
        %v2427 = vcombine.low %v2371, %v2387
        %v2428 = vcombine.high %v2371, %v2387
        %v2430 = vunpack.c.l.s4 1934713408
        %v2431 = vunpack.c.0.s8 %v2430
        %v2432 = vlaneseq
        %v2433 = vshrl.u32 %v2432, 7
        %v2434 = vsub.s32 %v2431, %v2433
        %v2435 = vrot.slane %v2427, %v2434
        %v2437 = vunpack.c.l.s4 1934713408
        %v2438 = vunpack.c.0.s8 %v2437
        %v2439 = vlaneseq
        %v2440 = vshrl.u32 %v2439, 7
        %v2441 = vsub.s32 %v2438, %v2440
        %v2442 = vrot.slane %v2428, %v2441
        %v2443 = vcombine.low %v2378, %v2394
        %v2444 = vcombine.high %v2378, %v2394
        %v2446 = vunpack.c.l.s4 1934713408
        %v2447 = vunpack.c.0.s8 %v2446
        %v2448 = vlaneseq
        %v2449 = vshrl.u32 %v2448, 7
        %v2450 = vsub.s32 %v2447, %v2449
        %v2451 = vrot.slane %v2443, %v2450
        %v2453 = vunpack.c.l.s4 1934713408
        %v2454 = vunpack.c.0.s8 %v2453
        %v2455 = vlaneseq
        %v2456 = vshrl.u32 %v2455, 7
        %v2457 = vsub.s32 %v2454, %v2456
        %v2458 = vrot.slane %v2444, %v2457
        %v2459 = vcombine.low %v2403, %v2419
        %v2460 = vcombine.high %v2403, %v2419
        %v2462 = vunpack.c.l.s4 1934713408
        %v2463 = vunpack.c.0.s8 %v2462
        %v2464 = vlaneseq
        %v2465 = vshrl.u32 %v2464, 7
        %v2466 = vsub.s32 %v2463, %v2465
        %v2467 = vrot.slane %v2459, %v2466
        %v2469 = vunpack.c.l.s4 1934713408
        %v2470 = vunpack.c.0.s8 %v2469
        %v2471 = vlaneseq
        %v2472 = vshrl.u32 %v2471, 7
        %v2473 = vsub.s32 %v2470, %v2472
        %v2474 = vrot.slane %v2460, %v2473
        %v2475 = vcombine.low %v2410, %v2426
        %v2476 = vcombine.high %v2410, %v2426
        %v2478 = vunpack.c.l.s4 1934713408
        %v2479 = vunpack.c.0.s8 %v2478
        %v2480 = vlaneseq
        %v2481 = vshrl.u32 %v2480, 7
        %v2482 = vsub.s32 %v2479, %v2481
        %v2483 = vrot.slane %v2475, %v2482
        %v2485 = vunpack.c.l.s4 1934713408
        %v2486 = vunpack.c.0.s8 %v2485
        %v2487 = vlaneseq
        %v2488 = vshrl.u32 %v2487, 7
        %v2489 = vsub.s32 %v2486, %v2488
        %v2490 = vrot.slane %v2476, %v2489
        %v2491 = vcombine.low %v2435, %v2467
        %v2492 = vcombine.high %v2435, %v2467
        %v2493 = vcombine.low %v2442, %v2474
        %v2494 = vcombine.high %v2442, %v2474
        %v2495 = vcombine.low %v2451, %v2483
        %v2496 = vcombine.high %v2451, %v2483
        %v2497 = vcombine.low %v2458, %v2490
        %v2498 = vcombine.high %v2458, %v2490
        %v2499 = vcombine.low %v1581, %v1645
        %v2500 = vcombine.high %v1581, %v1645
        %v2502 = vunpack.c.l.s4 1983009808
        %v2503 = vunpack.c.0.s8 %v2502
        %v2504 = vlaneseq
        %v2505 = vshrl.u32 %v2504, 7
        %v2506 = vsub.s32 %v2503, %v2505
        %v2507 = vrot.slane %v2499, %v2506
        %v2509 = vunpack.c.l.s4 1983009808
        %v2510 = vunpack.c.0.s8 %v2509
        %v2511 = vlaneseq
        %v2512 = vshrl.u32 %v2511, 7
        %v2513 = vsub.s32 %v2510, %v2512
        %v2514 = vrot.slane %v2500, %v2513
        %v2515 = vcombine.low %v1613, %v1677
        %v2516 = vcombine.high %v1613, %v1677
        %v2518 = vunpack.c.l.s4 1983009808
        %v2519 = vunpack.c.0.s8 %v2518
        %v2520 = vlaneseq
        %v2521 = vshrl.u32 %v2520, 7
        %v2522 = vsub.s32 %v2519, %v2521
        %v2523 = vrot.slane %v2515, %v2522
        %v2525 = vunpack.c.l.s4 1983009808
        %v2526 = vunpack.c.0.s8 %v2525
        %v2527 = vlaneseq
        %v2528 = vshrl.u32 %v2527, 7
        %v2529 = vsub.s32 %v2526, %v2528
        %v2530 = vrot.slane %v2516, %v2529
        %v2531 = vcombine.low %v1709, %v1773
        %v2532 = vcombine.high %v1709, %v1773
        %v2534 = vunpack.c.l.s4 1983009808
        %v2535 = vunpack.c.0.s8 %v2534
        %v2536 = vlaneseq
        %v2537 = vshrl.u32 %v2536, 7
        %v2538 = vsub.s32 %v2535, %v2537
        %v2539 = vrot.slane %v2531, %v2538
        %v2541 = vunpack.c.l.s4 1983009808
        %v2542 = vunpack.c.0.s8 %v2541
        %v2543 = vlaneseq
        %v2544 = vshrl.u32 %v2543, 7
        %v2545 = vsub.s32 %v2542, %v2544
        %v2546 = vrot.slane %v2532, %v2545
        %v2547 = vcombine.low %v1741, %v1805
        %v2548 = vcombine.high %v1741, %v1805
        %v2550 = vunpack.c.l.s4 1983009808
        %v2551 = vunpack.c.0.s8 %v2550
        %v2552 = vlaneseq
        %v2553 = vshrl.u32 %v2552, 7
        %v2554 = vsub.s32 %v2551, %v2553
        %v2555 = vrot.slane %v2547, %v2554
        %v2557 = vunpack.c.l.s4 1983009808
        %v2558 = vunpack.c.0.s8 %v2557
        %v2559 = vlaneseq
        %v2560 = vshrl.u32 %v2559, 7
        %v2561 = vsub.s32 %v2558, %v2560
        %v2562 = vrot.slane %v2548, %v2561
        %v2563 = vcombine.low %v2507, %v2523
        %v2564 = vcombine.high %v2507, %v2523
        %v2566 = vunpack.c.l.s4 1934713408
        %v2567 = vunpack.c.0.s8 %v2566
        %v2568 = vlaneseq
        %v2569 = vshrl.u32 %v2568, 7
        %v2570 = vsub.s32 %v2567, %v2569
        %v2571 = vrot.slane %v2563, %v2570
        %v2573 = vunpack.c.l.s4 1934713408
        %v2574 = vunpack.c.0.s8 %v2573
        %v2575 = vlaneseq
        %v2576 = vshrl.u32 %v2575, 7
        %v2577 = vsub.s32 %v2574, %v2576
        %v2578 = vrot.slane %v2564, %v2577
        %v2579 = vcombine.low %v2514, %v2530
        %v2580 = vcombine.high %v2514, %v2530
        %v2582 = vunpack.c.l.s4 1934713408
        %v2583 = vunpack.c.0.s8 %v2582
        %v2584 = vlaneseq
        %v2585 = vshrl.u32 %v2584, 7
        %v2586 = vsub.s32 %v2583, %v2585
        %v2587 = vrot.slane %v2579, %v2586
        %v2589 = vunpack.c.l.s4 1934713408
        %v2590 = vunpack.c.0.s8 %v2589
        %v2591 = vlaneseq
        %v2592 = vshrl.u32 %v2591, 7
        %v2593 = vsub.s32 %v2590, %v2592
        %v2594 = vrot.slane %v2580, %v2593
        %v2595 = vcombine.low %v2539, %v2555
        %v2596 = vcombine.high %v2539, %v2555
        %v2598 = vunpack.c.l.s4 1934713408
        %v2599 = vunpack.c.0.s8 %v2598
        %v2600 = vlaneseq
        %v2601 = vshrl.u32 %v2600, 7
        %v2602 = vsub.s32 %v2599, %v2601
        %v2603 = vrot.slane %v2595, %v2602
        %v2605 = vunpack.c.l.s4 1934713408
        %v2606 = vunpack.c.0.s8 %v2605
        %v2607 = vlaneseq
        %v2608 = vshrl.u32 %v2607, 7
        %v2609 = vsub.s32 %v2606, %v2608
        %v2610 = vrot.slane %v2596, %v2609
        %v2611 = vcombine.low %v2546, %v2562
        %v2612 = vcombine.high %v2546, %v2562
        %v2614 = vunpack.c.l.s4 1934713408
        %v2615 = vunpack.c.0.s8 %v2614
        %v2616 = vlaneseq
        %v2617 = vshrl.u32 %v2616, 7
        %v2618 = vsub.s32 %v2615, %v2617
        %v2619 = vrot.slane %v2611, %v2618
        %v2621 = vunpack.c.l.s4 1934713408
        %v2622 = vunpack.c.0.s8 %v2621
        %v2623 = vlaneseq
        %v2624 = vshrl.u32 %v2623, 7
        %v2625 = vsub.s32 %v2622, %v2624
        %v2626 = vrot.slane %v2612, %v2625
        %v2627 = vcombine.low %v2571, %v2603
        %v2628 = vcombine.high %v2571, %v2603
        %v2629 = vcombine.low %v2578, %v2610
        %v2630 = vcombine.high %v2578, %v2610
        %v2631 = vcombine.low %v2587, %v2619
        %v2632 = vcombine.high %v2587, %v2619
        %v2633 = vcombine.low %v2594, %v2626
        %v2634 = vcombine.high %v2594, %v2626
        %v2635 = vcombine.low %v1326, %v1390
        %v2636 = vcombine.high %v1326, %v1390
        %v2638 = vunpack.c.l.s4 1983009808
        %v2639 = vunpack.c.0.s8 %v2638
        %v2640 = vlaneseq
        %v2641 = vshrl.u32 %v2640, 7
        %v2642 = vsub.s32 %v2639, %v2641
        %v2643 = vrot.slane %v2635, %v2642
        %v2645 = vunpack.c.l.s4 1983009808
        %v2646 = vunpack.c.0.s8 %v2645
        %v2647 = vlaneseq
        %v2648 = vshrl.u32 %v2647, 7
        %v2649 = vsub.s32 %v2646, %v2648
        %v2650 = vrot.slane %v2636, %v2649
        %v2651 = vcombine.low %v1358, %v1422
        %v2652 = vcombine.high %v1358, %v1422
        %v2654 = vunpack.c.l.s4 1983009808
        %v2655 = vunpack.c.0.s8 %v2654
        %v2656 = vlaneseq
        %v2657 = vshrl.u32 %v2656, 7
        %v2658 = vsub.s32 %v2655, %v2657
        %v2659 = vrot.slane %v2651, %v2658
        %v2661 = vunpack.c.l.s4 1983009808
        %v2662 = vunpack.c.0.s8 %v2661
        %v2663 = vlaneseq
        %v2664 = vshrl.u32 %v2663, 7
        %v2665 = vsub.s32 %v2662, %v2664
        %v2666 = vrot.slane %v2652, %v2665
        %v2667 = vcombine.low %v1454, %v1518
        %v2668 = vcombine.high %v1454, %v1518
        %v2670 = vunpack.c.l.s4 1983009808
        %v2671 = vunpack.c.0.s8 %v2670
        %v2672 = vlaneseq
        %v2673 = vshrl.u32 %v2672, 7
        %v2674 = vsub.s32 %v2671, %v2673
        %v2675 = vrot.slane %v2667, %v2674
        %v2677 = vunpack.c.l.s4 1983009808
        %v2678 = vunpack.c.0.s8 %v2677
        %v2679 = vlaneseq
        %v2680 = vshrl.u32 %v2679, 7
        %v2681 = vsub.s32 %v2678, %v2680
        %v2682 = vrot.slane %v2668, %v2681
        %v2683 = vcombine.low %v1486, %v1550
        %v2684 = vcombine.high %v1486, %v1550
        %v2686 = vunpack.c.l.s4 1983009808
        %v2687 = vunpack.c.0.s8 %v2686
        %v2688 = vlaneseq
        %v2689 = vshrl.u32 %v2688, 7
        %v2690 = vsub.s32 %v2687, %v2689
        %v2691 = vrot.slane %v2683, %v2690
        %v2693 = vunpack.c.l.s4 1983009808
        %v2694 = vunpack.c.0.s8 %v2693
        %v2695 = vlaneseq
        %v2696 = vshrl.u32 %v2695, 7
        %v2697 = vsub.s32 %v2694, %v2696
        %v2698 = vrot.slane %v2684, %v2697
        %v2699 = vcombine.low %v2643, %v2659
        %v2700 = vcombine.high %v2643, %v2659
        %v2702 = vunpack.c.l.s4 1934713408
        %v2703 = vunpack.c.0.s8 %v2702
        %v2704 = vlaneseq
        %v2705 = vshrl.u32 %v2704, 7
        %v2706 = vsub.s32 %v2703, %v2705
        %v2707 = vrot.slane %v2699, %v2706
        %v2709 = vunpack.c.l.s4 1934713408
        %v2710 = vunpack.c.0.s8 %v2709
        %v2711 = vlaneseq
        %v2712 = vshrl.u32 %v2711, 7
        %v2713 = vsub.s32 %v2710, %v2712
        %v2714 = vrot.slane %v2700, %v2713
        %v2715 = vcombine.low %v2650, %v2666
        %v2716 = vcombine.high %v2650, %v2666
        %v2718 = vunpack.c.l.s4 1934713408
        %v2719 = vunpack.c.0.s8 %v2718
        %v2720 = vlaneseq
        %v2721 = vshrl.u32 %v2720, 7
        %v2722 = vsub.s32 %v2719, %v2721
        %v2723 = vrot.slane %v2715, %v2722
        %v2725 = vunpack.c.l.s4 1934713408
        %v2726 = vunpack.c.0.s8 %v2725
        %v2727 = vlaneseq
        %v2728 = vshrl.u32 %v2727, 7
        %v2729 = vsub.s32 %v2726, %v2728
        %v2730 = vrot.slane %v2716, %v2729
        %v2731 = vcombine.low %v2675, %v2691
        %v2732 = vcombine.high %v2675, %v2691
        %v2734 = vunpack.c.l.s4 1934713408
        %v2735 = vunpack.c.0.s8 %v2734
        %v2736 = vlaneseq
        %v2737 = vshrl.u32 %v2736, 7
        %v2738 = vsub.s32 %v2735, %v2737
        %v2739 = vrot.slane %v2731, %v2738
        %v2741 = vunpack.c.l.s4 1934713408
        %v2742 = vunpack.c.0.s8 %v2741
        %v2743 = vlaneseq
        %v2744 = vshrl.u32 %v2743, 7
        %v2745 = vsub.s32 %v2742, %v2744
        %v2746 = vrot.slane %v2732, %v2745
        %v2747 = vcombine.low %v2682, %v2698
        %v2748 = vcombine.high %v2682, %v2698
        %v2750 = vunpack.c.l.s4 1934713408
        %v2751 = vunpack.c.0.s8 %v2750
        %v2752 = vlaneseq
        %v2753 = vshrl.u32 %v2752, 7
        %v2754 = vsub.s32 %v2751, %v2753
        %v2755 = vrot.slane %v2747, %v2754
        %v2757 = vunpack.c.l.s4 1934713408
        %v2758 = vunpack.c.0.s8 %v2757
        %v2759 = vlaneseq
        %v2760 = vshrl.u32 %v2759, 7
        %v2761 = vsub.s32 %v2758, %v2760
        %v2762 = vrot.slane %v2748, %v2761
        %v2763 = vcombine.low %v2707, %v2739
        %v2764 = vcombine.high %v2707, %v2739
        %v2765 = vcombine.low %v2714, %v2746
        %v2766 = vcombine.high %v2714, %v2746
        %v2767 = vcombine.low %v2723, %v2755
        %v2768 = vcombine.high %v2723, %v2755
        %v2769 = vcombine.low %v2730, %v2762
        %v2770 = vcombine.high %v2730, %v2762
        %v2771 = vcombine.low %v1582, %v1646
        %v2772 = vcombine.high %v1582, %v1646
        %v2774 = vunpack.c.l.s4 1983009808
        %v2775 = vunpack.c.0.s8 %v2774
        %v2776 = vlaneseq
        %v2777 = vshrl.u32 %v2776, 7
        %v2778 = vsub.s32 %v2775, %v2777
        %v2779 = vrot.slane %v2771, %v2778
        %v2781 = vunpack.c.l.s4 1983009808
        %v2782 = vunpack.c.0.s8 %v2781
        %v2783 = vlaneseq
        %v2784 = vshrl.u32 %v2783, 7
        %v2785 = vsub.s32 %v2782, %v2784
        %v2786 = vrot.slane %v2772, %v2785
        %v2787 = vcombine.low %v1614, %v1678
        %v2788 = vcombine.high %v1614, %v1678
        %v2790 = vunpack.c.l.s4 1983009808
        %v2791 = vunpack.c.0.s8 %v2790
        %v2792 = vlaneseq
        %v2793 = vshrl.u32 %v2792, 7
        %v2794 = vsub.s32 %v2791, %v2793
        %v2795 = vrot.slane %v2787, %v2794
        %v2797 = vunpack.c.l.s4 1983009808
        %v2798 = vunpack.c.0.s8 %v2797
        %v2799 = vlaneseq
        %v2800 = vshrl.u32 %v2799, 7
        %v2801 = vsub.s32 %v2798, %v2800
        %v2802 = vrot.slane %v2788, %v2801
        %v2803 = vcombine.low %v1710, %v1774
        %v2804 = vcombine.high %v1710, %v1774
        %v2806 = vunpack.c.l.s4 1983009808
        %v2807 = vunpack.c.0.s8 %v2806
        %v2808 = vlaneseq
        %v2809 = vshrl.u32 %v2808, 7
        %v2810 = vsub.s32 %v2807, %v2809
        %v2811 = vrot.slane %v2803, %v2810
        %v2813 = vunpack.c.l.s4 1983009808
        %v2814 = vunpack.c.0.s8 %v2813
        %v2815 = vlaneseq
        %v2816 = vshrl.u32 %v2815, 7
        %v2817 = vsub.s32 %v2814, %v2816
        %v2818 = vrot.slane %v2804, %v2817
        %v2819 = vcombine.low %v1742, %v1806
        %v2820 = vcombine.high %v1742, %v1806
        %v2822 = vunpack.c.l.s4 1983009808
        %v2823 = vunpack.c.0.s8 %v2822
        %v2824 = vlaneseq
        %v2825 = vshrl.u32 %v2824, 7
        %v2826 = vsub.s32 %v2823, %v2825
        %v2827 = vrot.slane %v2819, %v2826
        %v2829 = vunpack.c.l.s4 1983009808
        %v2830 = vunpack.c.0.s8 %v2829
        %v2831 = vlaneseq
        %v2832 = vshrl.u32 %v2831, 7
        %v2833 = vsub.s32 %v2830, %v2832
        %v2834 = vrot.slane %v2820, %v2833
        %v2835 = vcombine.low %v2779, %v2795
        %v2836 = vcombine.high %v2779, %v2795
        %v2838 = vunpack.c.l.s4 1934713408
        %v2839 = vunpack.c.0.s8 %v2838
        %v2840 = vlaneseq
        %v2841 = vshrl.u32 %v2840, 7
        %v2842 = vsub.s32 %v2839, %v2841
        %v2843 = vrot.slane %v2835, %v2842
        %v2845 = vunpack.c.l.s4 1934713408
        %v2846 = vunpack.c.0.s8 %v2845
        %v2847 = vlaneseq
        %v2848 = vshrl.u32 %v2847, 7
        %v2849 = vsub.s32 %v2846, %v2848
        %v2850 = vrot.slane %v2836, %v2849
        %v2851 = vcombine.low %v2786, %v2802
        %v2852 = vcombine.high %v2786, %v2802
        %v2854 = vunpack.c.l.s4 1934713408
        %v2855 = vunpack.c.0.s8 %v2854
        %v2856 = vlaneseq
        %v2857 = vshrl.u32 %v2856, 7
        %v2858 = vsub.s32 %v2855, %v2857
        %v2859 = vrot.slane %v2851, %v2858
        %v2861 = vunpack.c.l.s4 1934713408
        %v2862 = vunpack.c.0.s8 %v2861
        %v2863 = vlaneseq
        %v2864 = vshrl.u32 %v2863, 7
        %v2865 = vsub.s32 %v2862, %v2864
        %v2866 = vrot.slane %v2852, %v2865
        %v2867 = vcombine.low %v2811, %v2827
        %v2868 = vcombine.high %v2811, %v2827
        %v2870 = vunpack.c.l.s4 1934713408
        %v2871 = vunpack.c.0.s8 %v2870
        %v2872 = vlaneseq
        %v2873 = vshrl.u32 %v2872, 7
        %v2874 = vsub.s32 %v2871, %v2873
        %v2875 = vrot.slane %v2867, %v2874
        %v2877 = vunpack.c.l.s4 1934713408
        %v2878 = vunpack.c.0.s8 %v2877
        %v2879 = vlaneseq
        %v2880 = vshrl.u32 %v2879, 7
        %v2881 = vsub.s32 %v2878, %v2880
        %v2882 = vrot.slane %v2868, %v2881
        %v2883 = vcombine.low %v2818, %v2834
        %v2884 = vcombine.high %v2818, %v2834
        %v2886 = vunpack.c.l.s4 1934713408
        %v2887 = vunpack.c.0.s8 %v2886
        %v2888 = vlaneseq
        %v2889 = vshrl.u32 %v2888, 7
        %v2890 = vsub.s32 %v2887, %v2889
        %v2891 = vrot.slane %v2883, %v2890
        %v2893 = vunpack.c.l.s4 1934713408
        %v2894 = vunpack.c.0.s8 %v2893
        %v2895 = vlaneseq
        %v2896 = vshrl.u32 %v2895, 7
        %v2897 = vsub.s32 %v2894, %v2896
        %v2898 = vrot.slane %v2884, %v2897
        %v2899 = vcombine.low %v2843, %v2875
        %v2900 = vcombine.high %v2843, %v2875
        %v2901 = vcombine.low %v2850, %v2882
        %v2902 = vcombine.high %v2850, %v2882
        %v2903 = vcombine.low %v2859, %v2891
        %v2904 = vcombine.high %v2859, %v2891
        %v2905 = vcombine.low %v2866, %v2898
        %v2906 = vcombine.high %v2866, %v2898
        %2907 = vxpose.xlu0.b32.start [1/16] %v1947, 128
        %2908 = vxpose.xlu0.b32.cont [2/16] %v2083, 128
        %2909 = vxpose.xlu0.b32.cont [3/16] 0.0, 128
        %2910 = vxpose.xlu0.b32.cont [4/16] 0.0, 128
        %2911 = vxpose.xlu0.b32.cont [5/16] 0.0, 128
        %2912 = vxpose.xlu0.b32.cont [6/16] 0.0, 128
        %2913 = vxpose.xlu0.b32.cont [7/16] 0.0, 128
        %2914 = vxpose.xlu0.b32.cont [8/16] 0.0, 128
        %2915 = vxpose.xlu0.b32.cont [9/16] 0.0, 128
        %2916 = vxpose.xlu0.b32.cont [10/16] 0.0, 128
        %2917 = vxpose.xlu0.b32.cont [11/16] 0.0, 128
        %2918 = vxpose.xlu0.b32.cont [12/16] 0.0, 128
        %2919 = vxpose.xlu0.b32.cont [13/16] 0.0, 128
        %2920 = vxpose.xlu0.b32.cont [14/16] 0.0, 128
        %2921 = vxpose.xlu0.b32.cont [15/16] 0.0, 128
        %2922 = vxpose.xlu0.b32.end [16/16] 0.0, 128
        %v2923 = vpop.trf.xlu0
        %v2924 = vpop.trf.xlu0
        %v2925 = vpop.trf.xlu0
        %v2926 = vpop.trf.xlu0
        %v2927 = vpop.trf.xlu0
        %v2928 = vpop.trf.xlu0
        %v2929 = vpop.trf.xlu0
        %v2930 = vpop.trf.xlu0
        %v2931 = vpop.trf.xlu0
        %v2932 = vpop.trf.xlu0
        %v2933 = vpop.trf.xlu0
        %v2934 = vpop.trf.xlu0
        %v2935 = vpop.trf.xlu0
        %v2936 = vpop.trf.xlu0
        %v2937 = vpop.trf.xlu0
        %v2938 = vpop.trf.xlu0
        %2939 = vxpose.xlu0.b32.start [1/16] %v1948, 128
        %2940 = vxpose.xlu0.b32.cont [2/16] %v2084, 128
        %2941 = vxpose.xlu0.b32.cont [3/16] 0.0, 128
        %2942 = vxpose.xlu0.b32.cont [4/16] 0.0, 128
        %2943 = vxpose.xlu0.b32.cont [5/16] 0.0, 128
        %2944 = vxpose.xlu0.b32.cont [6/16] 0.0, 128
        %2945 = vxpose.xlu0.b32.cont [7/16] 0.0, 128
        %2946 = vxpose.xlu0.b32.cont [8/16] 0.0, 128
        %2947 = vxpose.xlu0.b32.cont [9/16] 0.0, 128
        %2948 = vxpose.xlu0.b32.cont [10/16] 0.0, 128
        %2949 = vxpose.xlu0.b32.cont [11/16] 0.0, 128
        %2950 = vxpose.xlu0.b32.cont [12/16] 0.0, 128
        %2951 = vxpose.xlu0.b32.cont [13/16] 0.0, 128
        %2952 = vxpose.xlu0.b32.cont [14/16] 0.0, 128
        %2953 = vxpose.xlu0.b32.cont [15/16] 0.0, 128
        %2954 = vxpose.xlu0.b32.end [16/16] 0.0, 128
        %v2955 = vpop.trf.xlu0
        %v2956 = vpop.trf.xlu0
        %v2957 = vpop.trf.xlu0
        %v2958 = vpop.trf.xlu0
        %v2959 = vpop.trf.xlu0
        %v2960 = vpop.trf.xlu0
        %v2961 = vpop.trf.xlu0
        %v2962 = vpop.trf.xlu0
        %v2963 = vpop.trf.xlu0
        %v2964 = vpop.trf.xlu0
        %v2965 = vpop.trf.xlu0
        %v2966 = vpop.trf.xlu0
        %v2967 = vpop.trf.xlu0
        %v2968 = vpop.trf.xlu0
        %v2969 = vpop.trf.xlu0
        %v2970 = vpop.trf.xlu0
        %2971 = vxpose.xlu0.b32.start [1/16] %v1949, 128
        %2972 = vxpose.xlu0.b32.cont [2/16] %v2085, 128
        %2973 = vxpose.xlu0.b32.cont [3/16] 0.0, 128
        %2974 = vxpose.xlu0.b32.cont [4/16] 0.0, 128
        %2975 = vxpose.xlu0.b32.cont [5/16] 0.0, 128
        %2976 = vxpose.xlu0.b32.cont [6/16] 0.0, 128
        %2977 = vxpose.xlu0.b32.cont [7/16] 0.0, 128
        %2978 = vxpose.xlu0.b32.cont [8/16] 0.0, 128
        %2979 = vxpose.xlu0.b32.cont [9/16] 0.0, 128
        %2980 = vxpose.xlu0.b32.cont [10/16] 0.0, 128
        %2981 = vxpose.xlu0.b32.cont [11/16] 0.0, 128
        %2982 = vxpose.xlu0.b32.cont [12/16] 0.0, 128
        %2983 = vxpose.xlu0.b32.cont [13/16] 0.0, 128
        %2984 = vxpose.xlu0.b32.cont [14/16] 0.0, 128
        %2985 = vxpose.xlu0.b32.cont [15/16] 0.0, 128
        %2986 = vxpose.xlu0.b32.end [16/16] 0.0, 128
        %v2987 = vpop.trf.xlu0
        %v2988 = vpop.trf.xlu0
        %v2989 = vpop.trf.xlu0
        %v2990 = vpop.trf.xlu0
        %v2991 = vpop.trf.xlu0
        %v2992 = vpop.trf.xlu0
        %v2993 = vpop.trf.xlu0
        %v2994 = vpop.trf.xlu0
        %v2995 = vpop.trf.xlu0
        %v2996 = vpop.trf.xlu0
        %v2997 = vpop.trf.xlu0
        %v2998 = vpop.trf.xlu0
        %v2999 = vpop.trf.xlu0
        %v3000 = vpop.trf.xlu0
        %v3001 = vpop.trf.xlu0
        %v3002 = vpop.trf.xlu0
        %3003 = vxpose.xlu0.b32.start [1/16] %v1950, 128
        %3004 = vxpose.xlu0.b32.cont [2/16] %v2086, 128
        %3005 = vxpose.xlu0.b32.cont [3/16] 0.0, 128
        %3006 = vxpose.xlu0.b32.cont [4/16] 0.0, 128
        %3007 = vxpose.xlu0.b32.cont [5/16] 0.0, 128
        %3008 = vxpose.xlu0.b32.cont [6/16] 0.0, 128
        %3009 = vxpose.xlu0.b32.cont [7/16] 0.0, 128
        %3010 = vxpose.xlu0.b32.cont [8/16] 0.0, 128
        %3011 = vxpose.xlu0.b32.cont [9/16] 0.0, 128
        %3012 = vxpose.xlu0.b32.cont [10/16] 0.0, 128
        %3013 = vxpose.xlu0.b32.cont [11/16] 0.0, 128
        %3014 = vxpose.xlu0.b32.cont [12/16] 0.0, 128
        %3015 = vxpose.xlu0.b32.cont [13/16] 0.0, 128
        %3016 = vxpose.xlu0.b32.cont [14/16] 0.0, 128
        %3017 = vxpose.xlu0.b32.cont [15/16] 0.0, 128
        %3018 = vxpose.xlu0.b32.end [16/16] 0.0, 128
        %v3019 = vpop.trf.xlu0
        %v3020 = vpop.trf.xlu0
        %v3021 = vpop.trf.xlu0
        %v3022 = vpop.trf.xlu0
        %v3023 = vpop.trf.xlu0
        %v3024 = vpop.trf.xlu0
        %v3025 = vpop.trf.xlu0
        %v3026 = vpop.trf.xlu0
        %v3027 = vpop.trf.xlu0
        %v3028 = vpop.trf.xlu0
        %v3029 = vpop.trf.xlu0
        %v3030 = vpop.trf.xlu0
        %v3031 = vpop.trf.xlu0
        %v3032 = vpop.trf.xlu0
        %v3033 = vpop.trf.xlu0
        %v3034 = vpop.trf.xlu0
        %3035 = vxpose.xlu0.b32.start [1/16] %v1951, 128
        %3036 = vxpose.xlu0.b32.cont [2/16] %v2087, 128
        %3037 = vxpose.xlu0.b32.cont [3/16] 0.0, 128
        %3038 = vxpose.xlu0.b32.cont [4/16] 0.0, 128
        %3039 = vxpose.xlu0.b32.cont [5/16] 0.0, 128
        %3040 = vxpose.xlu0.b32.cont [6/16] 0.0, 128
        %3041 = vxpose.xlu0.b32.cont [7/16] 0.0, 128
        %3042 = vxpose.xlu0.b32.cont [8/16] 0.0, 128
        %3043 = vxpose.xlu0.b32.cont [9/16] 0.0, 128
        %3044 = vxpose.xlu0.b32.cont [10/16] 0.0, 128
        %3045 = vxpose.xlu0.b32.cont [11/16] 0.0, 128
        %3046 = vxpose.xlu0.b32.cont [12/16] 0.0, 128
        %3047 = vxpose.xlu0.b32.cont [13/16] 0.0, 128
        %3048 = vxpose.xlu0.b32.cont [14/16] 0.0, 128
        %3049 = vxpose.xlu0.b32.cont [15/16] 0.0, 128
        %3050 = vxpose.xlu0.b32.end [16/16] 0.0, 128
        %v3051 = vpop.trf.xlu0
        %v3052 = vpop.trf.xlu0
        %v3053 = vpop.trf.xlu0
        %v3054 = vpop.trf.xlu0
        %v3055 = vpop.trf.xlu0
        %v3056 = vpop.trf.xlu0
        %v3057 = vpop.trf.xlu0
        %v3058 = vpop.trf.xlu0
        %v3059 = vpop.trf.xlu0
        %v3060 = vpop.trf.xlu0
        %v3061 = vpop.trf.xlu0
        %v3062 = vpop.trf.xlu0
        %v3063 = vpop.trf.xlu0
        %v3064 = vpop.trf.xlu0
        %v3065 = vpop.trf.xlu0
        %v3066 = vpop.trf.xlu0
        %3067 = vxpose.xlu0.b32.start [1/16] %v1952, 128
        %3068 = vxpose.xlu0.b32.cont [2/16] %v2088, 128
        %3069 = vxpose.xlu0.b32.cont [3/16] 0.0, 128
        %3070 = vxpose.xlu0.b32.cont [4/16] 0.0, 128
        %3071 = vxpose.xlu0.b32.cont [5/16] 0.0, 128
        %3072 = vxpose.xlu0.b32.cont [6/16] 0.0, 128
        %3073 = vxpose.xlu0.b32.cont [7/16] 0.0, 128
        %3074 = vxpose.xlu0.b32.cont [8/16] 0.0, 128
        %3075 = vxpose.xlu0.b32.cont [9/16] 0.0, 128
        %3076 = vxpose.xlu0.b32.cont [10/16] 0.0, 128
        %3077 = vxpose.xlu0.b32.cont [11/16] 0.0, 128
        %3078 = vxpose.xlu0.b32.cont [12/16] 0.0, 128
        %3079 = vxpose.xlu0.b32.cont [13/16] 0.0, 128
        %3080 = vxpose.xlu0.b32.cont [14/16] 0.0, 128
        %3081 = vxpose.xlu0.b32.cont [15/16] 0.0, 128
        %3082 = vxpose.xlu0.b32.end [16/16] 0.0, 128
        %v3083 = vpop.trf.xlu0
        %v3084 = vpop.trf.xlu0
        %v3085 = vpop.trf.xlu0
        %v3086 = vpop.trf.xlu0
        %v3087 = vpop.trf.xlu0
        %v3088 = vpop.trf.xlu0
        %v3089 = vpop.trf.xlu0
        %v3090 = vpop.trf.xlu0
        %v3091 = vpop.trf.xlu0
        %v3092 = vpop.trf.xlu0
        %v3093 = vpop.trf.xlu0
        %v3094 = vpop.trf.xlu0
        %v3095 = vpop.trf.xlu0
        %v3096 = vpop.trf.xlu0
        %v3097 = vpop.trf.xlu0
        %v3098 = vpop.trf.xlu0
        %3099 = vxpose.xlu0.b32.start [1/16] %v1953, 128
        %3100 = vxpose.xlu0.b32.cont [2/16] %v2089, 128
        %3101 = vxpose.xlu0.b32.cont [3/16] 0.0, 128
        %3102 = vxpose.xlu0.b32.cont [4/16] 0.0, 128
        %3103 = vxpose.xlu0.b32.cont [5/16] 0.0, 128
        %3104 = vxpose.xlu0.b32.cont [6/16] 0.0, 128
        %3105 = vxpose.xlu0.b32.cont [7/16] 0.0, 128
        %3106 = vxpose.xlu0.b32.cont [8/16] 0.0, 128
        %3107 = vxpose.xlu0.b32.cont [9/16] 0.0, 128
        %3108 = vxpose.xlu0.b32.cont [10/16] 0.0, 128
        %3109 = vxpose.xlu0.b32.cont [11/16] 0.0, 128
        %3110 = vxpose.xlu0.b32.cont [12/16] 0.0, 128
        %3111 = vxpose.xlu0.b32.cont [13/16] 0.0, 128
        %3112 = vxpose.xlu0.b32.cont [14/16] 0.0, 128
        %3113 = vxpose.xlu0.b32.cont [15/16] 0.0, 128
        %3114 = vxpose.xlu0.b32.end [16/16] 0.0, 128
        %v3115 = vpop.trf.xlu0
        %v3116 = vpop.trf.xlu0
        %v3117 = vpop.trf.xlu0
        %v3118 = vpop.trf.xlu0
        %v3119 = vpop.trf.xlu0
        %v3120 = vpop.trf.xlu0
        %v3121 = vpop.trf.xlu0
        %v3122 = vpop.trf.xlu0
        %v3123 = vpop.trf.xlu0
        %v3124 = vpop.trf.xlu0
        %v3125 = vpop.trf.xlu0
        %v3126 = vpop.trf.xlu0
        %v3127 = vpop.trf.xlu0
        %v3128 = vpop.trf.xlu0
        %v3129 = vpop.trf.xlu0
        %v3130 = vpop.trf.xlu0
        %3131 = vxpose.xlu0.b32.start [1/16] %v1954, 128
        %3132 = vxpose.xlu0.b32.cont [2/16] %v2090, 128
        %3133 = vxpose.xlu0.b32.cont [3/16] 0.0, 128
        %3134 = vxpose.xlu0.b32.cont [4/16] 0.0, 128
        %3135 = vxpose.xlu0.b32.cont [5/16] 0.0, 128
        %3136 = vxpose.xlu0.b32.cont [6/16] 0.0, 128
        %3137 = vxpose.xlu0.b32.cont [7/16] 0.0, 128
        %3138 = vxpose.xlu0.b32.cont [8/16] 0.0, 128
        %3139 = vxpose.xlu0.b32.cont [9/16] 0.0, 128
        %3140 = vxpose.xlu0.b32.cont [10/16] 0.0, 128
        %3141 = vxpose.xlu0.b32.cont [11/16] 0.0, 128
        %3142 = vxpose.xlu0.b32.cont [12/16] 0.0, 128
        %3143 = vxpose.xlu0.b32.cont [13/16] 0.0, 128
        %3144 = vxpose.xlu0.b32.cont [14/16] 0.0, 128
        %3145 = vxpose.xlu0.b32.cont [15/16] 0.0, 128
        %3146 = vxpose.xlu0.b32.end [16/16] 0.0, 128
        %v3147 = vpop.trf.xlu0
        %v3148 = vpop.trf.xlu0
        %v3149 = vpop.trf.xlu0
        %v3150 = vpop.trf.xlu0
        %v3151 = vpop.trf.xlu0
        %v3152 = vpop.trf.xlu0
        %v3153 = vpop.trf.xlu0
        %v3154 = vpop.trf.xlu0
        %v3155 = vpop.trf.xlu0
        %v3156 = vpop.trf.xlu0
        %v3157 = vpop.trf.xlu0
        %v3158 = vpop.trf.xlu0
        %v3159 = vpop.trf.xlu0
        %v3160 = vpop.trf.xlu0
        %v3161 = vpop.trf.xlu0
        %v3162 = vpop.trf.xlu0
        %3163 = vxpose.xlu0.b32.start [1/16] %v2219, 128
        %3164 = vxpose.xlu0.b32.cont [2/16] %v2355, 128
        %3165 = vxpose.xlu0.b32.cont [3/16] 0.0, 128
        %3166 = vxpose.xlu0.b32.cont [4/16] 0.0, 128
        %3167 = vxpose.xlu0.b32.cont [5/16] 0.0, 128
        %3168 = vxpose.xlu0.b32.cont [6/16] 0.0, 128
        %3169 = vxpose.xlu0.b32.cont [7/16] 0.0, 128
        %3170 = vxpose.xlu0.b32.cont [8/16] 0.0, 128
        %3171 = vxpose.xlu0.b32.cont [9/16] 0.0, 128
        %3172 = vxpose.xlu0.b32.cont [10/16] 0.0, 128
        %3173 = vxpose.xlu0.b32.cont [11/16] 0.0, 128
        %3174 = vxpose.xlu0.b32.cont [12/16] 0.0, 128
        %3175 = vxpose.xlu0.b32.cont [13/16] 0.0, 128
        %3176 = vxpose.xlu0.b32.cont [14/16] 0.0, 128
        %3177 = vxpose.xlu0.b32.cont [15/16] 0.0, 128
        %3178 = vxpose.xlu0.b32.end [16/16] 0.0, 128
        %v3179 = vpop.trf.xlu0
        %v3180 = vpop.trf.xlu0
        %v3181 = vpop.trf.xlu0
        %v3182 = vpop.trf.xlu0
        %v3183 = vpop.trf.xlu0
        %v3184 = vpop.trf.xlu0
        %v3185 = vpop.trf.xlu0
        %v3186 = vpop.trf.xlu0
        %v3187 = vpop.trf.xlu0
        %v3188 = vpop.trf.xlu0
        %v3189 = vpop.trf.xlu0
        %v3190 = vpop.trf.xlu0
        %v3191 = vpop.trf.xlu0
        %v3192 = vpop.trf.xlu0
        %v3193 = vpop.trf.xlu0
        %v3194 = vpop.trf.xlu0
        %3195 = vxpose.xlu0.b32.start [1/16] %v2220, 128
        %3196 = vxpose.xlu0.b32.cont [2/16] %v2356, 128
        %3197 = vxpose.xlu0.b32.cont [3/16] 0.0, 128
        %3198 = vxpose.xlu0.b32.cont [4/16] 0.0, 128
        %3199 = vxpose.xlu0.b32.cont [5/16] 0.0, 128
        %3200 = vxpose.xlu0.b32.cont [6/16] 0.0, 128
        %3201 = vxpose.xlu0.b32.cont [7/16] 0.0, 128
        %3202 = vxpose.xlu0.b32.cont [8/16] 0.0, 128
        %3203 = vxpose.xlu0.b32.cont [9/16] 0.0, 128
        %3204 = vxpose.xlu0.b32.cont [10/16] 0.0, 128
        %3205 = vxpose.xlu0.b32.cont [11/16] 0.0, 128
        %3206 = vxpose.xlu0.b32.cont [12/16] 0.0, 128
        %3207 = vxpose.xlu0.b32.cont [13/16] 0.0, 128
        %3208 = vxpose.xlu0.b32.cont [14/16] 0.0, 128
        %3209 = vxpose.xlu0.b32.cont [15/16] 0.0, 128
        %3210 = vxpose.xlu0.b32.end [16/16] 0.0, 128
        %v3211 = vpop.trf.xlu0
        %v3212 = vpop.trf.xlu0
        %v3213 = vpop.trf.xlu0
        %v3214 = vpop.trf.xlu0
        %v3215 = vpop.trf.xlu0
        %v3216 = vpop.trf.xlu0
        %v3217 = vpop.trf.xlu0
        %v3218 = vpop.trf.xlu0
        %v3219 = vpop.trf.xlu0
        %v3220 = vpop.trf.xlu0
        %v3221 = vpop.trf.xlu0
        %v3222 = vpop.trf.xlu0
        %v3223 = vpop.trf.xlu0
        %v3224 = vpop.trf.xlu0
        %v3225 = vpop.trf.xlu0
        %v3226 = vpop.trf.xlu0
        %3227 = vxpose.xlu0.b32.start [1/16] %v2221, 128
        %3228 = vxpose.xlu0.b32.cont [2/16] %v2357, 128
        %3229 = vxpose.xlu0.b32.cont [3/16] 0.0, 128
        %3230 = vxpose.xlu0.b32.cont [4/16] 0.0, 128
        %3231 = vxpose.xlu0.b32.cont [5/16] 0.0, 128
        %3232 = vxpose.xlu0.b32.cont [6/16] 0.0, 128
        %3233 = vxpose.xlu0.b32.cont [7/16] 0.0, 128
        %3234 = vxpose.xlu0.b32.cont [8/16] 0.0, 128
        %3235 = vxpose.xlu0.b32.cont [9/16] 0.0, 128
        %3236 = vxpose.xlu0.b32.cont [10/16] 0.0, 128
        %3237 = vxpose.xlu0.b32.cont [11/16] 0.0, 128
        %3238 = vxpose.xlu0.b32.cont [12/16] 0.0, 128
        %3239 = vxpose.xlu0.b32.cont [13/16] 0.0, 128
        %3240 = vxpose.xlu0.b32.cont [14/16] 0.0, 128
        %3241 = vxpose.xlu0.b32.cont [15/16] 0.0, 128
        %3242 = vxpose.xlu0.b32.end [16/16] 0.0, 128
        %v3243 = vpop.trf.xlu0
        %v3244 = vpop.trf.xlu0
        %v3245 = vpop.trf.xlu0
        %v3246 = vpop.trf.xlu0
        %v3247 = vpop.trf.xlu0
        %v3248 = vpop.trf.xlu0
        %v3249 = vpop.trf.xlu0
        %v3250 = vpop.trf.xlu0
        %v3251 = vpop.trf.xlu0
        %v3252 = vpop.trf.xlu0
        %v3253 = vpop.trf.xlu0
        %v3254 = vpop.trf.xlu0
        %v3255 = vpop.trf.xlu0
        %v3256 = vpop.trf.xlu0
        %v3257 = vpop.trf.xlu0
        %v3258 = vpop.trf.xlu0
        %3259 = vxpose.xlu0.b32.start [1/16] %v2222, 128
        %3260 = vxpose.xlu0.b32.cont [2/16] %v2358, 128
        %3261 = vxpose.xlu0.b32.cont [3/16] 0.0, 128
        %3262 = vxpose.xlu0.b32.cont [4/16] 0.0, 128
        %3263 = vxpose.xlu0.b32.cont [5/16] 0.0, 128
        %3264 = vxpose.xlu0.b32.cont [6/16] 0.0, 128
        %3265 = vxpose.xlu0.b32.cont [7/16] 0.0, 128
        %3266 = vxpose.xlu0.b32.cont [8/16] 0.0, 128
        %3267 = vxpose.xlu0.b32.cont [9/16] 0.0, 128
        %3268 = vxpose.xlu0.b32.cont [10/16] 0.0, 128
        %3269 = vxpose.xlu0.b32.cont [11/16] 0.0, 128
        %3270 = vxpose.xlu0.b32.cont [12/16] 0.0, 128
        %3271 = vxpose.xlu0.b32.cont [13/16] 0.0, 128
        %3272 = vxpose.xlu0.b32.cont [14/16] 0.0, 128
        %3273 = vxpose.xlu0.b32.cont [15/16] 0.0, 128
        %3274 = vxpose.xlu0.b32.end [16/16] 0.0, 128
        %v3275 = vpop.trf.xlu0
        %v3276 = vpop.trf.xlu0
        %v3277 = vpop.trf.xlu0
        %v3278 = vpop.trf.xlu0
        %v3279 = vpop.trf.xlu0
        %v3280 = vpop.trf.xlu0
        %v3281 = vpop.trf.xlu0
        %v3282 = vpop.trf.xlu0
        %v3283 = vpop.trf.xlu0
        %v3284 = vpop.trf.xlu0
        %v3285 = vpop.trf.xlu0
        %v3286 = vpop.trf.xlu0
        %v3287 = vpop.trf.xlu0
        %v3288 = vpop.trf.xlu0
        %v3289 = vpop.trf.xlu0
        %v3290 = vpop.trf.xlu0
        %3291 = vxpose.xlu0.b32.start [1/16] %v2223, 128
        %3292 = vxpose.xlu0.b32.cont [2/16] %v2359, 128
        %3293 = vxpose.xlu0.b32.cont [3/16] 0.0, 128
        %3294 = vxpose.xlu0.b32.cont [4/16] 0.0, 128
        %3295 = vxpose.xlu0.b32.cont [5/16] 0.0, 128
        %3296 = vxpose.xlu0.b32.cont [6/16] 0.0, 128
        %3297 = vxpose.xlu0.b32.cont [7/16] 0.0, 128
        %3298 = vxpose.xlu0.b32.cont [8/16] 0.0, 128
        %3299 = vxpose.xlu0.b32.cont [9/16] 0.0, 128
        %3300 = vxpose.xlu0.b32.cont [10/16] 0.0, 128
        %3301 = vxpose.xlu0.b32.cont [11/16] 0.0, 128
        %3302 = vxpose.xlu0.b32.cont [12/16] 0.0, 128
        %3303 = vxpose.xlu0.b32.cont [13/16] 0.0, 128
        %3304 = vxpose.xlu0.b32.cont [14/16] 0.0, 128
        %3305 = vxpose.xlu0.b32.cont [15/16] 0.0, 128
        %3306 = vxpose.xlu0.b32.end [16/16] 0.0, 128
        %v3307 = vpop.trf.xlu0
        %v3308 = vpop.trf.xlu0
        %v3309 = vpop.trf.xlu0
        %v3310 = vpop.trf.xlu0
        %v3311 = vpop.trf.xlu0
        %v3312 = vpop.trf.xlu0
        %v3313 = vpop.trf.xlu0
        %v3314 = vpop.trf.xlu0
        %v3315 = vpop.trf.xlu0
        %v3316 = vpop.trf.xlu0
        %v3317 = vpop.trf.xlu0
        %v3318 = vpop.trf.xlu0
        %v3319 = vpop.trf.xlu0
        %v3320 = vpop.trf.xlu0
        %v3321 = vpop.trf.xlu0
        %v3322 = vpop.trf.xlu0
        %3323 = vxpose.xlu0.b32.start [1/16] %v2224, 128
        %3324 = vxpose.xlu0.b32.cont [2/16] %v2360, 128
        %3325 = vxpose.xlu0.b32.cont [3/16] 0.0, 128
        %3326 = vxpose.xlu0.b32.cont [4/16] 0.0, 128
        %3327 = vxpose.xlu0.b32.cont [5/16] 0.0, 128
        %3328 = vxpose.xlu0.b32.cont [6/16] 0.0, 128
        %3329 = vxpose.xlu0.b32.cont [7/16] 0.0, 128
        %3330 = vxpose.xlu0.b32.cont [8/16] 0.0, 128
        %3331 = vxpose.xlu0.b32.cont [9/16] 0.0, 128
        %3332 = vxpose.xlu0.b32.cont [10/16] 0.0, 128
        %3333 = vxpose.xlu0.b32.cont [11/16] 0.0, 128
        %3334 = vxpose.xlu0.b32.cont [12/16] 0.0, 128
        %3335 = vxpose.xlu0.b32.cont [13/16] 0.0, 128
        %3336 = vxpose.xlu0.b32.cont [14/16] 0.0, 128
        %3337 = vxpose.xlu0.b32.cont [15/16] 0.0, 128
        %3338 = vxpose.xlu0.b32.end [16/16] 0.0, 128
        %v3339 = vpop.trf.xlu0
        %v3340 = vpop.trf.xlu0
        %v3341 = vpop.trf.xlu0
        %v3342 = vpop.trf.xlu0
        %v3343 = vpop.trf.xlu0
        %v3344 = vpop.trf.xlu0
        %v3345 = vpop.trf.xlu0
        %v3346 = vpop.trf.xlu0
        %v3347 = vpop.trf.xlu0
        %v3348 = vpop.trf.xlu0
        %v3349 = vpop.trf.xlu0
        %v3350 = vpop.trf.xlu0
        %v3351 = vpop.trf.xlu0
        %v3352 = vpop.trf.xlu0
        %v3353 = vpop.trf.xlu0
        %v3354 = vpop.trf.xlu0
        %3355 = vxpose.xlu0.b32.start [1/16] %v2225, 128
        %3356 = vxpose.xlu0.b32.cont [2/16] %v2361, 128
        %3357 = vxpose.xlu0.b32.cont [3/16] 0.0, 128
        %3358 = vxpose.xlu0.b32.cont [4/16] 0.0, 128
        %3359 = vxpose.xlu0.b32.cont [5/16] 0.0, 128
        %3360 = vxpose.xlu0.b32.cont [6/16] 0.0, 128
        %3361 = vxpose.xlu0.b32.cont [7/16] 0.0, 128
        %3362 = vxpose.xlu0.b32.cont [8/16] 0.0, 128
        %3363 = vxpose.xlu0.b32.cont [9/16] 0.0, 128
        %3364 = vxpose.xlu0.b32.cont [10/16] 0.0, 128
        %3365 = vxpose.xlu0.b32.cont [11/16] 0.0, 128
        %3366 = vxpose.xlu0.b32.cont [12/16] 0.0, 128
        %3367 = vxpose.xlu0.b32.cont [13/16] 0.0, 128
        %3368 = vxpose.xlu0.b32.cont [14/16] 0.0, 128
        %3369 = vxpose.xlu0.b32.cont [15/16] 0.0, 128
        %3370 = vxpose.xlu0.b32.end [16/16] 0.0, 128
        %v3371 = vpop.trf.xlu0
        %v3372 = vpop.trf.xlu0
        %v3373 = vpop.trf.xlu0
        %v3374 = vpop.trf.xlu0
        %v3375 = vpop.trf.xlu0
        %v3376 = vpop.trf.xlu0
        %v3377 = vpop.trf.xlu0
        %v3378 = vpop.trf.xlu0
        %v3379 = vpop.trf.xlu0
        %v3380 = vpop.trf.xlu0
        %v3381 = vpop.trf.xlu0
        %v3382 = vpop.trf.xlu0
        %v3383 = vpop.trf.xlu0
        %v3384 = vpop.trf.xlu0
        %v3385 = vpop.trf.xlu0
        %v3386 = vpop.trf.xlu0
        %3387 = vxpose.xlu0.b32.start [1/16] %v2226, 128
        %3388 = vxpose.xlu0.b32.cont [2/16] %v2362, 128
        %3389 = vxpose.xlu0.b32.cont [3/16] 0.0, 128
        %3390 = vxpose.xlu0.b32.cont [4/16] 0.0, 128
        %3391 = vxpose.xlu0.b32.cont [5/16] 0.0, 128
        %3392 = vxpose.xlu0.b32.cont [6/16] 0.0, 128
        %3393 = vxpose.xlu0.b32.cont [7/16] 0.0, 128
        %3394 = vxpose.xlu0.b32.cont [8/16] 0.0, 128
        %3395 = vxpose.xlu0.b32.cont [9/16] 0.0, 128
        %3396 = vxpose.xlu0.b32.cont [10/16] 0.0, 128
        %3397 = vxpose.xlu0.b32.cont [11/16] 0.0, 128
        %3398 = vxpose.xlu0.b32.cont [12/16] 0.0, 128
        %3399 = vxpose.xlu0.b32.cont [13/16] 0.0, 128
        %3400 = vxpose.xlu0.b32.cont [14/16] 0.0, 128
        %3401 = vxpose.xlu0.b32.cont [15/16] 0.0, 128
        %3402 = vxpose.xlu0.b32.end [16/16] 0.0, 128
        %v3403 = vpop.trf.xlu0
        %v3404 = vpop.trf.xlu0
        %v3405 = vpop.trf.xlu0
        %v3406 = vpop.trf.xlu0
        %v3407 = vpop.trf.xlu0
        %v3408 = vpop.trf.xlu0
        %v3409 = vpop.trf.xlu0
        %v3410 = vpop.trf.xlu0
        %v3411 = vpop.trf.xlu0
        %v3412 = vpop.trf.xlu0
        %v3413 = vpop.trf.xlu0
        %v3414 = vpop.trf.xlu0
        %v3415 = vpop.trf.xlu0
        %v3416 = vpop.trf.xlu0
        %v3417 = vpop.trf.xlu0
        %v3418 = vpop.trf.xlu0
        %3419 = vxpose.xlu0.b32.start [1/16] %v2491, 128
        %3420 = vxpose.xlu0.b32.cont [2/16] %v2627, 128
        %3421 = vxpose.xlu0.b32.cont [3/16] 0.0, 128
        %3422 = vxpose.xlu0.b32.cont [4/16] 0.0, 128
        %3423 = vxpose.xlu0.b32.cont [5/16] 0.0, 128
        %3424 = vxpose.xlu0.b32.cont [6/16] 0.0, 128
        %3425 = vxpose.xlu0.b32.cont [7/16] 0.0, 128
        %3426 = vxpose.xlu0.b32.cont [8/16] 0.0, 128
        %3427 = vxpose.xlu0.b32.cont [9/16] 0.0, 128
        %3428 = vxpose.xlu0.b32.cont [10/16] 0.0, 128
        %3429 = vxpose.xlu0.b32.cont [11/16] 0.0, 128
        %3430 = vxpose.xlu0.b32.cont [12/16] 0.0, 128
        %3431 = vxpose.xlu0.b32.cont [13/16] 0.0, 128
        %3432 = vxpose.xlu0.b32.cont [14/16] 0.0, 128
        %3433 = vxpose.xlu0.b32.cont [15/16] 0.0, 128
        %3434 = vxpose.xlu0.b32.end [16/16] 0.0, 128
        %v3435 = vpop.trf.xlu0
        %v3436 = vpop.trf.xlu0
        %v3437 = vpop.trf.xlu0
        %v3438 = vpop.trf.xlu0
        %v3439 = vpop.trf.xlu0
        %v3440 = vpop.trf.xlu0
        %v3441 = vpop.trf.xlu0
        %v3442 = vpop.trf.xlu0
        %v3443 = vpop.trf.xlu0
        %v3444 = vpop.trf.xlu0
        %v3445 = vpop.trf.xlu0
        %v3446 = vpop.trf.xlu0
        %v3447 = vpop.trf.xlu0
        %v3448 = vpop.trf.xlu0
        %v3449 = vpop.trf.xlu0
        %v3450 = vpop.trf.xlu0
        %3451 = vxpose.xlu0.b32.start [1/16] %v2492, 128
        %3452 = vxpose.xlu0.b32.cont [2/16] %v2628, 128
        %3453 = vxpose.xlu0.b32.cont [3/16] 0.0, 128
        %3454 = vxpose.xlu0.b32.cont [4/16] 0.0, 128
        %3455 = vxpose.xlu0.b32.cont [5/16] 0.0, 128
        %3456 = vxpose.xlu0.b32.cont [6/16] 0.0, 128
        %3457 = vxpose.xlu0.b32.cont [7/16] 0.0, 128
        %3458 = vxpose.xlu0.b32.cont [8/16] 0.0, 128
        %3459 = vxpose.xlu0.b32.cont [9/16] 0.0, 128
        %3460 = vxpose.xlu0.b32.cont [10/16] 0.0, 128
        %3461 = vxpose.xlu0.b32.cont [11/16] 0.0, 128
        %3462 = vxpose.xlu0.b32.cont [12/16] 0.0, 128
        %3463 = vxpose.xlu0.b32.cont [13/16] 0.0, 128
        %3464 = vxpose.xlu0.b32.cont [14/16] 0.0, 128
        %3465 = vxpose.xlu0.b32.cont [15/16] 0.0, 128
        %3466 = vxpose.xlu0.b32.end [16/16] 0.0, 128
        %v3467 = vpop.trf.xlu0
        %v3468 = vpop.trf.xlu0
        %v3469 = vpop.trf.xlu0
        %v3470 = vpop.trf.xlu0
        %v3471 = vpop.trf.xlu0
        %v3472 = vpop.trf.xlu0
        %v3473 = vpop.trf.xlu0
        %v3474 = vpop.trf.xlu0
        %v3475 = vpop.trf.xlu0
        %v3476 = vpop.trf.xlu0
        %v3477 = vpop.trf.xlu0
        %v3478 = vpop.trf.xlu0
        %v3479 = vpop.trf.xlu0
        %v3480 = vpop.trf.xlu0
        %v3481 = vpop.trf.xlu0
        %v3482 = vpop.trf.xlu0
        %3483 = vxpose.xlu0.b32.start [1/16] %v2493, 128
        %3484 = vxpose.xlu0.b32.cont [2/16] %v2629, 128
        %3485 = vxpose.xlu0.b32.cont [3/16] 0.0, 128
        %3486 = vxpose.xlu0.b32.cont [4/16] 0.0, 128
        %3487 = vxpose.xlu0.b32.cont [5/16] 0.0, 128
        %3488 = vxpose.xlu0.b32.cont [6/16] 0.0, 128
        %3489 = vxpose.xlu0.b32.cont [7/16] 0.0, 128
        %3490 = vxpose.xlu0.b32.cont [8/16] 0.0, 128
        %3491 = vxpose.xlu0.b32.cont [9/16] 0.0, 128
        %3492 = vxpose.xlu0.b32.cont [10/16] 0.0, 128
        %3493 = vxpose.xlu0.b32.cont [11/16] 0.0, 128
        %3494 = vxpose.xlu0.b32.cont [12/16] 0.0, 128
        %3495 = vxpose.xlu0.b32.cont [13/16] 0.0, 128
        %3496 = vxpose.xlu0.b32.cont [14/16] 0.0, 128
        %3497 = vxpose.xlu0.b32.cont [15/16] 0.0, 128
        %3498 = vxpose.xlu0.b32.end [16/16] 0.0, 128
        %v3499 = vpop.trf.xlu0
        %v3500 = vpop.trf.xlu0
        %v3501 = vpop.trf.xlu0
        %v3502 = vpop.trf.xlu0
        %v3503 = vpop.trf.xlu0
        %v3504 = vpop.trf.xlu0
        %v3505 = vpop.trf.xlu0
        %v3506 = vpop.trf.xlu0
        %v3507 = vpop.trf.xlu0
        %v3508 = vpop.trf.xlu0
        %v3509 = vpop.trf.xlu0
        %v3510 = vpop.trf.xlu0
        %v3511 = vpop.trf.xlu0
        %v3512 = vpop.trf.xlu0
        %v3513 = vpop.trf.xlu0
        %v3514 = vpop.trf.xlu0
        %3515 = vxpose.xlu0.b32.start [1/16] %v2494, 128
        %3516 = vxpose.xlu0.b32.cont [2/16] %v2630, 128
        %3517 = vxpose.xlu0.b32.cont [3/16] 0.0, 128
        %3518 = vxpose.xlu0.b32.cont [4/16] 0.0, 128
        %3519 = vxpose.xlu0.b32.cont [5/16] 0.0, 128
        %3520 = vxpose.xlu0.b32.cont [6/16] 0.0, 128
        %3521 = vxpose.xlu0.b32.cont [7/16] 0.0, 128
        %3522 = vxpose.xlu0.b32.cont [8/16] 0.0, 128
        %3523 = vxpose.xlu0.b32.cont [9/16] 0.0, 128
        %3524 = vxpose.xlu0.b32.cont [10/16] 0.0, 128
        %3525 = vxpose.xlu0.b32.cont [11/16] 0.0, 128
        %3526 = vxpose.xlu0.b32.cont [12/16] 0.0, 128
        %3527 = vxpose.xlu0.b32.cont [13/16] 0.0, 128
        %3528 = vxpose.xlu0.b32.cont [14/16] 0.0, 128
        %3529 = vxpose.xlu0.b32.cont [15/16] 0.0, 128
        %3530 = vxpose.xlu0.b32.end [16/16] 0.0, 128
        %v3531 = vpop.trf.xlu0
        %v3532 = vpop.trf.xlu0
        %v3533 = vpop.trf.xlu0
        %v3534 = vpop.trf.xlu0
        %v3535 = vpop.trf.xlu0
        %v3536 = vpop.trf.xlu0
        %v3537 = vpop.trf.xlu0
        %v3538 = vpop.trf.xlu0
        %v3539 = vpop.trf.xlu0
        %v3540 = vpop.trf.xlu0
        %v3541 = vpop.trf.xlu0
        %v3542 = vpop.trf.xlu0
        %v3543 = vpop.trf.xlu0
        %v3544 = vpop.trf.xlu0
        %v3545 = vpop.trf.xlu0
        %v3546 = vpop.trf.xlu0
        %3547 = vxpose.xlu0.b32.start [1/16] %v2495, 128
        %3548 = vxpose.xlu0.b32.cont [2/16] %v2631, 128
        %3549 = vxpose.xlu0.b32.cont [3/16] 0.0, 128
        %3550 = vxpose.xlu0.b32.cont [4/16] 0.0, 128
        %3551 = vxpose.xlu0.b32.cont [5/16] 0.0, 128
        %3552 = vxpose.xlu0.b32.cont [6/16] 0.0, 128
        %3553 = vxpose.xlu0.b32.cont [7/16] 0.0, 128
        %3554 = vxpose.xlu0.b32.cont [8/16] 0.0, 128
        %3555 = vxpose.xlu0.b32.cont [9/16] 0.0, 128
        %3556 = vxpose.xlu0.b32.cont [10/16] 0.0, 128
        %3557 = vxpose.xlu0.b32.cont [11/16] 0.0, 128
        %3558 = vxpose.xlu0.b32.cont [12/16] 0.0, 128
        %3559 = vxpose.xlu0.b32.cont [13/16] 0.0, 128
        %3560 = vxpose.xlu0.b32.cont [14/16] 0.0, 128
        %3561 = vxpose.xlu0.b32.cont [15/16] 0.0, 128
        %3562 = vxpose.xlu0.b32.end [16/16] 0.0, 128
        %v3563 = vpop.trf.xlu0
        %v3564 = vpop.trf.xlu0
        %v3565 = vpop.trf.xlu0
        %v3566 = vpop.trf.xlu0
        %v3567 = vpop.trf.xlu0
        %v3568 = vpop.trf.xlu0
        %v3569 = vpop.trf.xlu0
        %v3570 = vpop.trf.xlu0
        %v3571 = vpop.trf.xlu0
        %v3572 = vpop.trf.xlu0
        %v3573 = vpop.trf.xlu0
        %v3574 = vpop.trf.xlu0
        %v3575 = vpop.trf.xlu0
        %v3576 = vpop.trf.xlu0
        %v3577 = vpop.trf.xlu0
        %v3578 = vpop.trf.xlu0
        %3579 = vxpose.xlu0.b32.start [1/16] %v2496, 128
        %3580 = vxpose.xlu0.b32.cont [2/16] %v2632, 128
        %3581 = vxpose.xlu0.b32.cont [3/16] 0.0, 128
        %3582 = vxpose.xlu0.b32.cont [4/16] 0.0, 128
        %3583 = vxpose.xlu0.b32.cont [5/16] 0.0, 128
        %3584 = vxpose.xlu0.b32.cont [6/16] 0.0, 128
        %3585 = vxpose.xlu0.b32.cont [7/16] 0.0, 128
        %3586 = vxpose.xlu0.b32.cont [8/16] 0.0, 128
        %3587 = vxpose.xlu0.b32.cont [9/16] 0.0, 128
        %3588 = vxpose.xlu0.b32.cont [10/16] 0.0, 128
        %3589 = vxpose.xlu0.b32.cont [11/16] 0.0, 128
        %3590 = vxpose.xlu0.b32.cont [12/16] 0.0, 128
        %3591 = vxpose.xlu0.b32.cont [13/16] 0.0, 128
        %3592 = vxpose.xlu0.b32.cont [14/16] 0.0, 128
        %3593 = vxpose.xlu0.b32.cont [15/16] 0.0, 128
        %3594 = vxpose.xlu0.b32.end [16/16] 0.0, 128
        %v3595 = vpop.trf.xlu0
        %v3596 = vpop.trf.xlu0
        %v3597 = vpop.trf.xlu0
        %v3598 = vpop.trf.xlu0
        %v3599 = vpop.trf.xlu0
        %v3600 = vpop.trf.xlu0
        %v3601 = vpop.trf.xlu0
        %v3602 = vpop.trf.xlu0
        %v3603 = vpop.trf.xlu0
        %v3604 = vpop.trf.xlu0
        %v3605 = vpop.trf.xlu0
        %v3606 = vpop.trf.xlu0
        %v3607 = vpop.trf.xlu0
        %v3608 = vpop.trf.xlu0
        %v3609 = vpop.trf.xlu0
        %v3610 = vpop.trf.xlu0
        %3611 = vxpose.xlu0.b32.start [1/16] %v2497, 128
        %3612 = vxpose.xlu0.b32.cont [2/16] %v2633, 128
        %3613 = vxpose.xlu0.b32.cont [3/16] 0.0, 128
        %3614 = vxpose.xlu0.b32.cont [4/16] 0.0, 128
        %3615 = vxpose.xlu0.b32.cont [5/16] 0.0, 128
        %3616 = vxpose.xlu0.b32.cont [6/16] 0.0, 128
        %3617 = vxpose.xlu0.b32.cont [7/16] 0.0, 128
        %3618 = vxpose.xlu0.b32.cont [8/16] 0.0, 128
        %3619 = vxpose.xlu0.b32.cont [9/16] 0.0, 128
        %3620 = vxpose.xlu0.b32.cont [10/16] 0.0, 128
        %3621 = vxpose.xlu0.b32.cont [11/16] 0.0, 128
        %3622 = vxpose.xlu0.b32.cont [12/16] 0.0, 128
        %3623 = vxpose.xlu0.b32.cont [13/16] 0.0, 128
        %3624 = vxpose.xlu0.b32.cont [14/16] 0.0, 128
        %3625 = vxpose.xlu0.b32.cont [15/16] 0.0, 128
        %3626 = vxpose.xlu0.b32.end [16/16] 0.0, 128
        %v3627 = vpop.trf.xlu0
        %v3628 = vpop.trf.xlu0
        %v3629 = vpop.trf.xlu0
        %v3630 = vpop.trf.xlu0
        %v3631 = vpop.trf.xlu0
        %v3632 = vpop.trf.xlu0
        %v3633 = vpop.trf.xlu0
        %v3634 = vpop.trf.xlu0
        %v3635 = vpop.trf.xlu0
        %v3636 = vpop.trf.xlu0
        %v3637 = vpop.trf.xlu0
        %v3638 = vpop.trf.xlu0
        %v3639 = vpop.trf.xlu0
        %v3640 = vpop.trf.xlu0
        %v3641 = vpop.trf.xlu0
        %v3642 = vpop.trf.xlu0
        %3643 = vxpose.xlu0.b32.start [1/16] %v2498, 128
        %3644 = vxpose.xlu0.b32.cont [2/16] %v2634, 128
        %3645 = vxpose.xlu0.b32.cont [3/16] 0.0, 128
        %3646 = vxpose.xlu0.b32.cont [4/16] 0.0, 128
        %3647 = vxpose.xlu0.b32.cont [5/16] 0.0, 128
        %3648 = vxpose.xlu0.b32.cont [6/16] 0.0, 128
        %3649 = vxpose.xlu0.b32.cont [7/16] 0.0, 128
        %3650 = vxpose.xlu0.b32.cont [8/16] 0.0, 128
        %3651 = vxpose.xlu0.b32.cont [9/16] 0.0, 128
        %3652 = vxpose.xlu0.b32.cont [10/16] 0.0, 128
        %3653 = vxpose.xlu0.b32.cont [11/16] 0.0, 128
        %3654 = vxpose.xlu0.b32.cont [12/16] 0.0, 128
        %3655 = vxpose.xlu0.b32.cont [13/16] 0.0, 128
        %3656 = vxpose.xlu0.b32.cont [14/16] 0.0, 128
        %3657 = vxpose.xlu0.b32.cont [15/16] 0.0, 128
        %3658 = vxpose.xlu0.b32.end [16/16] 0.0, 128
        %v3659 = vpop.trf.xlu0
        %v3660 = vpop.trf.xlu0
        %v3661 = vpop.trf.xlu0
        %v3662 = vpop.trf.xlu0
        %v3663 = vpop.trf.xlu0
        %v3664 = vpop.trf.xlu0
        %v3665 = vpop.trf.xlu0
        %v3666 = vpop.trf.xlu0
        %v3667 = vpop.trf.xlu0
        %v3668 = vpop.trf.xlu0
        %v3669 = vpop.trf.xlu0
        %v3670 = vpop.trf.xlu0
        %v3671 = vpop.trf.xlu0
        %v3672 = vpop.trf.xlu0
        %v3673 = vpop.trf.xlu0
        %v3674 = vpop.trf.xlu0
        %3675 = vxpose.xlu0.b32.start [1/16] %v2763, 128
        %3676 = vxpose.xlu0.b32.cont [2/16] %v2899, 128
        %3677 = vxpose.xlu0.b32.cont [3/16] 0.0, 128
        %3678 = vxpose.xlu0.b32.cont [4/16] 0.0, 128
        %3679 = vxpose.xlu0.b32.cont [5/16] 0.0, 128
        %3680 = vxpose.xlu0.b32.cont [6/16] 0.0, 128
        %3681 = vxpose.xlu0.b32.cont [7/16] 0.0, 128
        %3682 = vxpose.xlu0.b32.cont [8/16] 0.0, 128
        %3683 = vxpose.xlu0.b32.cont [9/16] 0.0, 128
        %3684 = vxpose.xlu0.b32.cont [10/16] 0.0, 128
        %3685 = vxpose.xlu0.b32.cont [11/16] 0.0, 128
        %3686 = vxpose.xlu0.b32.cont [12/16] 0.0, 128
        %3687 = vxpose.xlu0.b32.cont [13/16] 0.0, 128
        %3688 = vxpose.xlu0.b32.cont [14/16] 0.0, 128
        %3689 = vxpose.xlu0.b32.cont [15/16] 0.0, 128
        %3690 = vxpose.xlu0.b32.end [16/16] 0.0, 128
        %v3691 = vpop.trf.xlu0
        %v3692 = vpop.trf.xlu0
        %v3693 = vpop.trf.xlu0
        %v3694 = vpop.trf.xlu0
        %v3695 = vpop.trf.xlu0
        %v3696 = vpop.trf.xlu0
        %v3697 = vpop.trf.xlu0
        %v3698 = vpop.trf.xlu0
        %v3699 = vpop.trf.xlu0
        %v3700 = vpop.trf.xlu0
        %v3701 = vpop.trf.xlu0
        %v3702 = vpop.trf.xlu0
        %v3703 = vpop.trf.xlu0
        %v3704 = vpop.trf.xlu0
        %v3705 = vpop.trf.xlu0
        %v3706 = vpop.trf.xlu0
        %3707 = vxpose.xlu0.b32.start [1/16] %v2764, 128
        %3708 = vxpose.xlu0.b32.cont [2/16] %v2900, 128
        %3709 = vxpose.xlu0.b32.cont [3/16] 0.0, 128
        %3710 = vxpose.xlu0.b32.cont [4/16] 0.0, 128
        %3711 = vxpose.xlu0.b32.cont [5/16] 0.0, 128
        %3712 = vxpose.xlu0.b32.cont [6/16] 0.0, 128
        %3713 = vxpose.xlu0.b32.cont [7/16] 0.0, 128
        %3714 = vxpose.xlu0.b32.cont [8/16] 0.0, 128
        %3715 = vxpose.xlu0.b32.cont [9/16] 0.0, 128
        %3716 = vxpose.xlu0.b32.cont [10/16] 0.0, 128
        %3717 = vxpose.xlu0.b32.cont [11/16] 0.0, 128
        %3718 = vxpose.xlu0.b32.cont [12/16] 0.0, 128
        %3719 = vxpose.xlu0.b32.cont [13/16] 0.0, 128
        %3720 = vxpose.xlu0.b32.cont [14/16] 0.0, 128
        %3721 = vxpose.xlu0.b32.cont [15/16] 0.0, 128
        %3722 = vxpose.xlu0.b32.end [16/16] 0.0, 128
        %v3723 = vpop.trf.xlu0
        %v3724 = vpop.trf.xlu0
        %v3725 = vpop.trf.xlu0
        %v3726 = vpop.trf.xlu0
        %v3727 = vpop.trf.xlu0
        %v3728 = vpop.trf.xlu0
        %v3729 = vpop.trf.xlu0
        %v3730 = vpop.trf.xlu0
        %v3731 = vpop.trf.xlu0
        %v3732 = vpop.trf.xlu0
        %v3733 = vpop.trf.xlu0
        %v3734 = vpop.trf.xlu0
        %v3735 = vpop.trf.xlu0
        %v3736 = vpop.trf.xlu0
        %v3737 = vpop.trf.xlu0
        %v3738 = vpop.trf.xlu0
        %3739 = vxpose.xlu0.b32.start [1/16] %v2765, 128
        %3740 = vxpose.xlu0.b32.cont [2/16] %v2901, 128
        %3741 = vxpose.xlu0.b32.cont [3/16] 0.0, 128
        %3742 = vxpose.xlu0.b32.cont [4/16] 0.0, 128
        %3743 = vxpose.xlu0.b32.cont [5/16] 0.0, 128
        %3744 = vxpose.xlu0.b32.cont [6/16] 0.0, 128
        %3745 = vxpose.xlu0.b32.cont [7/16] 0.0, 128
        %3746 = vxpose.xlu0.b32.cont [8/16] 0.0, 128
        %3747 = vxpose.xlu0.b32.cont [9/16] 0.0, 128
        %3748 = vxpose.xlu0.b32.cont [10/16] 0.0, 128
        %3749 = vxpose.xlu0.b32.cont [11/16] 0.0, 128
        %3750 = vxpose.xlu0.b32.cont [12/16] 0.0, 128
        %3751 = vxpose.xlu0.b32.cont [13/16] 0.0, 128
        %3752 = vxpose.xlu0.b32.cont [14/16] 0.0, 128
        %3753 = vxpose.xlu0.b32.cont [15/16] 0.0, 128
        %3754 = vxpose.xlu0.b32.end [16/16] 0.0, 128
        %v3755 = vpop.trf.xlu0
        %v3756 = vpop.trf.xlu0
        %v3757 = vpop.trf.xlu0
        %v3758 = vpop.trf.xlu0
        %v3759 = vpop.trf.xlu0
        %v3760 = vpop.trf.xlu0
        %v3761 = vpop.trf.xlu0
        %v3762 = vpop.trf.xlu0
        %v3763 = vpop.trf.xlu0
        %v3764 = vpop.trf.xlu0
        %v3765 = vpop.trf.xlu0
        %v3766 = vpop.trf.xlu0
        %v3767 = vpop.trf.xlu0
        %v3768 = vpop.trf.xlu0
        %v3769 = vpop.trf.xlu0
        %v3770 = vpop.trf.xlu0
        %3771 = vxpose.xlu0.b32.start [1/16] %v2766, 128
        %3772 = vxpose.xlu0.b32.cont [2/16] %v2902, 128
        %3773 = vxpose.xlu0.b32.cont [3/16] 0.0, 128
        %3774 = vxpose.xlu0.b32.cont [4/16] 0.0, 128
        %3775 = vxpose.xlu0.b32.cont [5/16] 0.0, 128
        %3776 = vxpose.xlu0.b32.cont [6/16] 0.0, 128
        %3777 = vxpose.xlu0.b32.cont [7/16] 0.0, 128
        %3778 = vxpose.xlu0.b32.cont [8/16] 0.0, 128
        %3779 = vxpose.xlu0.b32.cont [9/16] 0.0, 128
        %3780 = vxpose.xlu0.b32.cont [10/16] 0.0, 128
        %3781 = vxpose.xlu0.b32.cont [11/16] 0.0, 128
        %3782 = vxpose.xlu0.b32.cont [12/16] 0.0, 128
        %3783 = vxpose.xlu0.b32.cont [13/16] 0.0, 128
        %3784 = vxpose.xlu0.b32.cont [14/16] 0.0, 128
        %3785 = vxpose.xlu0.b32.cont [15/16] 0.0, 128
        %3786 = vxpose.xlu0.b32.end [16/16] 0.0, 128
        %v3787 = vpop.trf.xlu0
        %v3788 = vpop.trf.xlu0
        %v3789 = vpop.trf.xlu0
        %v3790 = vpop.trf.xlu0
        %v3791 = vpop.trf.xlu0
        %v3792 = vpop.trf.xlu0
        %v3793 = vpop.trf.xlu0
        %v3794 = vpop.trf.xlu0
        %v3795 = vpop.trf.xlu0
        %v3796 = vpop.trf.xlu0
        %v3797 = vpop.trf.xlu0
        %v3798 = vpop.trf.xlu0
        %v3799 = vpop.trf.xlu0
        %v3800 = vpop.trf.xlu0
        %v3801 = vpop.trf.xlu0
        %v3802 = vpop.trf.xlu0
        %3803 = vxpose.xlu0.b32.start [1/16] %v2767, 128
        %3804 = vxpose.xlu0.b32.cont [2/16] %v2903, 128
        %3805 = vxpose.xlu0.b32.cont [3/16] 0.0, 128
        %3806 = vxpose.xlu0.b32.cont [4/16] 0.0, 128
        %3807 = vxpose.xlu0.b32.cont [5/16] 0.0, 128
        %3808 = vxpose.xlu0.b32.cont [6/16] 0.0, 128
        %3809 = vxpose.xlu0.b32.cont [7/16] 0.0, 128
        %3810 = vxpose.xlu0.b32.cont [8/16] 0.0, 128
        %3811 = vxpose.xlu0.b32.cont [9/16] 0.0, 128
        %3812 = vxpose.xlu0.b32.cont [10/16] 0.0, 128
        %3813 = vxpose.xlu0.b32.cont [11/16] 0.0, 128
        %3814 = vxpose.xlu0.b32.cont [12/16] 0.0, 128
        %3815 = vxpose.xlu0.b32.cont [13/16] 0.0, 128
        %3816 = vxpose.xlu0.b32.cont [14/16] 0.0, 128
        %3817 = vxpose.xlu0.b32.cont [15/16] 0.0, 128
        %3818 = vxpose.xlu0.b32.end [16/16] 0.0, 128
        %v3819 = vpop.trf.xlu0
        %v3820 = vpop.trf.xlu0
        %v3821 = vpop.trf.xlu0
        %v3822 = vpop.trf.xlu0
        %v3823 = vpop.trf.xlu0
        %v3824 = vpop.trf.xlu0
        %v3825 = vpop.trf.xlu0
        %v3826 = vpop.trf.xlu0
        %v3827 = vpop.trf.xlu0
        %v3828 = vpop.trf.xlu0
        %v3829 = vpop.trf.xlu0
        %v3830 = vpop.trf.xlu0
        %v3831 = vpop.trf.xlu0
        %v3832 = vpop.trf.xlu0
        %v3833 = vpop.trf.xlu0
        %v3834 = vpop.trf.xlu0
        %3835 = vxpose.xlu0.b32.start [1/16] %v2768, 128
        %3836 = vxpose.xlu0.b32.cont [2/16] %v2904, 128
        %3837 = vxpose.xlu0.b32.cont [3/16] 0.0, 128
        %3838 = vxpose.xlu0.b32.cont [4/16] 0.0, 128
        %3839 = vxpose.xlu0.b32.cont [5/16] 0.0, 128
        %3840 = vxpose.xlu0.b32.cont [6/16] 0.0, 128
        %3841 = vxpose.xlu0.b32.cont [7/16] 0.0, 128
        %3842 = vxpose.xlu0.b32.cont [8/16] 0.0, 128
        %3843 = vxpose.xlu0.b32.cont [9/16] 0.0, 128
        %3844 = vxpose.xlu0.b32.cont [10/16] 0.0, 128
        %3845 = vxpose.xlu0.b32.cont [11/16] 0.0, 128
        %3846 = vxpose.xlu0.b32.cont [12/16] 0.0, 128
        %3847 = vxpose.xlu0.b32.cont [13/16] 0.0, 128
        %3848 = vxpose.xlu0.b32.cont [14/16] 0.0, 128
        %3849 = vxpose.xlu0.b32.cont [15/16] 0.0, 128
        %3850 = vxpose.xlu0.b32.end [16/16] 0.0, 128
        %v3851 = vpop.trf.xlu0
        %v3852 = vpop.trf.xlu0
        %v3853 = vpop.trf.xlu0
        %v3854 = vpop.trf.xlu0
        %v3855 = vpop.trf.xlu0
        %v3856 = vpop.trf.xlu0
        %v3857 = vpop.trf.xlu0
        %v3858 = vpop.trf.xlu0
        %v3859 = vpop.trf.xlu0
        %v3860 = vpop.trf.xlu0
        %v3861 = vpop.trf.xlu0
        %v3862 = vpop.trf.xlu0
        %v3863 = vpop.trf.xlu0
        %v3864 = vpop.trf.xlu0
        %v3865 = vpop.trf.xlu0
        %v3866 = vpop.trf.xlu0
        %3867 = vxpose.xlu0.b32.start [1/16] %v2769, 128
        %3868 = vxpose.xlu0.b32.cont [2/16] %v2905, 128
        %3869 = vxpose.xlu0.b32.cont [3/16] 0.0, 128
        %3870 = vxpose.xlu0.b32.cont [4/16] 0.0, 128
        %3871 = vxpose.xlu0.b32.cont [5/16] 0.0, 128
        %3872 = vxpose.xlu0.b32.cont [6/16] 0.0, 128
        %3873 = vxpose.xlu0.b32.cont [7/16] 0.0, 128
        %3874 = vxpose.xlu0.b32.cont [8/16] 0.0, 128
        %3875 = vxpose.xlu0.b32.cont [9/16] 0.0, 128
        %3876 = vxpose.xlu0.b32.cont [10/16] 0.0, 128
        %3877 = vxpose.xlu0.b32.cont [11/16] 0.0, 128
        %3878 = vxpose.xlu0.b32.cont [12/16] 0.0, 128
        %3879 = vxpose.xlu0.b32.cont [13/16] 0.0, 128
        %3880 = vxpose.xlu0.b32.cont [14/16] 0.0, 128
        %3881 = vxpose.xlu0.b32.cont [15/16] 0.0, 128
        %3882 = vxpose.xlu0.b32.end [16/16] 0.0, 128
        %v3883 = vpop.trf.xlu0
        %v3884 = vpop.trf.xlu0
        %v3885 = vpop.trf.xlu0
        %v3886 = vpop.trf.xlu0
        %v3887 = vpop.trf.xlu0
        %v3888 = vpop.trf.xlu0
        %v3889 = vpop.trf.xlu0
        %v3890 = vpop.trf.xlu0
        %v3891 = vpop.trf.xlu0
        %v3892 = vpop.trf.xlu0
        %v3893 = vpop.trf.xlu0
        %v3894 = vpop.trf.xlu0
        %v3895 = vpop.trf.xlu0
        %v3896 = vpop.trf.xlu0
        %v3897 = vpop.trf.xlu0
        %v3898 = vpop.trf.xlu0
        %3899 = vxpose.xlu0.b32.start [1/16] %v2770, 128
        %3900 = vxpose.xlu0.b32.cont [2/16] %v2906, 128
        %3901 = vxpose.xlu0.b32.cont [3/16] 0.0, 128
        %3902 = vxpose.xlu0.b32.cont [4/16] 0.0, 128
        %3903 = vxpose.xlu0.b32.cont [5/16] 0.0, 128
        %3904 = vxpose.xlu0.b32.cont [6/16] 0.0, 128
        %3905 = vxpose.xlu0.b32.cont [7/16] 0.0, 128
        %3906 = vxpose.xlu0.b32.cont [8/16] 0.0, 128
        %3907 = vxpose.xlu0.b32.cont [9/16] 0.0, 128
        %3908 = vxpose.xlu0.b32.cont [10/16] 0.0, 128
        %3909 = vxpose.xlu0.b32.cont [11/16] 0.0, 128
        %3910 = vxpose.xlu0.b32.cont [12/16] 0.0, 128
        %3911 = vxpose.xlu0.b32.cont [13/16] 0.0, 128
        %3912 = vxpose.xlu0.b32.cont [14/16] 0.0, 128
        %3913 = vxpose.xlu0.b32.cont [15/16] 0.0, 128
        %3914 = vxpose.xlu0.b32.end [16/16] 0.0, 128
        %v3915 = vpop.trf.xlu0
        %v3916 = vpop.trf.xlu0
        %v3917 = vpop.trf.xlu0
        %v3918 = vpop.trf.xlu0
        %v3919 = vpop.trf.xlu0
        %v3920 = vpop.trf.xlu0
        %v3921 = vpop.trf.xlu0
        %v3922 = vpop.trf.xlu0
        %v3923 = vpop.trf.xlu0
        %v3924 = vpop.trf.xlu0
        %v3925 = vpop.trf.xlu0
        %v3926 = vpop.trf.xlu0
        %v3927 = vpop.trf.xlu0
        %v3928 = vpop.trf.xlu0
        %v3929 = vpop.trf.xlu0
        %v3930 = vpop.trf.xlu0
        %v3931 = vcombine.low %v2923, %v2987
        %v3933 = vunpack.c.l.s4 1983009808
        %v3934 = vunpack.c.0.s8 %v3933
        %v3935 = vlaneseq
        %v3936 = vshrl.u32 %v3935, 7
        %v3937 = vsub.s32 %v3934, %v3936
        %v3938 = vrot.slane %v3931, %v3937
        %v3939 = vcombine.low %v2955, %v3019
        %v3941 = vunpack.c.l.s4 1983009808
        %v3942 = vunpack.c.0.s8 %v3941
        %v3943 = vlaneseq
        %v3944 = vshrl.u32 %v3943, 7
        %v3945 = vsub.s32 %v3942, %v3944
        %v3946 = vrot.slane %v3939, %v3945
        %v3947 = vcombine.low %v3051, %v3115
        %v3949 = vunpack.c.l.s4 1983009808
        %v3950 = vunpack.c.0.s8 %v3949
        %v3951 = vlaneseq
        %v3952 = vshrl.u32 %v3951, 7
        %v3953 = vsub.s32 %v3950, %v3952
        %v3954 = vrot.slane %v3947, %v3953
        %v3955 = vcombine.low %v3083, %v3147
        %v3957 = vunpack.c.l.s4 1983009808
        %v3958 = vunpack.c.0.s8 %v3957
        %v3959 = vlaneseq
        %v3960 = vshrl.u32 %v3959, 7
        %v3961 = vsub.s32 %v3958, %v3960
        %v3962 = vrot.slane %v3955, %v3961
        %v3963 = vcombine.low %v3938, %v3946
        %v3964 = vcombine.high %v3938, %v3946
        %v3966 = vunpack.c.l.s4 1934713408
        %v3967 = vunpack.c.0.s8 %v3966
        %v3968 = vlaneseq
        %v3969 = vshrl.u32 %v3968, 7
        %v3970 = vsub.s32 %v3967, %v3969
        %v3971 = vrot.slane %v3963, %v3970
        %v3973 = vunpack.c.l.s4 1934713408
        %v3974 = vunpack.c.0.s8 %v3973
        %v3975 = vlaneseq
        %v3976 = vshrl.u32 %v3975, 7
        %v3977 = vsub.s32 %v3974, %v3976
        %v3978 = vrot.slane %v3964, %v3977
        %v3979 = vcombine.low %v3954, %v3962
        %v3980 = vcombine.high %v3954, %v3962
        %v3982 = vunpack.c.l.s4 1934713408
        %v3983 = vunpack.c.0.s8 %v3982
        %v3984 = vlaneseq
        %v3985 = vshrl.u32 %v3984, 7
        %v3986 = vsub.s32 %v3983, %v3985
        %v3987 = vrot.slane %v3979, %v3986
        %v3989 = vunpack.c.l.s4 1934713408
        %v3990 = vunpack.c.0.s8 %v3989
        %v3991 = vlaneseq
        %v3992 = vshrl.u32 %v3991, 7
        %v3993 = vsub.s32 %v3990, %v3992
        %v3994 = vrot.slane %v3980, %v3993
        %v3995 = vcombine.low %v3971, %v3987
        %v3996 = vcombine.high %v3971, %v3987
        %v3997 = vcombine.low %v3978, %v3994
        %v3998 = vcombine.high %v3978, %v3994
        %v3999 = vcombine.low %v3179, %v3243
        %v4001 = vunpack.c.l.s4 1983009808
        %v4002 = vunpack.c.0.s8 %v4001
        %v4003 = vlaneseq
        %v4004 = vshrl.u32 %v4003, 7
        %v4005 = vsub.s32 %v4002, %v4004
        %v4006 = vrot.slane %v3999, %v4005
        %v4007 = vcombine.low %v3211, %v3275
        %v4009 = vunpack.c.l.s4 1983009808
        %v4010 = vunpack.c.0.s8 %v4009
        %v4011 = vlaneseq
        %v4012 = vshrl.u32 %v4011, 7
        %v4013 = vsub.s32 %v4010, %v4012
        %v4014 = vrot.slane %v4007, %v4013
        %v4015 = vcombine.low %v3307, %v3371
        %v4017 = vunpack.c.l.s4 1983009808
        %v4018 = vunpack.c.0.s8 %v4017
        %v4019 = vlaneseq
        %v4020 = vshrl.u32 %v4019, 7
        %v4021 = vsub.s32 %v4018, %v4020
        %v4022 = vrot.slane %v4015, %v4021
        %v4023 = vcombine.low %v3339, %v3403
        %v4025 = vunpack.c.l.s4 1983009808
        %v4026 = vunpack.c.0.s8 %v4025
        %v4027 = vlaneseq
        %v4028 = vshrl.u32 %v4027, 7
        %v4029 = vsub.s32 %v4026, %v4028
        %v4030 = vrot.slane %v4023, %v4029
        %v4031 = vcombine.low %v4006, %v4014
        %v4032 = vcombine.high %v4006, %v4014
        %v4034 = vunpack.c.l.s4 1934713408
        %v4035 = vunpack.c.0.s8 %v4034
        %v4036 = vlaneseq
        %v4037 = vshrl.u32 %v4036, 7
        %v4038 = vsub.s32 %v4035, %v4037
        %v4039 = vrot.slane %v4031, %v4038
        %v4041 = vunpack.c.l.s4 1934713408
        %v4042 = vunpack.c.0.s8 %v4041
        %v4043 = vlaneseq
        %v4044 = vshrl.u32 %v4043, 7
        %v4045 = vsub.s32 %v4042, %v4044
        %v4046 = vrot.slane %v4032, %v4045
        %v4047 = vcombine.low %v4022, %v4030
        %v4048 = vcombine.high %v4022, %v4030
        %v4050 = vunpack.c.l.s4 1934713408
        %v4051 = vunpack.c.0.s8 %v4050
        %v4052 = vlaneseq
        %v4053 = vshrl.u32 %v4052, 7
        %v4054 = vsub.s32 %v4051, %v4053
        %v4055 = vrot.slane %v4047, %v4054
        %v4057 = vunpack.c.l.s4 1934713408
        %v4058 = vunpack.c.0.s8 %v4057
        %v4059 = vlaneseq
        %v4060 = vshrl.u32 %v4059, 7
        %v4061 = vsub.s32 %v4058, %v4060
        %v4062 = vrot.slane %v4048, %v4061
        %v4063 = vcombine.low %v4039, %v4055
        %v4064 = vcombine.high %v4039, %v4055
        %v4065 = vcombine.low %v4046, %v4062
        %v4066 = vcombine.high %v4046, %v4062
        %v4067 = vcombine.low %v3435, %v3499
        %v4069 = vunpack.c.l.s4 1983009808
        %v4070 = vunpack.c.0.s8 %v4069
        %v4071 = vlaneseq
        %v4072 = vshrl.u32 %v4071, 7
        %v4073 = vsub.s32 %v4070, %v4072
        %v4074 = vrot.slane %v4067, %v4073
        %v4075 = vcombine.low %v3467, %v3531
        %v4077 = vunpack.c.l.s4 1983009808
        %v4078 = vunpack.c.0.s8 %v4077
        %v4079 = vlaneseq
        %v4080 = vshrl.u32 %v4079, 7
        %v4081 = vsub.s32 %v4078, %v4080
        %v4082 = vrot.slane %v4075, %v4081
        %v4083 = vcombine.low %v3563, %v3627
        %v4085 = vunpack.c.l.s4 1983009808
        %v4086 = vunpack.c.0.s8 %v4085
        %v4087 = vlaneseq
        %v4088 = vshrl.u32 %v4087, 7
        %v4089 = vsub.s32 %v4086, %v4088
        %v4090 = vrot.slane %v4083, %v4089
        %v4091 = vcombine.low %v3595, %v3659
        %v4093 = vunpack.c.l.s4 1983009808
        %v4094 = vunpack.c.0.s8 %v4093
        %v4095 = vlaneseq
        %v4096 = vshrl.u32 %v4095, 7
        %v4097 = vsub.s32 %v4094, %v4096
        %v4098 = vrot.slane %v4091, %v4097
        %v4099 = vcombine.low %v4074, %v4082
        %v4100 = vcombine.high %v4074, %v4082
        %v4102 = vunpack.c.l.s4 1934713408
        %v4103 = vunpack.c.0.s8 %v4102
        %v4104 = vlaneseq
        %v4105 = vshrl.u32 %v4104, 7
        %v4106 = vsub.s32 %v4103, %v4105
        %v4107 = vrot.slane %v4099, %v4106
        %v4109 = vunpack.c.l.s4 1934713408
        %v4110 = vunpack.c.0.s8 %v4109
        %v4111 = vlaneseq
        %v4112 = vshrl.u32 %v4111, 7
        %v4113 = vsub.s32 %v4110, %v4112
        %v4114 = vrot.slane %v4100, %v4113
        %v4115 = vcombine.low %v4090, %v4098
        %v4116 = vcombine.high %v4090, %v4098
        %v4118 = vunpack.c.l.s4 1934713408
        %v4119 = vunpack.c.0.s8 %v4118
        %v4120 = vlaneseq
        %v4121 = vshrl.u32 %v4120, 7
        %v4122 = vsub.s32 %v4119, %v4121
        %v4123 = vrot.slane %v4115, %v4122
        %v4125 = vunpack.c.l.s4 1934713408
        %v4126 = vunpack.c.0.s8 %v4125
        %v4127 = vlaneseq
        %v4128 = vshrl.u32 %v4127, 7
        %v4129 = vsub.s32 %v4126, %v4128
        %v4130 = vrot.slane %v4116, %v4129
        %v4131 = vcombine.low %v4107, %v4123
        %v4132 = vcombine.high %v4107, %v4123
        %v4133 = vcombine.low %v4114, %v4130
        %v4134 = vcombine.high %v4114, %v4130
        %v4135 = vcombine.low %v3691, %v3755
        %v4137 = vunpack.c.l.s4 1983009808
        %v4138 = vunpack.c.0.s8 %v4137
        %v4139 = vlaneseq
        %v4140 = vshrl.u32 %v4139, 7
        %v4141 = vsub.s32 %v4138, %v4140
        %v4142 = vrot.slane %v4135, %v4141
        %v4143 = vcombine.low %v3723, %v3787
        %v4145 = vunpack.c.l.s4 1983009808
        %v4146 = vunpack.c.0.s8 %v4145
        %v4147 = vlaneseq
        %v4148 = vshrl.u32 %v4147, 7
        %v4149 = vsub.s32 %v4146, %v4148
        %v4150 = vrot.slane %v4143, %v4149
        %v4151 = vcombine.low %v3819, %v3883
        %v4153 = vunpack.c.l.s4 1983009808
        %v4154 = vunpack.c.0.s8 %v4153
        %v4155 = vlaneseq
        %v4156 = vshrl.u32 %v4155, 7
        %v4157 = vsub.s32 %v4154, %v4156
        %v4158 = vrot.slane %v4151, %v4157
        %v4159 = vcombine.low %v3851, %v3915
        %v4161 = vunpack.c.l.s4 1983009808
        %v4162 = vunpack.c.0.s8 %v4161
        %v4163 = vlaneseq
        %v4164 = vshrl.u32 %v4163, 7
        %v4165 = vsub.s32 %v4162, %v4164
        %v4166 = vrot.slane %v4159, %v4165
        %v4167 = vcombine.low %v4142, %v4150
        %v4168 = vcombine.high %v4142, %v4150
        %v4170 = vunpack.c.l.s4 1934713408
        %v4171 = vunpack.c.0.s8 %v4170
        %v4172 = vlaneseq
        %v4173 = vshrl.u32 %v4172, 7
        %v4174 = vsub.s32 %v4171, %v4173
        %v4175 = vrot.slane %v4167, %v4174
        %v4177 = vunpack.c.l.s4 1934713408
        %v4178 = vunpack.c.0.s8 %v4177
        %v4179 = vlaneseq
        %v4180 = vshrl.u32 %v4179, 7
        %v4181 = vsub.s32 %v4178, %v4180
        %v4182 = vrot.slane %v4168, %v4181
        %v4183 = vcombine.low %v4158, %v4166
        %v4184 = vcombine.high %v4158, %v4166
        %v4186 = vunpack.c.l.s4 1934713408
        %v4187 = vunpack.c.0.s8 %v4186
        %v4188 = vlaneseq
        %v4189 = vshrl.u32 %v4188, 7
        %v4190 = vsub.s32 %v4187, %v4189
        %v4191 = vrot.slane %v4183, %v4190
        %v4193 = vunpack.c.l.s4 1934713408
        %v4194 = vunpack.c.0.s8 %v4193
        %v4195 = vlaneseq
        %v4196 = vshrl.u32 %v4195, 7
        %v4197 = vsub.s32 %v4194, %v4196
        %v4198 = vrot.slane %v4184, %v4197
        %v4199 = vcombine.low %v4175, %v4191
        %v4200 = vcombine.high %v4175, %v4191
        %v4201 = vcombine.low %v4182, %v4198
        %v4202 = vcombine.high %v4182, %v4198
        %v4203 = vpack.c.bf16 %v4063, %v3995
        %v4204 = vpack.c.bf16 %v4199, %v4131
        %v4205 = vpack.c.bf16 %v4064, %v3996
        %v4206 = vpack.c.bf16 %v4200, %v4132
        %v4207 = vpack.c.bf16 %v4065, %v3997
        %v4208 = vpack.c.bf16 %v4201, %v4133
        %v4209 = vpack.c.bf16 %v4066, %v3998
        %v4210 = vpack.c.bf16 %v4202, %v4134
        %4213 = vrot.lane.b32.xlu0 %v847, 96
        %v4214 = vpop.permute.xlu0 %4213
        %4215 = vrot.lane.b32.xlu0 %v850, 96
        %v4216 = vpop.permute.xlu0 %4215
        %4219 = vrot.lane.b32.xlu0 %v847, 64
        %v4220 = vpop.permute.xlu0 %4219
        %4221 = vrot.lane.b32.xlu0 %v850, 64
        %v4222 = vpop.permute.xlu0 %4221
        %4225 = vrot.lane.b32.xlu0 %v847, 32
        %v4226 = vpop.permute.xlu0 %4225
        %4227 = vrot.lane.b32.xlu0 %v850, 32
        %v4228 = vpop.permute.xlu0 %4227
        %v4231 = vcombine.low %v847, %v4220
        %v4232 = vcombine.high %v847, %v4220
        %v4234 = vunpack.c.l.s4 1983009808
        %v4235 = vunpack.c.0.s8 %v4234
        %v4236 = vlaneseq
        %v4237 = vshrl.u32 %v4236, 7
        %v4238 = vsub.s32 %v4235, %v4237
        %v4239 = vrot.slane %v4231, %v4238
        %v4241 = vunpack.c.l.s4 1983009808
        %v4242 = vunpack.c.0.s8 %v4241
        %v4243 = vlaneseq
        %v4244 = vshrl.u32 %v4243, 7
        %v4245 = vsub.s32 %v4242, %v4244
        %v4246 = vrot.slane %v4232, %v4245
        %v4247 = vcombine.low %v4214, %v4226
        %v4248 = vcombine.high %v4214, %v4226
        %v4250 = vunpack.c.l.s4 1983009808
        %v4251 = vunpack.c.0.s8 %v4250
        %v4252 = vlaneseq
        %v4253 = vshrl.u32 %v4252, 7
        %v4254 = vsub.s32 %v4251, %v4253
        %v4255 = vrot.slane %v4247, %v4254
        %v4257 = vunpack.c.l.s4 1983009808
        %v4258 = vunpack.c.0.s8 %v4257
        %v4259 = vlaneseq
        %v4260 = vshrl.u32 %v4259, 7
        %v4261 = vsub.s32 %v4258, %v4260
        %v4262 = vrot.slane %v4248, %v4261
        %v4263 = vcombine.low %v4239, %v4255
        %v4264 = vcombine.high %v4239, %v4255
        %v4266 = vunpack.c.l.s4 1934713408
        %v4267 = vunpack.c.0.s8 %v4266
        %v4268 = vlaneseq
        %v4269 = vshrl.u32 %v4268, 7
        %v4270 = vsub.s32 %v4267, %v4269
        %v4271 = vrot.slane %v4263, %v4270
        %v4273 = vunpack.c.l.s4 1934713408
        %v4274 = vunpack.c.0.s8 %v4273
        %v4275 = vlaneseq
        %v4276 = vshrl.u32 %v4275, 7
        %v4277 = vsub.s32 %v4274, %v4276
        %v4278 = vrot.slane %v4264, %v4277
        %v4279 = vcombine.low %v4246, %v4262
        %v4280 = vcombine.high %v4246, %v4262
        %v4282 = vunpack.c.l.s4 1934713408
        %v4283 = vunpack.c.0.s8 %v4282
        %v4284 = vlaneseq
        %v4285 = vshrl.u32 %v4284, 7
        %v4286 = vsub.s32 %v4283, %v4285
        %v4287 = vrot.slane %v4279, %v4286
        %v4289 = vunpack.c.l.s4 1934713408
        %v4290 = vunpack.c.0.s8 %v4289
        %v4291 = vlaneseq
        %v4292 = vshrl.u32 %v4291, 7
        %v4293 = vsub.s32 %v4290, %v4292
        %v4294 = vrot.slane %v4280, %v4293
        %v4295 = vcombine.high %v4271, 0.0
        %v4296 = vcombine.high %v4278, 0.0
        %v4297 = vcombine.high %v4287, 0.0
        %v4298 = vcombine.high %v4294, 0.0
        %v4299 = vcombine.low %v850, %v4222
        %v4300 = vcombine.high %v850, %v4222
        %v4302 = vunpack.c.l.s4 1983009808
        %v4303 = vunpack.c.0.s8 %v4302
        %v4304 = vlaneseq
        %v4305 = vshrl.u32 %v4304, 7
        %v4306 = vsub.s32 %v4303, %v4305
        %v4307 = vrot.slane %v4299, %v4306
        %v4309 = vunpack.c.l.s4 1983009808
        %v4310 = vunpack.c.0.s8 %v4309
        %v4311 = vlaneseq
        %v4312 = vshrl.u32 %v4311, 7
        %v4313 = vsub.s32 %v4310, %v4312
        %v4314 = vrot.slane %v4300, %v4313
        %v4315 = vcombine.low %v4216, %v4228
        %v4316 = vcombine.high %v4216, %v4228
        %v4318 = vunpack.c.l.s4 1983009808
        %v4319 = vunpack.c.0.s8 %v4318
        %v4320 = vlaneseq
        %v4321 = vshrl.u32 %v4320, 7
        %v4322 = vsub.s32 %v4319, %v4321
        %v4323 = vrot.slane %v4315, %v4322
        %v4325 = vunpack.c.l.s4 1983009808
        %v4326 = vunpack.c.0.s8 %v4325
        %v4327 = vlaneseq
        %v4328 = vshrl.u32 %v4327, 7
        %v4329 = vsub.s32 %v4326, %v4328
        %v4330 = vrot.slane %v4316, %v4329
        %v4331 = vcombine.low %v4307, %v4323
        %v4332 = vcombine.high %v4307, %v4323
        %v4334 = vunpack.c.l.s4 1934713408
        %v4335 = vunpack.c.0.s8 %v4334
        %v4336 = vlaneseq
        %v4337 = vshrl.u32 %v4336, 7
        %v4338 = vsub.s32 %v4335, %v4337
        %v4339 = vrot.slane %v4331, %v4338
        %v4341 = vunpack.c.l.s4 1934713408
        %v4342 = vunpack.c.0.s8 %v4341
        %v4343 = vlaneseq
        %v4344 = vshrl.u32 %v4343, 7
        %v4345 = vsub.s32 %v4342, %v4344
        %v4346 = vrot.slane %v4332, %v4345
        %v4347 = vcombine.low %v4314, %v4330
        %v4348 = vcombine.high %v4314, %v4330
        %v4350 = vunpack.c.l.s4 1934713408
        %v4351 = vunpack.c.0.s8 %v4350
        %v4352 = vlaneseq
        %v4353 = vshrl.u32 %v4352, 7
        %v4354 = vsub.s32 %v4351, %v4353
        %v4355 = vrot.slane %v4347, %v4354
        %v4357 = vunpack.c.l.s4 1934713408
        %v4358 = vunpack.c.0.s8 %v4357
        %v4359 = vlaneseq
        %v4360 = vshrl.u32 %v4359, 7
        %v4361 = vsub.s32 %v4358, %v4360
        %v4362 = vrot.slane %v4348, %v4361
        %v4363 = vcombine.high %v4339, 0.0
        %v4364 = vcombine.high %v4346, 0.0
        %v4365 = vcombine.high %v4355, 0.0
        %v4366 = vcombine.high %v4362, 0.0
        %v4367 = vcombine.low %v4271, %v4278
        %v4369 = vunpack.c.l.s4 1983009808
        %v4370 = vunpack.c.0.s8 %v4369
        %v4371 = vlaneseq
        %v4372 = vshrl.u32 %v4371, 7
        %v4373 = vsub.s32 %v4370, %v4372
        %v4374 = vrot.slane %v4367, %v4373
        %v4375 = vcombine.low %v4295, %v4296
        %v4377 = vunpack.c.l.s4 1983009808
        %v4378 = vunpack.c.0.s8 %v4377
        %v4379 = vlaneseq
        %v4380 = vshrl.u32 %v4379, 7
        %v4381 = vsub.s32 %v4378, %v4380
        %v4382 = vrot.slane %v4375, %v4381
        %v4383 = vcombine.low %v4287, %v4294
        %v4385 = vunpack.c.l.s4 1983009808
        %v4386 = vunpack.c.0.s8 %v4385
        %v4387 = vlaneseq
        %v4388 = vshrl.u32 %v4387, 7
        %v4389 = vsub.s32 %v4386, %v4388
        %v4390 = vrot.slane %v4383, %v4389
        %v4391 = vcombine.low %v4297, %v4298
        %v4393 = vunpack.c.l.s4 1983009808
        %v4394 = vunpack.c.0.s8 %v4393
        %v4395 = vlaneseq
        %v4396 = vshrl.u32 %v4395, 7
        %v4397 = vsub.s32 %v4394, %v4396
        %v4398 = vrot.slane %v4391, %v4397
        %v4399 = vcombine.low %v4374, %v4382
        %v4400 = vcombine.high %v4374, %v4382
        %v4402 = vunpack.c.l.s4 1934713408
        %v4403 = vunpack.c.0.s8 %v4402
        %v4404 = vlaneseq
        %v4405 = vshrl.u32 %v4404, 7
        %v4406 = vsub.s32 %v4403, %v4405
        %v4407 = vrot.slane %v4399, %v4406
        %v4409 = vunpack.c.l.s4 1934713408
        %v4410 = vunpack.c.0.s8 %v4409
        %v4411 = vlaneseq
        %v4412 = vshrl.u32 %v4411, 7
        %v4413 = vsub.s32 %v4410, %v4412
        %v4414 = vrot.slane %v4400, %v4413
        %v4415 = vcombine.low %v4390, %v4398
        %v4416 = vcombine.high %v4390, %v4398
        %v4418 = vunpack.c.l.s4 1934713408
        %v4419 = vunpack.c.0.s8 %v4418
        %v4420 = vlaneseq
        %v4421 = vshrl.u32 %v4420, 7
        %v4422 = vsub.s32 %v4419, %v4421
        %v4423 = vrot.slane %v4415, %v4422
        %v4425 = vunpack.c.l.s4 1934713408
        %v4426 = vunpack.c.0.s8 %v4425
        %v4427 = vlaneseq
        %v4428 = vshrl.u32 %v4427, 7
        %v4429 = vsub.s32 %v4426, %v4428
        %v4430 = vrot.slane %v4416, %v4429
        %v4431 = vcombine.low %v4407, %v4423
        %v4432 = vcombine.high %v4407, %v4423
        %v4433 = vcombine.low %v4414, %v4430
        %v4434 = vcombine.high %v4414, %v4430
        %v4435 = vcombine.low %v4339, %v4346
        %v4437 = vunpack.c.l.s4 1983009808
        %v4438 = vunpack.c.0.s8 %v4437
        %v4439 = vlaneseq
        %v4440 = vshrl.u32 %v4439, 7
        %v4441 = vsub.s32 %v4438, %v4440
        %v4442 = vrot.slane %v4435, %v4441
        %v4443 = vcombine.low %v4363, %v4364
        %v4445 = vunpack.c.l.s4 1983009808
        %v4446 = vunpack.c.0.s8 %v4445
        %v4447 = vlaneseq
        %v4448 = vshrl.u32 %v4447, 7
        %v4449 = vsub.s32 %v4446, %v4448
        %v4450 = vrot.slane %v4443, %v4449
        %v4451 = vcombine.low %v4355, %v4362
        %v4453 = vunpack.c.l.s4 1983009808
        %v4454 = vunpack.c.0.s8 %v4453
        %v4455 = vlaneseq
        %v4456 = vshrl.u32 %v4455, 7
        %v4457 = vsub.s32 %v4454, %v4456
        %v4458 = vrot.slane %v4451, %v4457
        %v4459 = vcombine.low %v4365, %v4366
        %v4461 = vunpack.c.l.s4 1983009808
        %v4462 = vunpack.c.0.s8 %v4461
        %v4463 = vlaneseq
        %v4464 = vshrl.u32 %v4463, 7
        %v4465 = vsub.s32 %v4462, %v4464
        %v4466 = vrot.slane %v4459, %v4465
        %v4467 = vcombine.low %v4442, %v4450
        %v4468 = vcombine.high %v4442, %v4450
        %v4470 = vunpack.c.l.s4 1934713408
        %v4471 = vunpack.c.0.s8 %v4470
        %v4472 = vlaneseq
        %v4473 = vshrl.u32 %v4472, 7
        %v4474 = vsub.s32 %v4471, %v4473
        %v4475 = vrot.slane %v4467, %v4474
        %v4477 = vunpack.c.l.s4 1934713408
        %v4478 = vunpack.c.0.s8 %v4477
        %v4479 = vlaneseq
        %v4480 = vshrl.u32 %v4479, 7
        %v4481 = vsub.s32 %v4478, %v4480
        %v4482 = vrot.slane %v4468, %v4481
        %v4483 = vcombine.low %v4458, %v4466
        %v4484 = vcombine.high %v4458, %v4466
        %v4486 = vunpack.c.l.s4 1934713408
        %v4487 = vunpack.c.0.s8 %v4486
        %v4488 = vlaneseq
        %v4489 = vshrl.u32 %v4488, 7
        %v4490 = vsub.s32 %v4487, %v4489
        %v4491 = vrot.slane %v4483, %v4490
        %v4493 = vunpack.c.l.s4 1934713408
        %v4494 = vunpack.c.0.s8 %v4493
        %v4495 = vlaneseq
        %v4496 = vshrl.u32 %v4495, 7
        %v4497 = vsub.s32 %v4494, %v4496
        %v4498 = vrot.slane %v4484, %v4497
        %v4499 = vcombine.low %v4475, %v4491
        %v4500 = vcombine.high %v4475, %v4491
        %v4501 = vcombine.low %v4482, %v4498
        %v4502 = vcombine.high %v4482, %v4498
        %v4503 = vpack.c.bf16 %v4499, %v4431
        %v4504 = vpack.c.bf16 %v4500, %v4432
        %v4505 = vpack.c.bf16 %v4501, %v4433
        %v4506 = vpack.c.bf16 %v4502, %v4434
        %vm4507 = vcmask 261120
        %v4509 = vsel %vm4507, %v1147, 0
        %4511 = vmatprep.subr.bf16.mxu0 0
        %4512 = vmatpush1.bf16.msra.mxu0 %v4203
        %4513 = vmatprep.subr.bf16.mxu0 0
        %4514 = vmatpush1.bf16.msra.mxu0 %v4204
        %4515 = vmatprep.subr.bf16.mxu0 0
        %4516 = vmatpush1.bf16.msra.mxu0 0
        %4517 = vmatprep.subr.bf16.mxu0 0
        %4518 = vmatpush1.bf16.msra.mxu0 0
        %4519 = vmatprep.subr.bf16.mxu0 0
        %4520 = vmatpush1.bf16.msra.mxu0 0
        %4521 = vmatprep.subr.bf16.mxu0 0
        %4522 = vmatpush1.bf16.msra.mxu0 0
        %4523 = vmatprep.subr.bf16.mxu0 0
        %4524 = vmatpush1.bf16.msra.mxu0 0
        %4525 = vmatprep.subr.bf16.mxu0 0
        %4526 = vmatpush1.bf16.msra.mxu0 0
        %4527 = vmatprep.subr.bf16.mxu0 0
        %4528 = vmatpush1.bf16.msra.mxu0 0
        %4529 = vmatprep.subr.bf16.mxu0 0
        %4530 = vmatpush1.bf16.msra.mxu0 0
        %4531 = vmatprep.subr.bf16.mxu0 0
        %4532 = vmatpush1.bf16.msra.mxu0 0
        %4533 = vmatprep.subr.bf16.mxu0 0
        %4534 = vmatpush1.bf16.msra.mxu0 0
        %4535 = vmatprep.subr.bf16.mxu0 0
        %4536 = vmatpush1.bf16.msra.mxu0 0
        %4537 = vmatprep.subr.bf16.mxu0 0
        %4538 = vmatpush1.bf16.msra.mxu0 0
        %4539 = vmatprep.subr.bf16.mxu0 0
        %4540 = vmatpush1.bf16.msra.mxu0 0
        %4541 = vmatprep.subr.bf16.mxu0 0
        %4542 = vmatpush1.bf16.msra.mxu0 0
        %4543 = vmatprep.mubr.bf16.mxu0 0
        %4544 = vmatmul.mubr.bf16.gmra.mrb[0].mxu0 %v4509
        %v4545 = vpop.f32.mrb[0].mxu0
        %v4546 = vadd.f32 0.0, %v4545
        %v4547 = vpop.f32.mrb[0].mxu0
        %v4548 = vpop.f32.mrb[0].mxu0
        %v4549 = vadd.f32 0.0, %v4548
        %v4550 = vpop.f32.mrb[0].mxu0
        %4551 = vdwg.mxu0
        %v4553 = vsel %vm4507, %v1148, 0
        %4555 = vmatprep.subr.bf16.mxu0 0
        %4556 = vmatpush1.bf16.msra.mxu0 %v4205
        %4557 = vmatprep.subr.bf16.mxu0 0
        %4558 = vmatpush1.bf16.msra.mxu0 %v4206
        %4559 = vmatprep.subr.bf16.mxu0 0
        %4560 = vmatpush1.bf16.msra.mxu0 0
        %4561 = vmatprep.subr.bf16.mxu0 0
        %4562 = vmatpush1.bf16.msra.mxu0 0
        %4563 = vmatprep.subr.bf16.mxu0 0
        %4564 = vmatpush1.bf16.msra.mxu0 0
        %4565 = vmatprep.subr.bf16.mxu0 0
        %4566 = vmatpush1.bf16.msra.mxu0 0
        %4567 = vmatprep.subr.bf16.mxu0 0
        %4568 = vmatpush1.bf16.msra.mxu0 0
        %4569 = vmatprep.subr.bf16.mxu0 0
        %4570 = vmatpush1.bf16.msra.mxu0 0
        %4571 = vmatprep.subr.bf16.mxu0 0
        %4572 = vmatpush1.bf16.msra.mxu0 0
        %4573 = vmatprep.subr.bf16.mxu0 0
        %4574 = vmatpush1.bf16.msra.mxu0 0
        %4575 = vmatprep.subr.bf16.mxu0 0
        %4576 = vmatpush1.bf16.msra.mxu0 0
        %4577 = vmatprep.subr.bf16.mxu0 0
        %4578 = vmatpush1.bf16.msra.mxu0 0
        %4579 = vmatprep.subr.bf16.mxu0 0
        %4580 = vmatpush1.bf16.msra.mxu0 0
        %4581 = vmatprep.subr.bf16.mxu0 0
        %4582 = vmatpush1.bf16.msra.mxu0 0
        %4583 = vmatprep.subr.bf16.mxu0 0
        %4584 = vmatpush1.bf16.msra.mxu0 0
        %4585 = vmatprep.subr.bf16.mxu0 0
        %4586 = vmatpush1.bf16.msra.mxu0 0
        %4587 = vmatprep.mubr.bf16.mxu0 0
        %4588 = vmatmul.mubr.bf16.gmra.mrb[0].mxu0 %v4553
        %v4589 = vpop.f32.mrb[0].mxu0
        %v4590 = vadd.f32 0.0, %v4589
        %v4591 = vpop.f32.mrb[0].mxu0
        %v4592 = vpop.f32.mrb[0].mxu0
        %v4593 = vadd.f32 0.0, %v4592
        %v4594 = vpop.f32.mrb[0].mxu0
        %4595 = vdwg.mxu0
        %v4597 = vsel %vm4507, %v1149, 0
        %4599 = vmatprep.subr.bf16.mxu0 0
        %4600 = vmatpush1.bf16.msra.mxu0 %v4207
        %4601 = vmatprep.subr.bf16.mxu0 0
        %4602 = vmatpush1.bf16.msra.mxu0 %v4208
        %4603 = vmatprep.subr.bf16.mxu0 0
        %4604 = vmatpush1.bf16.msra.mxu0 0
        %4605 = vmatprep.subr.bf16.mxu0 0
        %4606 = vmatpush1.bf16.msra.mxu0 0
        %4607 = vmatprep.subr.bf16.mxu0 0
        %4608 = vmatpush1.bf16.msra.mxu0 0
        %4609 = vmatprep.subr.bf16.mxu0 0
        %4610 = vmatpush1.bf16.msra.mxu0 0
        %4611 = vmatprep.subr.bf16.mxu0 0
        %4612 = vmatpush1.bf16.msra.mxu0 0
        %4613 = vmatprep.subr.bf16.mxu0 0
        %4614 = vmatpush1.bf16.msra.mxu0 0
        %4615 = vmatprep.subr.bf16.mxu0 0
        %4616 = vmatpush1.bf16.msra.mxu0 0
        %4617 = vmatprep.subr.bf16.mxu0 0
        %4618 = vmatpush1.bf16.msra.mxu0 0
        %4619 = vmatprep.subr.bf16.mxu0 0
        %4620 = vmatpush1.bf16.msra.mxu0 0
        %4621 = vmatprep.subr.bf16.mxu0 0
        %4622 = vmatpush1.bf16.msra.mxu0 0
        %4623 = vmatprep.subr.bf16.mxu0 0
        %4624 = vmatpush1.bf16.msra.mxu0 0
        %4625 = vmatprep.subr.bf16.mxu0 0
        %4626 = vmatpush1.bf16.msra.mxu0 0
        %4627 = vmatprep.subr.bf16.mxu0 0
        %4628 = vmatpush1.bf16.msra.mxu0 0
        %4629 = vmatprep.subr.bf16.mxu0 0
        %4630 = vmatpush1.bf16.msra.mxu0 0
        %4631 = vmatprep.mubr.bf16.mxu0 0
        %4632 = vmatmul.mubr.bf16.gmra.mrb[0].mxu0 %v4597
        %v4633 = vpop.f32.mrb[0].mxu0
        %v4634 = vadd.f32 0.0, %v4633
        %v4635 = vpop.f32.mrb[0].mxu0
        %v4636 = vpop.f32.mrb[0].mxu0
        %v4637 = vadd.f32 0.0, %v4636
        %v4638 = vpop.f32.mrb[0].mxu0
        %4639 = vdwg.mxu0
        %v4641 = vsel %vm4507, %v1150, 0
        %4643 = vmatprep.subr.bf16.mxu0 0
        %4644 = vmatpush1.bf16.msra.mxu0 %v4209
        %4645 = vmatprep.subr.bf16.mxu0 0
        %4646 = vmatpush1.bf16.msra.mxu0 %v4210
        %4647 = vmatprep.subr.bf16.mxu0 0
        %4648 = vmatpush1.bf16.msra.mxu0 0
        %4649 = vmatprep.subr.bf16.mxu0 0
        %4650 = vmatpush1.bf16.msra.mxu0 0
        %4651 = vmatprep.subr.bf16.mxu0 0
        %4652 = vmatpush1.bf16.msra.mxu0 0
        %4653 = vmatprep.subr.bf16.mxu0 0
        %4654 = vmatpush1.bf16.msra.mxu0 0
        %4655 = vmatprep.subr.bf16.mxu0 0
        %4656 = vmatpush1.bf16.msra.mxu0 0
        %4657 = vmatprep.subr.bf16.mxu0 0
        %4658 = vmatpush1.bf16.msra.mxu0 0
        %4659 = vmatprep.subr.bf16.mxu0 0
        %4660 = vmatpush1.bf16.msra.mxu0 0
        %4661 = vmatprep.subr.bf16.mxu0 0
        %4662 = vmatpush1.bf16.msra.mxu0 0
        %4663 = vmatprep.subr.bf16.mxu0 0
        %4664 = vmatpush1.bf16.msra.mxu0 0
        %4665 = vmatprep.subr.bf16.mxu0 0
        %4666 = vmatpush1.bf16.msra.mxu0 0
        %4667 = vmatprep.subr.bf16.mxu0 0
        %4668 = vmatpush1.bf16.msra.mxu0 0
        %4669 = vmatprep.subr.bf16.mxu0 0
        %4670 = vmatpush1.bf16.msra.mxu0 0
        %4671 = vmatprep.subr.bf16.mxu0 0
        %4672 = vmatpush1.bf16.msra.mxu0 0
        %4673 = vmatprep.subr.bf16.mxu0 0
        %4674 = vmatpush1.bf16.msra.mxu0 0
        %4675 = vmatprep.mubr.bf16.mxu0 0
        %4676 = vmatmul.mubr.bf16.gmra.mrb[0].mxu0 %v4641
        %v4677 = vpop.f32.mrb[0].mxu0
        %v4678 = vadd.f32 0.0, %v4677
        %v4679 = vpop.f32.mrb[0].mxu0
        %v4680 = vpop.f32.mrb[0].mxu0
        %v4681 = vadd.f32 0.0, %v4680
        %v4682 = vpop.f32.mrb[0].mxu0
        %4683 = vdwg.mxu0
        %vm4684 = vcmask 130048
        %v4685 = vsel %vm4684, %v4546, -inf
        %4686 = vmax.xlane.f32.xlu0 %v4685
        %v4687 = vpop.xlane.xlu0 %4686
        %v4688 = vsel %vm4684, %v4549, -inf
        %4689 = vmax.xlane.f32.xlu0 %v4688
        %v4690 = vpop.xlane.xlu0 %4689
        %v4691 = vsel %vm4684, %v4590, -inf
        %4692 = vmax.xlane.f32.xlu0 %v4691
        %v4693 = vpop.xlane.xlu0 %4692
        %v4694 = vsel %vm4684, %v4593, -inf
        %4695 = vmax.xlane.f32.xlu0 %v4694
        %v4696 = vpop.xlane.xlu0 %4695
        %v4697 = vsel %vm4684, %v4634, -inf
        %4698 = vmax.xlane.f32.xlu0 %v4697
        %v4699 = vpop.xlane.xlu0 %4698
        %v4700 = vsel %vm4684, %v4637, -inf
        %4701 = vmax.xlane.f32.xlu0 %v4700
        %v4702 = vpop.xlane.xlu0 %4701
        %v4703 = vsel %vm4684, %v4678, -inf
        %4704 = vmax.xlane.f32.xlu0 %v4703
        %v4705 = vpop.xlane.xlu0 %4704
        %v4706 = vsel %vm4684, %v4681, -inf
        %4707 = vmax.xlane.f32.xlu0 %v4706
        %v4708 = vpop.xlane.xlu0 %4707
        %v4709 = vsub.f32 %v4546, %v4687
        %v4710 = vsub.f32 %v4549, %v4690
        %v4711 = vsub.f32 %v4590, %v4693
        %v4712 = vsub.f32 %v4593, %v4696
        %v4713 = vsub.f32 %v4634, %v4699
        %v4714 = vsub.f32 %v4637, %v4702
        %v4715 = vsub.f32 %v4678, %v4705
        %v4716 = vsub.f32 %v4681, %v4708
        %v4717 = vmul.f32 %v4709, 1.442695
        %v4718 = vpow.pop %v4717
        %v4719 = vmul.f32 %v4710, 1.442695
        %v4720 = vpow.pop %v4719
        %v4721 = vmul.f32 %v4711, 1.442695
        %v4722 = vpow.pop %v4721
        %v4723 = vmul.f32 %v4712, 1.442695
        %v4724 = vpow.pop %v4723
        %v4725 = vmul.f32 %v4713, 1.442695
        %v4726 = vpow.pop %v4725
        %v4727 = vmul.f32 %v4714, 1.442695
        %v4728 = vpow.pop %v4727
        %v4729 = vmul.f32 %v4715, 1.442695
        %v4730 = vpow.pop %v4729
        %v4731 = vmul.f32 %v4716, 1.442695
        %v4732 = vpow.pop %v4731
        %v4733 = vsel %vm4684, %v4718, 0.0
        %4734 = vadd.xlane.f32.xlu0 %v4733
        %v4735 = vpop.xlane.xlu0 %4734
        %v4736 = vsel %vm4684, %v4720, 0.0
        %4737 = vadd.xlane.f32.xlu0 %v4736
        %v4738 = vpop.xlane.xlu0 %4737
        %v4739 = vsel %vm4684, %v4722, 0.0
        %4740 = vadd.xlane.f32.xlu0 %v4739
        %v4741 = vpop.xlane.xlu0 %4740
        %v4742 = vsel %vm4684, %v4724, 0.0
        %4743 = vadd.xlane.f32.xlu0 %v4742
        %v4744 = vpop.xlane.xlu0 %4743
        %v4745 = vsel %vm4684, %v4726, 0.0
        %4746 = vadd.xlane.f32.xlu0 %v4745
        %v4747 = vpop.xlane.xlu0 %4746
        %v4748 = vsel %vm4684, %v4728, 0.0
        %4749 = vadd.xlane.f32.xlu0 %v4748
        %v4750 = vpop.xlane.xlu0 %4749
        %v4751 = vsel %vm4684, %v4730, 0.0
        %4752 = vadd.xlane.f32.xlu0 %v4751
        %v4753 = vpop.xlane.xlu0 %4752
        %v4754 = vsel %vm4684, %v4732, 0.0
        %4755 = vadd.xlane.f32.xlu0 %v4754
        %v4756 = vpop.xlane.xlu0 %4755
        %v4757 = vpack.c.bf16 %v4720, %v4718
        %v4758 = vpack.c.bf16 %v4724, %v4722
        %v4759 = vpack.c.bf16 %v4728, %v4726
        %v4760 = vpack.c.bf16 %v4732, %v4730
        %v4762 = vsel %vm4684, %v4757, 0
        %4764 = vmatprep.subr.bf16.mxu0 0
        %4765 = vmatpush1.bf16.msra.mxu0 %v4503
        %4766 = vmatprep.subr.bf16.mxu0 0
        %4767 = vmatpush1.bf16.msra.mxu0 0
        %4768 = vmatprep.subr.bf16.mxu0 0
        %4769 = vmatpush1.bf16.msra.mxu0 0
        %4770 = vmatprep.subr.bf16.mxu0 0
        %4771 = vmatpush1.bf16.msra.mxu0 0
        %4772 = vmatprep.subr.bf16.mxu0 0
        %4773 = vmatpush1.bf16.msra.mxu0 0
        %4774 = vmatprep.subr.bf16.mxu0 0
        %4775 = vmatpush1.bf16.msra.mxu0 0
        %4776 = vmatprep.subr.bf16.mxu0 0
        %4777 = vmatpush1.bf16.msra.mxu0 0
        %4778 = vmatprep.subr.bf16.mxu0 0
        %4779 = vmatpush1.bf16.msra.mxu0 0
        %4780 = vmatprep.subr.bf16.mxu0 0
        %4781 = vmatpush1.bf16.msra.mxu0 0
        %4782 = vmatprep.subr.bf16.mxu0 0
        %4783 = vmatpush1.bf16.msra.mxu0 0
        %4784 = vmatprep.subr.bf16.mxu0 0
        %4785 = vmatpush1.bf16.msra.mxu0 0
        %4786 = vmatprep.subr.bf16.mxu0 0
        %4787 = vmatpush1.bf16.msra.mxu0 0
        %4788 = vmatprep.subr.bf16.mxu0 0
        %4789 = vmatpush1.bf16.msra.mxu0 0
        %4790 = vmatprep.subr.bf16.mxu0 0
        %4791 = vmatpush1.bf16.msra.mxu0 0
        %4792 = vmatprep.subr.bf16.mxu0 0
        %4793 = vmatpush1.bf16.msra.mxu0 0
        %4794 = vmatprep.subr.bf16.mxu0 0
        %4795 = vmatpush1.bf16.msra.mxu0 0
        %4796 = vmatprep.mubr.bf16.mxu0 0
        %4797 = vmatmul.mubr.bf16.gmra.mrb[0].mxu0 %v4762
        %v4798 = vpop.f32.mrb[0].mxu0
        %v4799 = vadd.f32 0.0, %v4798
        %v4800 = vpop.f32.mrb[0].mxu0
        %v4801 = vpop.f32.mrb[0].mxu0
        %v4802 = vadd.f32 0.0, %v4801
        %v4803 = vpop.f32.mrb[0].mxu0
        %4804 = vdwg.mxu0
        %v4806 = vsel %vm4684, %v4758, 0
        %4808 = vmatprep.subr.bf16.mxu0 0
        %4809 = vmatpush1.bf16.msra.mxu0 %v4504
        %4810 = vmatprep.subr.bf16.mxu0 0
        %4811 = vmatpush1.bf16.msra.mxu0 0
        %4812 = vmatprep.subr.bf16.mxu0 0
        %4813 = vmatpush1.bf16.msra.mxu0 0
        %4814 = vmatprep.subr.bf16.mxu0 0
        %4815 = vmatpush1.bf16.msra.mxu0 0
        %4816 = vmatprep.subr.bf16.mxu0 0
        %4817 = vmatpush1.bf16.msra.mxu0 0
        %4818 = vmatprep.subr.bf16.mxu0 0
        %4819 = vmatpush1.bf16.msra.mxu0 0
        %4820 = vmatprep.subr.bf16.mxu0 0
        %4821 = vmatpush1.bf16.msra.mxu0 0
        %4822 = vmatprep.subr.bf16.mxu0 0
        %4823 = vmatpush1.bf16.msra.mxu0 0
        %4824 = vmatprep.subr.bf16.mxu0 0
        %4825 = vmatpush1.bf16.msra.mxu0 0
        %4826 = vmatprep.subr.bf16.mxu0 0
        %4827 = vmatpush1.bf16.msra.mxu0 0
        %4828 = vmatprep.subr.bf16.mxu0 0
        %4829 = vmatpush1.bf16.msra.mxu0 0
        %4830 = vmatprep.subr.bf16.mxu0 0
        %4831 = vmatpush1.bf16.msra.mxu0 0
        %4832 = vmatprep.subr.bf16.mxu0 0
        %4833 = vmatpush1.bf16.msra.mxu0 0
        %4834 = vmatprep.subr.bf16.mxu0 0
        %4835 = vmatpush1.bf16.msra.mxu0 0
        %4836 = vmatprep.subr.bf16.mxu0 0
        %4837 = vmatpush1.bf16.msra.mxu0 0
        %4838 = vmatprep.subr.bf16.mxu0 0
        %4839 = vmatpush1.bf16.msra.mxu0 0
        %4840 = vmatprep.mubr.bf16.mxu0 0
        %4841 = vmatmul.mubr.bf16.gmra.mrb[0].mxu0 %v4806
        %v4842 = vpop.f32.mrb[0].mxu0
        %v4843 = vadd.f32 0.0, %v4842
        %v4844 = vpop.f32.mrb[0].mxu0
        %v4845 = vpop.f32.mrb[0].mxu0
        %v4846 = vadd.f32 0.0, %v4845
        %v4847 = vpop.f32.mrb[0].mxu0
        %4848 = vdwg.mxu0
        %v4850 = vsel %vm4684, %v4759, 0
        %4852 = vmatprep.subr.bf16.mxu0 0
        %4853 = vmatpush1.bf16.msra.mxu0 %v4505
        %4854 = vmatprep.subr.bf16.mxu0 0
        %4855 = vmatpush1.bf16.msra.mxu0 0
        %4856 = vmatprep.subr.bf16.mxu0 0
        %4857 = vmatpush1.bf16.msra.mxu0 0
        %4858 = vmatprep.subr.bf16.mxu0 0
        %4859 = vmatpush1.bf16.msra.mxu0 0
        %4860 = vmatprep.subr.bf16.mxu0 0
        %4861 = vmatpush1.bf16.msra.mxu0 0
        %4862 = vmatprep.subr.bf16.mxu0 0
        %4863 = vmatpush1.bf16.msra.mxu0 0
        %4864 = vmatprep.subr.bf16.mxu0 0
        %4865 = vmatpush1.bf16.msra.mxu0 0
        %4866 = vmatprep.subr.bf16.mxu0 0
        %4867 = vmatpush1.bf16.msra.mxu0 0
        %4868 = vmatprep.subr.bf16.mxu0 0
        %4869 = vmatpush1.bf16.msra.mxu0 0
        %4870 = vmatprep.subr.bf16.mxu0 0
        %4871 = vmatpush1.bf16.msra.mxu0 0
        %4872 = vmatprep.subr.bf16.mxu0 0
        %4873 = vmatpush1.bf16.msra.mxu0 0
        %4874 = vmatprep.subr.bf16.mxu0 0
        %4875 = vmatpush1.bf16.msra.mxu0 0
        %4876 = vmatprep.subr.bf16.mxu0 0
        %4877 = vmatpush1.bf16.msra.mxu0 0
        %4878 = vmatprep.subr.bf16.mxu0 0
        %4879 = vmatpush1.bf16.msra.mxu0 0
        %4880 = vmatprep.subr.bf16.mxu0 0
        %4881 = vmatpush1.bf16.msra.mxu0 0
        %4882 = vmatprep.subr.bf16.mxu0 0
        %4883 = vmatpush1.bf16.msra.mxu0 0
        %4884 = vmatprep.mubr.bf16.mxu0 0
        %4885 = vmatmul.mubr.bf16.gmra.mrb[0].mxu0 %v4850
        %v4886 = vpop.f32.mrb[0].mxu0
        %v4887 = vadd.f32 0.0, %v4886
        %v4888 = vpop.f32.mrb[0].mxu0
        %v4889 = vpop.f32.mrb[0].mxu0
        %v4890 = vadd.f32 0.0, %v4889
        %v4891 = vpop.f32.mrb[0].mxu0
        %4892 = vdwg.mxu0
        %v4894 = vsel %vm4684, %v4760, 0
        %4896 = vmatprep.subr.bf16.mxu0 0
        %4897 = vmatpush1.bf16.msra.mxu0 %v4506
        %4898 = vmatprep.subr.bf16.mxu0 0
        %4899 = vmatpush1.bf16.msra.mxu0 0
        %4900 = vmatprep.subr.bf16.mxu0 0
        %4901 = vmatpush1.bf16.msra.mxu0 0
        %4902 = vmatprep.subr.bf16.mxu0 0
        %4903 = vmatpush1.bf16.msra.mxu0 0
        %4904 = vmatprep.subr.bf16.mxu0 0
        %4905 = vmatpush1.bf16.msra.mxu0 0
        %4906 = vmatprep.subr.bf16.mxu0 0
        %4907 = vmatpush1.bf16.msra.mxu0 0
        %4908 = vmatprep.subr.bf16.mxu0 0
        %4909 = vmatpush1.bf16.msra.mxu0 0
        %4910 = vmatprep.subr.bf16.mxu0 0
        %4911 = vmatpush1.bf16.msra.mxu0 0
        %4912 = vmatprep.subr.bf16.mxu0 0
        %4913 = vmatpush1.bf16.msra.mxu0 0
        %4914 = vmatprep.subr.bf16.mxu0 0
        %4915 = vmatpush1.bf16.msra.mxu0 0
        %4916 = vmatprep.subr.bf16.mxu0 0
        %4917 = vmatpush1.bf16.msra.mxu0 0
        %4918 = vmatprep.subr.bf16.mxu0 0
        %4919 = vmatpush1.bf16.msra.mxu0 0
        %4920 = vmatprep.subr.bf16.mxu0 0
        %4921 = vmatpush1.bf16.msra.mxu0 0
        %4922 = vmatprep.subr.bf16.mxu0 0
        %4923 = vmatpush1.bf16.msra.mxu0 0
        %4924 = vmatprep.subr.bf16.mxu0 0
        %4925 = vmatpush1.bf16.msra.mxu0 0
        %4926 = vmatprep.subr.bf16.mxu0 0
        %4927 = vmatpush1.bf16.msra.mxu0 0
        %4928 = vmatprep.mubr.bf16.mxu0 0
        %4929 = vmatmul.mubr.bf16.gmra.mrb[0].mxu0 %v4894
        %v4930 = vpop.f32.mrb[0].mxu0
        %v4931 = vadd.f32 0.0, %v4930
        %v4932 = vpop.f32.mrb[0].mxu0
        %v4933 = vpop.f32.mrb[0].mxu0
        %v4934 = vadd.f32 0.0, %v4933
        %v4935 = vpop.f32.mrb[0].mxu0
        %4936 = vdwg.mxu0
        %v4937 = vrcp.pop %v4735
        %v4938 = vrcp.pop %v4738
        %v4939 = vrcp.pop %v4741
        %v4940 = vrcp.pop %v4744
        %v4941 = vrcp.pop %v4747
        %v4942 = vrcp.pop %v4750
        %v4943 = vrcp.pop %v4753
        %v4944 = vrcp.pop %v4756
        %v4945 = vmul.f32 %v4799, %v4937
        %v4946 = vmul.f32 %v4802, %v4938
        %v4947 = vmul.f32 %v4843, %v4939
        %v4948 = vmul.f32 %v4846, %v4940
        %v4949 = vmul.f32 %v4887, %v4941
        %v4950 = vmul.f32 %v4890, %v4942
        %v4951 = vmul.f32 %v4931, %v4943
        %v4952 = vmul.f32 %v4934, %v4944
        %v4953 = vcombine.low %v4945, %v4949
        %v4954 = vcombine.high %v4945, %v4949
        %v4956 = vunpack.c.l.s4 1983009808
        %v4957 = vunpack.c.0.s8 %v4956
        %v4958 = vlaneseq
        %v4959 = vshrl.u32 %v4958, 7
        %v4960 = vsub.s32 %v4957, %v4959
        %v4961 = vrot.slane %v4953, %v4960
        %v4963 = vunpack.c.l.s4 1983009808
        %v4964 = vunpack.c.0.s8 %v4963
        %v4965 = vlaneseq
        %v4966 = vshrl.u32 %v4965, 7
        %v4967 = vsub.s32 %v4964, %v4966
        %v4968 = vrot.slane %v4954, %v4967
        %v4969 = vcombine.low %v4947, %v4951
        %v4970 = vcombine.high %v4947, %v4951
        %v4972 = vunpack.c.l.s4 1983009808
        %v4973 = vunpack.c.0.s8 %v4972
        %v4974 = vlaneseq
        %v4975 = vshrl.u32 %v4974, 7
        %v4976 = vsub.s32 %v4973, %v4975
        %v4977 = vrot.slane %v4969, %v4976
        %v4979 = vunpack.c.l.s4 1983009808
        %v4980 = vunpack.c.0.s8 %v4979
        %v4981 = vlaneseq
        %v4982 = vshrl.u32 %v4981, 7
        %v4983 = vsub.s32 %v4980, %v4982
        %v4984 = vrot.slane %v4970, %v4983
        %v4985 = vcombine.low %v4961, %v4977
        %v4986 = vcombine.high %v4961, %v4977
        %v4988 = vunpack.c.l.s4 1934713408
        %v4989 = vunpack.c.0.s8 %v4988
        %v4990 = vlaneseq
        %v4991 = vshrl.u32 %v4990, 7
        %v4992 = vsub.s32 %v4989, %v4991
        %v4993 = vrot.slane %v4985, %v4992
        %v4995 = vunpack.c.l.s4 1934713408
        %v4996 = vunpack.c.0.s8 %v4995
        %v4997 = vlaneseq
        %v4998 = vshrl.u32 %v4997, 7
        %v4999 = vsub.s32 %v4996, %v4998
        %v5000 = vrot.slane %v4986, %v4999
        %v5001 = vcombine.low %v4968, %v4984
        %v5002 = vcombine.high %v4968, %v4984
        %v5004 = vunpack.c.l.s4 1934713408
        %v5005 = vunpack.c.0.s8 %v5004
        %v5006 = vlaneseq
        %v5007 = vshrl.u32 %v5006, 7
        %v5008 = vsub.s32 %v5005, %v5007
        %v5009 = vrot.slane %v5001, %v5008
        %v5011 = vunpack.c.l.s4 1934713408
        %v5012 = vunpack.c.0.s8 %v5011
        %v5013 = vlaneseq
        %v5014 = vshrl.u32 %v5013, 7
        %v5015 = vsub.s32 %v5012, %v5014
        %v5016 = vrot.slane %v5002, %v5015
        %v5017 = vcombine.high %v4993, 0.0
        %v5018 = vcombine.high %v5000, 0.0
        %v5019 = vcombine.high %v5009, 0.0
        %v5020 = vcombine.high %v5016, 0.0
        %v5021 = vcombine.low %v4946, %v4950
        %v5022 = vcombine.high %v4946, %v4950
        %v5024 = vunpack.c.l.s4 1983009808
        %v5025 = vunpack.c.0.s8 %v5024
        %v5026 = vlaneseq
        %v5027 = vshrl.u32 %v5026, 7
        %v5028 = vsub.s32 %v5025, %v5027
        %v5029 = vrot.slane %v5021, %v5028
        %v5031 = vunpack.c.l.s4 1983009808
        %v5032 = vunpack.c.0.s8 %v5031
        %v5033 = vlaneseq
        %v5034 = vshrl.u32 %v5033, 7
        %v5035 = vsub.s32 %v5032, %v5034
        %v5036 = vrot.slane %v5022, %v5035
        %v5037 = vcombine.low %v4948, %v4952
        %v5038 = vcombine.high %v4948, %v4952
        %v5040 = vunpack.c.l.s4 1983009808
        %v5041 = vunpack.c.0.s8 %v5040
        %v5042 = vlaneseq
        %v5043 = vshrl.u32 %v5042, 7
        %v5044 = vsub.s32 %v5041, %v5043
        %v5045 = vrot.slane %v5037, %v5044
        %v5047 = vunpack.c.l.s4 1983009808
        %v5048 = vunpack.c.0.s8 %v5047
        %v5049 = vlaneseq
        %v5050 = vshrl.u32 %v5049, 7
        %v5051 = vsub.s32 %v5048, %v5050
        %v5052 = vrot.slane %v5038, %v5051
        %v5053 = vcombine.low %v5029, %v5045
        %v5054 = vcombine.high %v5029, %v5045
        %v5056 = vunpack.c.l.s4 1934713408
        %v5057 = vunpack.c.0.s8 %v5056
        %v5058 = vlaneseq
        %v5059 = vshrl.u32 %v5058, 7
        %v5060 = vsub.s32 %v5057, %v5059
        %v5061 = vrot.slane %v5053, %v5060
        %v5063 = vunpack.c.l.s4 1934713408
        %v5064 = vunpack.c.0.s8 %v5063
        %v5065 = vlaneseq
        %v5066 = vshrl.u32 %v5065, 7
        %v5067 = vsub.s32 %v5064, %v5066
        %v5068 = vrot.slane %v5054, %v5067
        %v5069 = vcombine.low %v5036, %v5052
        %v5070 = vcombine.high %v5036, %v5052
        %v5072 = vunpack.c.l.s4 1934713408
        %v5073 = vunpack.c.0.s8 %v5072
        %v5074 = vlaneseq
        %v5075 = vshrl.u32 %v5074, 7
        %v5076 = vsub.s32 %v5073, %v5075
        %v5077 = vrot.slane %v5069, %v5076
        %v5079 = vunpack.c.l.s4 1934713408
        %v5080 = vunpack.c.0.s8 %v5079
        %v5081 = vlaneseq
        %v5082 = vshrl.u32 %v5081, 7
        %v5083 = vsub.s32 %v5080, %v5082
        %v5084 = vrot.slane %v5070, %v5083
        %v5085 = vcombine.high %v5061, 0.0
        %v5086 = vcombine.high %v5068, 0.0
        %v5087 = vcombine.high %v5077, 0.0
        %v5088 = vcombine.high %v5084, 0.0
        %v5089 = vcombine.low %v4993, %v5000
        %v5091 = vunpack.c.l.s4 1983009808
        %v5092 = vunpack.c.0.s8 %v5091
        %v5093 = vlaneseq
        %v5094 = vshrl.u32 %v5093, 7
        %v5095 = vsub.s32 %v5092, %v5094
        %v5096 = vrot.slane %v5089, %v5095
        %v5097 = vcombine.low %v5017, %v5018
        %v5099 = vunpack.c.l.s4 1983009808
        %v5100 = vunpack.c.0.s8 %v5099
        %v5101 = vlaneseq
        %v5102 = vshrl.u32 %v5101, 7
        %v5103 = vsub.s32 %v5100, %v5102
        %v5104 = vrot.slane %v5097, %v5103
        %v5105 = vcombine.low %v5009, %v5016
        %v5107 = vunpack.c.l.s4 1983009808
        %v5108 = vunpack.c.0.s8 %v5107
        %v5109 = vlaneseq
        %v5110 = vshrl.u32 %v5109, 7
        %v5111 = vsub.s32 %v5108, %v5110
        %v5112 = vrot.slane %v5105, %v5111
        %v5113 = vcombine.low %v5019, %v5020
        %v5115 = vunpack.c.l.s4 1983009808
        %v5116 = vunpack.c.0.s8 %v5115
        %v5117 = vlaneseq
        %v5118 = vshrl.u32 %v5117, 7
        %v5119 = vsub.s32 %v5116, %v5118
        %v5120 = vrot.slane %v5113, %v5119
        %v5121 = vcombine.low %v5096, %v5104
        %v5122 = vcombine.high %v5096, %v5104
        %v5124 = vunpack.c.l.s4 1934713408
        %v5125 = vunpack.c.0.s8 %v5124
        %v5126 = vlaneseq
        %v5127 = vshrl.u32 %v5126, 7
        %v5128 = vsub.s32 %v5125, %v5127
        %v5129 = vrot.slane %v5121, %v5128
        %v5131 = vunpack.c.l.s4 1934713408
        %v5132 = vunpack.c.0.s8 %v5131
        %v5133 = vlaneseq
        %v5134 = vshrl.u32 %v5133, 7
        %v5135 = vsub.s32 %v5132, %v5134
        %v5136 = vrot.slane %v5122, %v5135
        %v5137 = vcombine.low %v5112, %v5120
        %v5138 = vcombine.high %v5112, %v5120
        %v5140 = vunpack.c.l.s4 1934713408
        %v5141 = vunpack.c.0.s8 %v5140
        %v5142 = vlaneseq
        %v5143 = vshrl.u32 %v5142, 7
        %v5144 = vsub.s32 %v5141, %v5143
        %v5145 = vrot.slane %v5137, %v5144
        %v5147 = vunpack.c.l.s4 1934713408
        %v5148 = vunpack.c.0.s8 %v5147
        %v5149 = vlaneseq
        %v5150 = vshrl.u32 %v5149, 7
        %v5151 = vsub.s32 %v5148, %v5150
        %v5152 = vrot.slane %v5138, %v5151
        %v5153 = vcombine.low %v5129, %v5145
        %v5154 = vcombine.high %v5129, %v5145
        %v5155 = vcombine.low %v5136, %v5152
        %v5156 = vcombine.high %v5136, %v5152
        %v5157 = vcombine.low %v5061, %v5068
        %v5159 = vunpack.c.l.s4 1983009808
        %v5160 = vunpack.c.0.s8 %v5159
        %v5161 = vlaneseq
        %v5162 = vshrl.u32 %v5161, 7
        %v5163 = vsub.s32 %v5160, %v5162
        %v5164 = vrot.slane %v5157, %v5163
        %v5165 = vcombine.low %v5085, %v5086
        %v5167 = vunpack.c.l.s4 1983009808
        %v5168 = vunpack.c.0.s8 %v5167
        %v5169 = vlaneseq
        %v5170 = vshrl.u32 %v5169, 7
        %v5171 = vsub.s32 %v5168, %v5170
        %v5172 = vrot.slane %v5165, %v5171
        %v5173 = vcombine.low %v5077, %v5084
        %v5175 = vunpack.c.l.s4 1983009808
        %v5176 = vunpack.c.0.s8 %v5175
        %v5177 = vlaneseq
        %v5178 = vshrl.u32 %v5177, 7
        %v5179 = vsub.s32 %v5176, %v5178
        %v5180 = vrot.slane %v5173, %v5179
        %v5181 = vcombine.low %v5087, %v5088
        %v5183 = vunpack.c.l.s4 1983009808
        %v5184 = vunpack.c.0.s8 %v5183
        %v5185 = vlaneseq
        %v5186 = vshrl.u32 %v5185, 7
        %v5187 = vsub.s32 %v5184, %v5186
        %v5188 = vrot.slane %v5181, %v5187
        %v5189 = vcombine.low %v5164, %v5172
        %v5190 = vcombine.high %v5164, %v5172
        %v5192 = vunpack.c.l.s4 1934713408
        %v5193 = vunpack.c.0.s8 %v5192
        %v5194 = vlaneseq
        %v5195 = vshrl.u32 %v5194, 7
        %v5196 = vsub.s32 %v5193, %v5195
        %v5197 = vrot.slane %v5189, %v5196
        %v5199 = vunpack.c.l.s4 1934713408
        %v5200 = vunpack.c.0.s8 %v5199
        %v5201 = vlaneseq
        %v5202 = vshrl.u32 %v5201, 7
        %v5203 = vsub.s32 %v5200, %v5202
        %v5204 = vrot.slane %v5190, %v5203
        %v5205 = vcombine.low %v5180, %v5188
        %v5206 = vcombine.high %v5180, %v5188
        %v5208 = vunpack.c.l.s4 1934713408
        %v5209 = vunpack.c.0.s8 %v5208
        %v5210 = vlaneseq
        %v5211 = vshrl.u32 %v5210, 7
        %v5212 = vsub.s32 %v5209, %v5211
        %v5213 = vrot.slane %v5205, %v5212
        %v5215 = vunpack.c.l.s4 1934713408
        %v5216 = vunpack.c.0.s8 %v5215
        %v5217 = vlaneseq
        %v5218 = vshrl.u32 %v5217, 7
        %v5219 = vsub.s32 %v5216, %v5218
        %v5220 = vrot.slane %v5206, %v5219
        %v5221 = vcombine.low %v5197, %v5213
        %v5222 = vcombine.high %v5197, %v5213
        %v5223 = vcombine.low %v5204, %v5220
        %v5224 = vcombine.high %v5204, %v5220
        %5227 = vrot.lane.b32.xlu0 %v5154, 32
        %v5228 = vpop.permute.xlu0 %5227
        %5229 = vrot.lane.b32.xlu0 %v5222, 32
        %v5230 = vpop.permute.xlu0 %5229
        %5235 = vrot.lane.b32.xlu0 %v5155, 64
        %v5236 = vpop.permute.xlu0 %5235
        %5237 = vrot.lane.b32.xlu0 %v5223, 64
        %v5238 = vpop.permute.xlu0 %5237
        %5243 = vrot.lane.b32.xlu0 %v5156, 96
        %v5244 = vpop.permute.xlu0 %5243
        %5245 = vrot.lane.b32.xlu0 %v5224, 96
        %v5246 = vpop.permute.xlu0 %5245
        %v5249 = vsel %vm4507, %v5153, %v5228
        %v5250 = vsel %vm4507, %v5221, %v5230
        %vm5251 = vcmask 523264
        %v5252 = vsel %vm5251, %v5249, %v5236
        %v5253 = vsel %vm5251, %v5250, %v5238
        %vm5254 = vcmask 785408
        %v5255 = vsel %vm5254, %v5252, %v5244
        %v5256 = vsel %vm5254, %v5253, %v5246
        %v5257 = vpack.c.bf16 %v5256, %v5255
        %v5259 = vlaneseq
        %v5260 = vshrl.u32 %v5259, 7
        %v5261 = vsub.s32 0, %v5260
        %v5262 = vrot.slane %v569, %v5261
        %v5280 = vunpack.c.l.b16 %v553
        %v5281 = vunpack.c.l.b16 %v554
        %v5282 = vunpack.c.l.b16 %v555
        %v5283 = vunpack.c.l.b16 %v556
        %v5284 = vunpack.c.l.b16 %v557
        %v5285 = vunpack.c.l.b16 %v558
        %v5286 = vunpack.c.l.b16 %v559
        %v5287 = vunpack.c.l.b16 %v560
        %v5288 = vunpack.c.l.b16 %v561
        %v5289 = vunpack.c.l.b16 %v562
        %v5290 = vunpack.c.l.b16 %v563
        %v5291 = vunpack.c.l.b16 %v564
        %v5292 = vunpack.c.l.b16 %v565
        %v5293 = vunpack.c.l.b16 %v566
        %v5294 = vunpack.c.l.b16 %v567
        %v5295 = vunpack.c.l.b16 %v568
        %v5296 = vpack.c.b16 %v5281, %v5280
        %v5297 = vpack.c.b16 %v5283, %v5282
        %v5298 = vpack.c.b16 %v5285, %v5284
        %v5299 = vpack.c.b16 %v5287, %v5286
        %v5300 = vpack.c.b16 %v5289, %v5288
        %v5301 = vpack.c.b16 %v5291, %v5290
        %v5302 = vpack.c.b16 %v5293, %v5292
        %v5303 = vpack.c.b16 %v5295, %v5294
        %5312 = vmatprep.subr.bf16.mxu0 0
        %5313 = vmatpush1.bf16.msra.mxu0 %v5296
        %5314 = vmatprep.subr.bf16.mxu0 0
        %5315 = vmatpush1.bf16.msra.mxu0 %v5297
        %5316 = vmatprep.subr.bf16.mxu0 0
        %5317 = vmatpush1.bf16.msra.mxu0 %v5298
        %5318 = vmatprep.subr.bf16.mxu0 0
        %5319 = vmatpush1.bf16.msra.mxu0 %v5299
        %5320 = vmatprep.subr.bf16.mxu0 0
        %5321 = vmatpush1.bf16.msra.mxu0 %v5300
        %5322 = vmatprep.subr.bf16.mxu0 0
        %5323 = vmatpush1.bf16.msra.mxu0 %v5301
        %5324 = vmatprep.subr.bf16.mxu0 0
        %5325 = vmatpush1.bf16.msra.mxu0 %v5302
        %5326 = vmatprep.subr.bf16.mxu0 0
        %5327 = vmatpush1.bf16.msra.mxu0 %v5303
        %5328 = vmatprep.subr.bf16.mxu0 0
        %5329 = vmatpush1.bf16.msra.mxu0 0
        %5330 = vmatprep.subr.bf16.mxu0 0
        %5331 = vmatpush1.bf16.msra.mxu0 0
        %5332 = vmatprep.subr.bf16.mxu0 0
        %5333 = vmatpush1.bf16.msra.mxu0 0
        %5334 = vmatprep.subr.bf16.mxu0 0
        %5335 = vmatpush1.bf16.msra.mxu0 0
        %5336 = vmatprep.subr.bf16.mxu0 0
        %5337 = vmatpush1.bf16.msra.mxu0 0
        %5338 = vmatprep.subr.bf16.mxu0 0
        %5339 = vmatpush1.bf16.msra.mxu0 0
        %5340 = vmatprep.subr.bf16.mxu0 0
        %5341 = vmatpush1.bf16.msra.mxu0 0
        %5342 = vmatprep.subr.bf16.mxu0 0
        %5343 = vmatpush1.bf16.msra.mxu0 0
        %5344 = vmatprep.mubr.bf16.mxu0 0
        %5345 = vmatmul.mubr.bf16.gmra.mrb[0].mxu0 %v5257
        %v5346 = vpop.f32.mrb[0].mxu0
        %v5347 = vadd.f32 %v5262, %v5346
        %v5348 = vpop.f32.mrb[0].mxu0
        %v5349 = vpop.f32.mrb[0].mxu0
        %v5350 = vadd.f32 %v5262, %v5349
        %v5351 = vpop.f32.mrb[0].mxu0
        %5352 = vdwg.mxu0
        %v5353 = vadd.f32 %v5347, %v518
        %v5354 = vadd.f32 %v5350, %v519
        %5355 = vadd.xlane.f32.xlu0 %v5353
        %v5356 = vpop.xlane.xlu0 %5355
        %5357 = vadd.xlane.f32.xlu0 %v5354
        %v5358 = vpop.xlane.xlu0 %5357
        %v5359 = vrcp.pop 128.0
        %v5360 = vmul.f32 %v5356, %v5359
        %v5361 = vmul.f32 %v5358, %v5359
        %v5362 = vsub.f32 %v5353, %v5360
        %v5363 = vsub.f32 %v5354, %v5361
        %v5364 = vmul.f32 %v5362, %v5362
        %v5365 = vmul.f32 %v5363, %v5363
        %5366 = vadd.xlane.f32.xlu0 %v5364
        %v5367 = vpop.xlane.xlu0 %5366
        %5368 = vadd.xlane.f32.xlu0 %v5365
        %v5369 = vpop.xlane.xlu0 %5368
        %v5370 = vmul.f32 %v5367, %v5359
        %v5371 = vmul.f32 %v5369, %v5359
        %v5372 = vadd.f32 %v5370, 1e-12
        %v5373 = vadd.f32 %v5371, 1e-12
        %v5374 = vrsqrt.pop %v5372
        %v5375 = vrsqrt.pop %v5373
        %v5376 = vmul.f32 %v5362, %v5374
        %v5377 = vmul.f32 %v5363, %v5375
        %v5379 = vlaneseq
        %v5380 = vshrl.u32 %v5379, 7
        %v5381 = vsub.s32 0, %v5380
        %v5382 = vrot.slane %v570, %v5381
        %v5384 = vmul.f32 %v5376, %v5382
        %v5385 = vmul.f32 %v5377, %v5382
        %v5387 = vlaneseq
        %v5388 = vshrl.u32 %v5387, 7
        %v5389 = vsub.s32 0, %v5388
        %v5390 = vrot.slane %v571, %v5389
        %v5392 = vadd.f32 %v5384, %v5390
        %v5393 = vadd.f32 %v5385, %v5390
        %v5394 = vpack.c.bf16 %v5393, %v5392
        %v5396 = vlaneseq
        %v5397 = vshrl.u32 %v5396, 7
        %v5398 = vsub.s32 0, %v5397
        %v5399 = vrot.slane %v588, %v5398
        %v5400 = vlaneseq
        %v5401 = vshrl.u32 %v5400, 7
        %v5402 = vsub.s32 1, %v5401
        %v5403 = vrot.slane %v588, %v5402
        %v5422 = vunpack.c.l.b16 %v572
        %v5423 = vunpack.c.h.b16 %v572
        %v5424 = vunpack.c.l.b16 %v573
        %v5425 = vunpack.c.h.b16 %v573
        %v5426 = vunpack.c.l.b16 %v574
        %v5427 = vunpack.c.h.b16 %v574
        %v5428 = vunpack.c.l.b16 %v575
        %v5429 = vunpack.c.h.b16 %v575
        %v5430 = vunpack.c.l.b16 %v576
        %v5431 = vunpack.c.h.b16 %v576
        %v5432 = vunpack.c.l.b16 %v577
        %v5433 = vunpack.c.h.b16 %v577
        %v5434 = vunpack.c.l.b16 %v578
        %v5435 = vunpack.c.h.b16 %v578
        %v5436 = vunpack.c.l.b16 %v579
        %v5437 = vunpack.c.h.b16 %v579
        %v5438 = vunpack.c.l.b16 %v580
        %v5439 = vunpack.c.h.b16 %v580
        %v5440 = vunpack.c.l.b16 %v581
        %v5441 = vunpack.c.h.b16 %v581
        %v5442 = vunpack.c.l.b16 %v582
        %v5443 = vunpack.c.h.b16 %v582
        %v5444 = vunpack.c.l.b16 %v583
        %v5445 = vunpack.c.h.b16 %v583
        %v5446 = vunpack.c.l.b16 %v584
        %v5447 = vunpack.c.h.b16 %v584
        %v5448 = vunpack.c.l.b16 %v585
        %v5449 = vunpack.c.h.b16 %v585
        %v5450 = vunpack.c.l.b16 %v586
        %v5451 = vunpack.c.h.b16 %v586
        %v5452 = vunpack.c.l.b16 %v587
        %v5453 = vunpack.c.h.b16 %v587
        %v5454 = vpack.c.b16 %v5424, %v5422
        %v5455 = vpack.c.b16 %v5425, %v5423
        %v5456 = vpack.c.b16 %v5428, %v5426
        %v5457 = vpack.c.b16 %v5429, %v5427
        %v5458 = vpack.c.b16 %v5432, %v5430
        %v5459 = vpack.c.b16 %v5433, %v5431
        %v5460 = vpack.c.b16 %v5436, %v5434
        %v5461 = vpack.c.b16 %v5437, %v5435
        %v5462 = vpack.c.b16 %v5440, %v5438
        %v5463 = vpack.c.b16 %v5441, %v5439
        %v5464 = vpack.c.b16 %v5444, %v5442
        %v5465 = vpack.c.b16 %v5445, %v5443
        %v5466 = vpack.c.b16 %v5448, %v5446
        %v5467 = vpack.c.b16 %v5449, %v5447
        %v5468 = vpack.c.b16 %v5452, %v5450
        %v5469 = vpack.c.b16 %v5453, %v5451
        %5486 = vmatprep.subr.bf16.mxu0 %v5455
        %5487 = vmatpush1.bf16.msra.mxu0 %v5454
        %5488 = vmatprep.subr.bf16.mxu0 %v5457
        %5489 = vmatpush1.bf16.msra.mxu0 %v5456
        %5490 = vmatprep.subr.bf16.mxu0 %v5459
        %5491 = vmatpush1.bf16.msra.mxu0 %v5458
        %5492 = vmatprep.subr.bf16.mxu0 %v5461
        %5493 = vmatpush1.bf16.msra.mxu0 %v5460
        %5494 = vmatprep.subr.bf16.mxu0 %v5463
        %5495 = vmatpush1.bf16.msra.mxu0 %v5462
        %5496 = vmatprep.subr.bf16.mxu0 %v5465
        %5497 = vmatpush1.bf16.msra.mxu0 %v5464
        %5498 = vmatprep.subr.bf16.mxu0 %v5467
        %5499 = vmatpush1.bf16.msra.mxu0 %v5466
        %5500 = vmatprep.subr.bf16.mxu0 %v5469
        %5501 = vmatpush1.bf16.msra.mxu0 %v5468
        %5502 = vmatprep.subr.bf16.mxu0 0
        %5503 = vmatpush1.bf16.msra.mxu0 0
        %5504 = vmatprep.subr.bf16.mxu0 0
        %5505 = vmatpush1.bf16.msra.mxu0 0
        %5506 = vmatprep.subr.bf16.mxu0 0
        %5507 = vmatpush1.bf16.msra.mxu0 0
        %5508 = vmatprep.subr.bf16.mxu0 0
        %5509 = vmatpush1.bf16.msra.mxu0 0
        %5510 = vmatprep.subr.bf16.mxu0 0
        %5511 = vmatpush1.bf16.msra.mxu0 0
        %5512 = vmatprep.subr.bf16.mxu0 0
        %5513 = vmatpush1.bf16.msra.mxu0 0
        %5514 = vmatprep.subr.bf16.mxu0 0
        %5515 = vmatpush1.bf16.msra.mxu0 0
        %5516 = vmatprep.subr.bf16.mxu0 0
        %5517 = vmatpush1.bf16.msra.mxu0 0
        %5518 = vmatprep.mubr.bf16.mxu0 0
        %5519 = vmatmul.mubr.bf16.gmra.mrb[0].mxu0 %v5394
        %v5520 = vpop.f32.mrb[0].mxu0
        %v5521 = vadd.f32 %v5399, %v5520
        %v5522 = vpop.f32.mrb[0].mxu0
        %v5523 = vadd.f32 %v5403, %v5522
        %v5524 = vpop.f32.mrb[0].mxu0
        %v5525 = vadd.f32 %v5399, %v5524
        %v5526 = vpop.f32.mrb[0].mxu0
        %v5527 = vadd.f32 %v5403, %v5526
        %5528 = vdwg.mxu0
        %v5529 = vmul.f32 %v5521, 0.5
        %v5530 = vmul.f32 %v5523, 0.5
        %v5531 = vmul.f32 %v5525, 0.5
        %v5532 = vmul.f32 %v5527, 0.5
        %v5533 = vmul.f32 %v5521, 0.70710677
        %v5534 = vmul.f32 %v5523, 0.70710677
        %v5535 = vmul.f32 %v5525, 0.70710677
        %v5536 = vmul.f32 %v5527, 0.70710677
        %v5537 = verf.f32.pop %v5533
        %v5538 = verf.f32.pop %v5534
        %v5539 = verf.f32.pop %v5535
        %v5540 = verf.f32.pop %v5536
        %v5541 = vadd.f32 %v5537, 1.0
        %v5542 = vadd.f32 %v5538, 1.0
        %v5543 = vadd.f32 %v5539, 1.0
        %v5544 = vadd.f32 %v5540, 1.0
        %v5545 = vmul.f32 %v5529, %v5541
        %v5546 = vmul.f32 %v5530, %v5542
        %v5547 = vmul.f32 %v5531, %v5543
        %v5548 = vmul.f32 %v5532, %v5544
        %v5549 = vpack.c.bf16 %v5547, %v5545
        %v5550 = vpack.c.bf16 %v5548, %v5546
        %v5552 = vlaneseq
        %v5553 = vshrl.u32 %v5552, 7
        %v5554 = vsub.s32 0, %v5553
        %v5555 = vrot.slane %v621, %v5554
        %v5589 = vunpack.c.l.b16 %v589
        %v5590 = vunpack.c.l.b16 %v590
        %v5591 = vunpack.c.l.b16 %v591
        %v5592 = vunpack.c.l.b16 %v592
        %v5593 = vunpack.c.l.b16 %v593
        %v5594 = vunpack.c.l.b16 %v594
        %v5595 = vunpack.c.l.b16 %v595
        %v5596 = vunpack.c.l.b16 %v596
        %v5597 = vunpack.c.l.b16 %v597
        %v5598 = vunpack.c.l.b16 %v598
        %v5599 = vunpack.c.l.b16 %v599
        %v5600 = vunpack.c.l.b16 %v600
        %v5601 = vunpack.c.l.b16 %v601
        %v5602 = vunpack.c.l.b16 %v602
        %v5603 = vunpack.c.l.b16 %v603
        %v5604 = vunpack.c.l.b16 %v604
        %v5605 = vunpack.c.l.b16 %v605
        %v5606 = vunpack.c.l.b16 %v606
        %v5607 = vunpack.c.l.b16 %v607
        %v5608 = vunpack.c.l.b16 %v608
        %v5609 = vunpack.c.l.b16 %v609
        %v5610 = vunpack.c.l.b16 %v610
        %v5611 = vunpack.c.l.b16 %v611
        %v5612 = vunpack.c.l.b16 %v612
        %v5613 = vunpack.c.l.b16 %v613
        %v5614 = vunpack.c.l.b16 %v614
        %v5615 = vunpack.c.l.b16 %v615
        %v5616 = vunpack.c.l.b16 %v616
        %v5617 = vunpack.c.l.b16 %v617
        %v5618 = vunpack.c.l.b16 %v618
        %v5619 = vunpack.c.l.b16 %v619
        %v5620 = vunpack.c.l.b16 %v620
        %v5621 = vpack.c.b16 %v5590, %v5589
        %v5622 = vpack.c.b16 %v5592, %v5591
        %v5623 = vpack.c.b16 %v5594, %v5593
        %v5624 = vpack.c.b16 %v5596, %v5595
        %v5625 = vpack.c.b16 %v5598, %v5597
        %v5626 = vpack.c.b16 %v5600, %v5599
        %v5627 = vpack.c.b16 %v5602, %v5601
        %v5628 = vpack.c.b16 %v5604, %v5603
        %v5629 = vpack.c.b16 %v5606, %v5605
        %v5630 = vpack.c.b16 %v5608, %v5607
        %v5631 = vpack.c.b16 %v5610, %v5609
        %v5632 = vpack.c.b16 %v5612, %v5611
        %v5633 = vpack.c.b16 %v5614, %v5613
        %v5634 = vpack.c.b16 %v5616, %v5615
        %v5635 = vpack.c.b16 %v5618, %v5617
        %v5636 = vpack.c.b16 %v5620, %v5619
        %5653 = vmatprep.subr.bf16.mxu0 0
        %5654 = vmatpush1.bf16.msra.mxu0 %v5621
        %5655 = vmatprep.subr.bf16.mxu0 0
        %5656 = vmatpush1.bf16.msra.mxu0 %v5622
        %5657 = vmatprep.subr.bf16.mxu0 0
        %5658 = vmatpush1.bf16.msra.mxu0 %v5623
        %5659 = vmatprep.subr.bf16.mxu0 0
        %5660 = vmatpush1.bf16.msra.mxu0 %v5624
        %5661 = vmatprep.subr.bf16.mxu0 0
        %5662 = vmatpush1.bf16.msra.mxu0 %v5625
        %5663 = vmatprep.subr.bf16.mxu0 0
        %5664 = vmatpush1.bf16.msra.mxu0 %v5626
        %5665 = vmatprep.subr.bf16.mxu0 0
        %5666 = vmatpush1.bf16.msra.mxu0 %v5627
        %5667 = vmatprep.subr.bf16.mxu0 0
        %5668 = vmatpush1.bf16.msra.mxu0 %v5628
        %5669 = vmatprep.subr.bf16.mxu0 0
        %5670 = vmatpush1.bf16.msra.mxu0 %v5629
        %5671 = vmatprep.subr.bf16.mxu0 0
        %5672 = vmatpush1.bf16.msra.mxu0 %v5630
        %5673 = vmatprep.subr.bf16.mxu0 0
        %5674 = vmatpush1.bf16.msra.mxu0 %v5631
        %5675 = vmatprep.subr.bf16.mxu0 0
        %5676 = vmatpush1.bf16.msra.mxu0 %v5632
        %5677 = vmatprep.subr.bf16.mxu0 0
        %5678 = vmatpush1.bf16.msra.mxu0 %v5633
        %5679 = vmatprep.subr.bf16.mxu0 0
        %5680 = vmatpush1.bf16.msra.mxu0 %v5634
        %5681 = vmatprep.subr.bf16.mxu0 0
        %5682 = vmatpush1.bf16.msra.mxu0 %v5635
        %5683 = vmatprep.subr.bf16.mxu0 0
        %5684 = vmatpush1.bf16.msra.mxu0 %v5636
        %5685 = vmatprep.mubr.bf16.mxu0 %v5550
        %5686 = vmatmul.mubr.bf16.gmra.mrb[0].mxu0 %v5549
        %v5687 = vpop.f32.mrb[0].mxu0
        %v5688 = vadd.f32 %v5555, %v5687
        %v5689 = vpop.f32.mrb[0].mxu0
        %v5690 = vpop.f32.mrb[0].mxu0
        %v5691 = vadd.f32 %v5555, %v5690
        %v5692 = vpop.f32.mrb[0].mxu0
        %5693 = vdwg.mxu0
        %v5694 = vadd.f32 %v5688, %v5392
        %v5695 = vadd.f32 %v5691, %v5393
        %5696 = vadd.xlane.f32.xlu0 %v5694
        %v5697 = vpop.xlane.xlu0 %5696
        %5698 = vadd.xlane.f32.xlu0 %v5695
        %v5699 = vpop.xlane.xlu0 %5698
        %v5700 = vmul.f32 %v5697, %v5359
        %v5701 = vmul.f32 %v5699, %v5359
        %v5702 = vsub.f32 %v5694, %v5700
        %v5703 = vsub.f32 %v5695, %v5701
        %v5704 = vmul.f32 %v5702, %v5702
        %v5705 = vmul.f32 %v5703, %v5703
        %5706 = vadd.xlane.f32.xlu0 %v5704
        %v5707 = vpop.xlane.xlu0 %5706
        %5708 = vadd.xlane.f32.xlu0 %v5705
        %v5709 = vpop.xlane.xlu0 %5708
        %v5710 = vmul.f32 %v5707, %v5359
        %v5711 = vmul.f32 %v5709, %v5359
        %v5712 = vadd.f32 %v5710, 1e-12
        %v5713 = vadd.f32 %v5711, 1e-12
        %v5714 = vrsqrt.pop %v5712
        %v5715 = vrsqrt.pop %v5713
        %v5716 = vmul.f32 %v5702, %v5714
        %v5717 = vmul.f32 %v5703, %v5715
        %v5719 = vlaneseq
        %v5720 = vshrl.u32 %v5719, 7
        %v5721 = vsub.s32 0, %v5720
        %v5722 = vrot.slane %v622, %v5721
        %v5724 = vmul.f32 %v5716, %v5722
        %v5725 = vmul.f32 %v5717, %v5722
        %v5727 = vlaneseq
        %v5728 = vshrl.u32 %v5727, 7
        %v5729 = vsub.s32 0, %v5728
        %v5730 = vrot.slane %v623, %v5729
        %v5732 = vadd.f32 %v5724, %v5730
        %v5733 = vadd.f32 %v5725, %v5730
        %5734 = vst [vmem:[%s516] sm:$0xff] %v5732
        %5735 = vst [vmem:[%s516 + $0x8] sm:$0xff] %v5733
        %s5736 = sand.u32 %s318, 1
        %s5737 = scalar_lea.sflag [#allocation4], %s5736
        %s5738 = sand.u32 %s318, 1
        %s5739 = smul.addr %s5738, 16
        %s5740 = scalar_lea.vmem [#allocation11], %s5739
        // Predicated region
        $region93: #{tpu_custom_call.1} parent=71 // pred_check
          %p5741 = pneg %p328
        $region94: #{tpu_custom_call.1} parent=71 // pred_check_branch
          %5743 = sbr.rel (%p5741) target = $region96
        $region95: #{tpu_custom_call.1} parent=71 // pred_region
          %s5745 = ssub.s32 256, 256
          %5746 = vsyncadd %s5737, %s5745
          %s5747 = smul.addr %s32, 2
          %s5748 = smul.addr %s5747, 128
          %s5749 = scalar_lea.hbm %s13, %s5748
          %s5750 = sshll.u32 %s5740, 4
          %s5751 = int_to_ptr.vmem [resolvable:$true] %s5750
          %5756 = dma.vmem_to_hbm [thread:$0]  %s5751, 256, %s5749, %s5737, 128, 128, 8
        $region96: #{tpu_custom_call.1} parent=71 // pred_fallthru
          _
      $region72: #{tpu_custom_call.1} parent=5 // pred_fallthru
        _
      %p5757 = scmp.le.s32.totalorder 2, %s27
      // Predicated region
      $region97: #{tpu_custom_call.1} parent=5 // pred_check
        %p5758 = pneg %p5757
      $region98: #{tpu_custom_call.1} parent=5 // pred_check_branch
        %5760 = sbr.rel (%p5758) target = $region100
      $region99: #{tpu_custom_call.1} parent=5 // pred_region
        %s5761 = ssub.s32 %s27, 2
        // Predicated region
        $region101: #{tpu_custom_call.1} parent=99 // pred_check
          %p5762 = pneg %p334
        $region102: #{tpu_custom_call.1} parent=99 // pred_check_branch
          %5764 = sbr.rel (%p5762) target = $region104
        $region103: #{tpu_custom_call.1} parent=99 // pred_region
          %s5765 = sand.u32 %s319, 1
          %s5766 = scalar_lea.sflag [#allocation4], %s5765
          %s5767 = sand.u32 %s319, 1
          %s5768 = smul.addr %s5767, 16
          %s5769 = scalar_lea.vmem [#allocation11], %s5768
          %5770 = dma.done %s5766, 256
        $region104: #{tpu_custom_call.1} parent=99 // pred_fallthru
          _
      $region100: #{tpu_custom_call.1} parent=5 // pred_fallthru
        _
    $region6: #{tpu_custom_call.1} parent=1 // loop_footer
      %s31 = sadd.s32 1, %s27
    $region7: #{tpu_custom_call.1} parent=1 // loop_footer_branch
      %26 = sbr.rel target = $region3
    $region8: #{tpu_custom_call.1} parent=1 // loop_exit
      _
    %5771 = vsyncpa [#allocation3], 1
    %s5772 = scalar_lea.sflag [#allocation3], 1
    %5773 = vsyncpa %s5772, 1
    %5774 = vsyncpa [#allocation6], 1
    %5775 = vsyncpa [#allocation9], 1
    %5776 = vsyncpa [#allocation4], 1
    %s5777 = scalar_lea.sflag [#allocation4], 1
    %5778 = vsyncpa %s5777, 1

</llo_original>
